<compile_context>
chip_gen: v7x
topology: tpu7x:2x2x1
jax: 0.10.0
libtpu: 0.0.40
codegen_flags: <defaults>
</compile_context>

<pallas_src>
import math
import functools

import jax
import jax.numpy as jnp
from jax import lax
from jax.experimental import pallas as pl
from jax.experimental.pallas import tpu as pltpu


# ----------------------------------------------------------------------------
# helpers
# ----------------------------------------------------------------------------
def _pick_tile(dim, preferred, align):
    """Largest tile <= preferred that divides dim and respects `align`.

    Never silently returns a huge full-dim block for large non-divisible dims
    unless no aligned divisor exists at all.
    """
    if dim <= preferred:
        return dim
    if dim % preferred == 0:
        return preferred
    t = (preferred // align) * align
    while t >= align:
        if dim % t == 0:
            return t
        t -= align
    return dim   # no aligned divisor; full-dim block (documented fallback)


# ----------------------------------------------------------------------------
# Linear kernel: matmul + bias [+ ReLU] [+ prologue scaled-add]
#                [+ fused residual-add + LayerNorm epilogue]
# ----------------------------------------------------------------------------
def _linear_kernel(*refs, activation, fuse_add, fuse_ln, eps, add_scale):
    x_ref, w_ref, b_ref = refs[0], refs[1], refs[2]
    pos = 3
    if fuse_add:
        add_ref = refs[pos]
        pos += 1
    if fuse_ln:
        res_ref, g_ref, beta_ref = refs[pos], refs[pos + 1], refs[pos + 2]
        pos += 3
    o_ref, acc_ref = refs[pos], refs[pos + 1]

    @pl.when(pl.program_id(2) == 0)
    def _init():
        acc_ref[...] = jnp.zeros_like(acc_ref)

    x = x_ref[...]
    if fuse_add:
        x = x + add_ref[...] * add_scale          # fused `trg + noise*1e-3`
    acc_ref[...] += jnp.dot(x, w_ref[...], preferred_element_type=jnp.float32)

    @pl.when(pl.program_id(2) == pl.num_programs(2) - 1)
    def _finalize():
        out = acc_ref[...] + b_ref[...].astype(jnp.float32)
        if activation == "relu":
            out = jnp.maximum(out, 0.0)
        if fuse_ln:
            # residual add + LayerNorm over the full feature dim (tn == N)
            out = out + res_ref[...].astype(jnp.float32)
            mean = jnp.mean(out, axis=-1, keepdims=True)
            xc = out - mean
            var = jnp.mean(xc * xc, axis=-1, keepdims=True)
            out = (xc * lax.rsqrt(var + eps) * g_ref[...].astype(jnp.float32)
                   + beta_ref[...].astype(jnp.float32))
        o_ref[...] = out.astype(o_ref.dtype)


def linear(x, w, b, *, activation=None,
           residual=None, gamma=None, beta=None, eps=1e-5,
           prologue_add=None, add_scale=1.0,
           tm=256, tn=256, tk=512):
    """y = act(x @ w + b) [ (+ LayerNorm(y + residual)) ], x: (..., K), w: (K, N)."""
    orig_shape = x.shape
    K = orig_shape[-1]
    M = math.prod(orig_shape[:-1])
    N = w.shape[1]
    x2 = x.reshape(M, K)

    fuse_ln = residual is not None
    fuse_add = prologue_add is not None

    tm = _pick_tile(M, tm, 8)
    tk = _pick_tile(K, tk, 128)
    if fuse_ln:
        tn = N                       # LayerNorm needs the full row in one tile
    else:
        tn = _pick_tile(N, tn, 128)
    grid = (M // tm, N // tn, K // tk)

    operands = [x2, w, b.reshape(1, N)]
    in_specs = [
        pl.BlockSpec((tm, tk), lambda i, j, k: (i, k)),
        pl.BlockSpec((tk, tn), lambda i, j, k: (k, j)),
        pl.BlockSpec((1, tn), lambda i, j, k: (0, j)),
    ]
    if fuse_add:
        operands.append(prologue_add.reshape(M, K))
        in_specs.append(pl.BlockSpec((tm, tk), lambda i, j, k: (i, k)))
    if fuse_ln:
        operands.extend([residual.reshape(M, N),
                         gamma.reshape(1, N), beta.reshape(1, N)])
        in_specs.extend([
            pl.BlockSpec((tm, tn), lambda i, j, k: (i, j)),
            pl.BlockSpec((1, tn), lambda i, j, k: (0, j)),
            pl.BlockSpec((1, tn), lambda i, j, k: (0, j)),
        ])

    out = pl.pallas_call(
        functools.partial(_linear_kernel, activation=activation,
                          fuse_add=fuse_add, fuse_ln=fuse_ln,
                          eps=eps, add_scale=add_scale),
        out_shape=jax.ShapeDtypeStruct((M, N), x.dtype),
        grid_spec=pltpu.PrefetchScalarGridSpec(
            num_scalar_prefetch=0,
            grid=grid,
            in_specs=in_specs,
            out_specs=pl.BlockSpec((tm, tn), lambda i, j, k: (i, j)),
            scratch_shapes=[pltpu.VMEM((tm, tn), jnp.float32)],
        ),
        compiler_params=pltpu.CompilerParams(
            dimension_semantics=("parallel", "parallel", "arbitrary"),
            vmem_limit_bytes=32 * 1024 * 1024,   # explicit, v7x(64 MiB)-safe
        ),
        cost_estimate=pl.CostEstimate(
            flops=2 * M * N * K,
            transcendentals=0,
            bytes_accessed=4 * (M * K + K * N + M * N + N),
        ),
    )(*operands)
    return out.reshape(*orig_shape[:-1], N)


# ----------------------------------------------------------------------------
# Attention core: one batch per grid step, all heads in-register, (Sq, D) out
# ----------------------------------------------------------------------------
def _mha_heads(q, k, v, mask, n_heads, scale):
    """q:(Sq,D) k,v:(Sk,D) mask:(Sm,Sk) int, Sm in {1,Sq} -> (Sq,D) float32."""
    D = q.shape[-1]
    dk = D // n_heads
    keep = mask != 0                                  # broadcasts (1,Sk)->(Sq,Sk)
    outs = []
    for h in range(n_heads):                          # static unroll over heads
        sl = slice(h * dk, (h + 1) * dk)
        s = lax.dot_general(q[:, sl], k[:, sl], (((1,), (1,)), ((), ())),
                            preferred_element_type=jnp.float32) * scale
        s = jnp.where(keep, s, -1e30)
        m_max = jnp.max(s, axis=-1, keepdims=True)
        p = jnp.exp(s - m_max)
        denom = jnp.sum(p, axis=-1, keepdims=True)
        oh = jnp.dot(p.astype(v.dtype), v[:, sl],
                     preferred_element_type=jnp.float32)
        # normalization folded into the (small) output, reciprocal on the EUP
        outs.append(oh * pl.reciprocal(denom, approx=True))
    return jnp.concatenate(outs, axis=-1)             # (Sq, D), lane-dense


def _self_attn_kernel(qkv_ref, m_ref, o_ref, *, n_heads, d_model, scale):
    qkv = qkv_ref[...]                                # (Sq, 3D) fused projection
    q = qkv[:, :d_model]
    k = qkv[:, d_model:2 * d_model]
    v = qkv[:, 2 * d_model:]
    o_ref[...] = _mha_heads(q, k, v, m_ref[...], n_heads, scale).astype(o_ref.dtype)


def _cross_attn_kernel(q_ref, kv_ref, m_ref, o_ref, *, n_heads, d_model, scale):
    kv = kv_ref[...]                                  # (Sk, 2D) fused K|V
    o_ref[...] = _mha_heads(q_ref[...], kv[:, :d_model], kv[:, d_model:],
                            m_ref[...], n_heads, scale).astype(o_ref.dtype)


def self_attention(x, mask, p, n_heads):
    """Masked self-attention head outputs A (B,Sq,D) — before the Wo projection."""
    B, Sq, D = x.shape
    wqkv = jnp.concatenate([p["wq"], p["wk"], p["wv"]], axis=1)   # (D, 3D)
    bqkv = jnp.concatenate([p["bq"], p["bk"], p["bv"]])
    qkv = linear(x, wqkv, bqkv)                                    # (B, Sq, 3D)
    mask2 = mask[:, 0]                                             # (B, Sq, Sq) int
    Sm = mask2.shape[1]
    scale = 1.0 / math.sqrt(D // n_heads)
    return pl.pallas_call(
        functools.partial(_self_attn_kernel, n_heads=n_heads, d_model=D, scale=scale),
        out_shape=jax.ShapeDtypeStruct((B, Sq, D), x.dtype),
        grid_spec=pltpu.PrefetchScalarGridSpec(
            num_scalar_prefetch=0,
            grid=(B,),
            in_specs=[
                pl.BlockSpec((None, Sq, 3 * D), lambda b: (b, 0, 0)),
                pl.BlockSpec((None, Sm, Sq), lambda b: (b, 0, 0)),
            ],
            out_specs=pl.BlockSpec((None, Sq, D), lambda b: (b, 0, 0)),
        ),
        compiler_params=pltpu.CompilerParams(
            dimension_semantics=("parallel",),
            vmem_limit_bytes=32 * 1024 * 1024,
        ),
    )(qkv, mask2)


def cross_attention(q_in, kv_in, mask, p, n_heads):
    """Cross-attention head outputs A (B,Sq,D) — before the Wo projection."""
    B, Sq, D = q_in.shape
    Sk = kv_in.shape[1]
    q = linear(q_in, p["wq"], p["bq"])                             # (B, Sq, D)
    wkv = jnp.concatenate([p["wk"], p["wv"]], axis=1)              # (D, 2D)
    bkv = jnp.concatenate([p["bk"], p["bv"]])
    kv = linear(kv_in, wkv, bkv)                                   # (B, Sk, 2D)
    mask2 = mask[:, 0]                                             # (B, 1, Sk) int
    Sm = mask2.shape[1]
    scale = 1.0 / math.sqrt(D // n_heads)
    return pl.pallas_call(
        functools.partial(_cross_attn_kernel, n_heads=n_heads, d_model=D, scale=scale),
        out_shape=jax.ShapeDtypeStruct((B, Sq, D), q_in.dtype),
        grid_spec=pltpu.PrefetchScalarGridSpec(
            num_scalar_prefetch=0,
            grid=(B,),
            in_specs=[
                pl.BlockSpec((None, Sq, D), lambda b: (b, 0, 0)),
                pl.BlockSpec((None, Sk, 2 * D), lambda b: (b, 0, 0)),
                pl.BlockSpec((None, Sm, Sk), lambda b: (b, 0, 0)),
            ],
            out_specs=pl.BlockSpec((None, Sq, D), lambda b: (b, 0, 0)),
        ),
        compiler_params=pltpu.CompilerParams(
            dimension_semantics=("parallel",),
            vmem_limit_bytes=32 * 1024 * 1024,
        ),
    )(q, kv, mask2)


# ----------------------------------------------------------------------------
# DecoderLayer / Decoder forward (dropout = identity, eval mode)
# ----------------------------------------------------------------------------
def decoder_layer(trg, src, trg_mask, src_mask, lp, n_heads):
    mp = lp["masked_attn"]
    a = self_attention(trg, trg_mask, mp, n_heads)
    trg = linear(a, mp["wo"], mp["bo"],                       # Wo + Add&LN fused
                 residual=trg, gamma=lp["ln1_g"], beta=lp["ln1_b"])
    cp = lp["attn"]
    a = cross_attention(trg, src, src_mask, cp, n_heads)
    trg = linear(a, cp["wo"], cp["bo"],                       # Wo + Add&LN fused
                 residual=trg, gamma=lp["ln2_g"], beta=lp["ln2_b"])
    h = linear(trg, lp["ffn_w1"], lp["ffn_b1"], activation="relu")
    trg = linear(h, lp["ffn_w2"], lp["ffn_b2"],               # FFN2 + Add&LN fused
                 residual=trg, gamma=lp["ln3_g"], beta=lp["ln3_b"])
    return trg


def decoder_forward(trg, src, trg_mask, src_mask, params, n_heads, noise):
    for lp in params["layers"]:
        trg = decoder_layer(trg, src, trg_mask, src_mask, lp, n_heads)
    # `trg += randn*0.001` (the gaussian draw is supplied by the wrapper so the
    # check is deterministic) fused into the prologue of the vocab projection.
    return linear(trg, params["wo"], params["bo"],
                  prologue_add=noise, add_scale=1e-3)


# ----------------------------------------------------------------------------
# Pure-JAX reference (same semantics as the PyTorch module, eval mode)
# ----------------------------------------------------------------------------
def _ref_mha(query, key, value, mask, p, n_heads):
    B, Sq, D = query.shape
    Sk = key.shape[1]
    dk = D // n_heads
    Q = (query @ p["wq"] + p["bq"]).reshape(B, Sq, n_heads, dk).transpose(0, 2, 1, 3)
    K = (key @ p["wk"] + p["bk"]).reshape(B, Sk, n_heads, dk).transpose(0, 2, 1, 3)
    V = (value @ p["wv"] + p["bv"]).reshape(B, Sk, n_heads, dk).transpose(0, 2, 1, 3)
    s = jnp.einsum("bhqd,bhkd->bhqk", Q, K) / math.sqrt(dk)
    s = jnp.where(mask > 0, s, -1e30)
    probs = jax.nn.softmax(s, axis=-1)
    A = jnp.einsum("bhqk,bhkd->bhqd", probs, V)
    A = A.transpose(0, 2, 1, 3).reshape(B, Sq, D)
    return A @ p["wo"] + p["bo"]


def _ref_ln(x, g, b, eps=1e-5):
    mean = jnp.mean(x, axis=-1, keepdims=True)
    var = jnp.mean((x - mean) ** 2, axis=-1, keepdims=True)
    return (x - mean) * lax.rsqrt(var + eps) * g + b


def _ref_decoder(trg, src, trg_mask, src_mask, params, n_heads, noise):
    for lp in params["layers"]:
        a = _ref_mha(trg, trg, trg, trg_mask, lp["masked_attn"], n_heads)
        trg = _ref_ln(trg + a, lp["ln1_g"], lp["ln1_b"])
        a = _ref_mha(trg, src, src, src_mask, lp["attn"], n_heads)
        trg = _ref_ln(trg + a, lp["ln2_g"], lp["ln2_b"])
        h = jnp.maximum(trg @ lp["ffn_w1"] + lp["ffn_b1"], 0.0)
        a = h @ lp["ffn_w2"] + lp["ffn_b2"]
        trg = _ref_ln(trg + a, lp["ln3_g"], lp["ln3_b"])
    trg = trg + noise * 1e-3
    return trg @ params["wo"] + params["bo"]


# ----------------------------------------------------------------------------
# parameter init + smoke test
# ----------------------------------------------------------------------------
def _init_linear(key, fan_in, fan_out):
    k1, k2 = jax.random.split(key)
    bound = 1.0 / math.sqrt(fan_in)
    w = jax.random.uniform(k1, (fan_in, fan_out), jnp.float32, -bound, bound)
    b = jax.random.uniform(k2, (fan_out,), jnp.float32, -bound, bound)
    return w, b


def _init_mha(key, d_model):
    ks = jax.random.split(key, 4)
    wq, bq = _init_linear(ks[0], d_model, d_model)
    wk, bk = _init_linear(ks[1], d_model, d_model)
    wv, bv = _init_linear(ks[2], d_model, d_model)
    wo, bo = _init_linear(ks[3], d_model, d_model)
    return {"wq": wq, "bq": bq, "wk": wk, "bk": bk,
            "wv": wv, "bv": bv, "wo": wo, "bo": bo}


def _init_layer(key, d_model, d_ffn):
    ks = jax.random.split(key, 8)
    w1, b1 = _init_linear(ks[2], d_model, d_ffn)
    w2, b2 = _init_linear(ks[3], d_ffn, d_model)
    return {
        "masked_attn": _init_mha(ks[0], d_model),
        "attn": _init_mha(ks[1], d_model),
        "ffn_w1": w1, "ffn_b1": b1, "ffn_w2": w2, "ffn_b2": b2,
        "ln1_g": 1.0 + 0.1 * jax.random.normal(ks[4], (d_model,), jnp.float32),
        "ln1_b": 0.1 * jax.random.normal(ks[5], (d_model,), jnp.float32),
        "ln2_g": 1.0 + 0.1 * jax.random.normal(ks[6], (d_model,), jnp.float32),
        "ln2_b": 0.1 * jax.random.normal(ks[7], (d_model,), jnp.float32),
        "ln3_g": jnp.ones((d_model,), jnp.float32),
        "ln3_b": jnp.zeros((d_model,), jnp.float32),
    }


if __name__ == "__main__":
    vocab_size = 50
    d_model = 32
    n_layers = 2
    n_heads = 4
    d_ffn = 64
    batch, trg_seq, src_seq = 2, 8, 10

    root = jax.random.PRNGKey(0)
    k_layers, k_wo, k_trg, k_src, k_noise = jax.random.split(root, 5)

    layer_keys = jax.random.split(k_layers, n_layers)
    wo, bo = _init_linear(k_wo, d_model, vocab_size)
    params = {
        "layers": [_init_layer(layer_keys[i], d_model, d_ffn) for i in range(n_layers)],
        "wo": wo,
        "bo": bo,
    }

    trg = jax.random.normal(k_trg, (batch, trg_seq, d_model), jnp.float32)
    src = jax.random.normal(k_src, (batch, src_seq, d_model), jnp.float32)

    # causal target mask (B, 1, Sq, Sq); source padding mask (B, 1, 1, Sk) — int32
    causal = jnp.tril(jnp.ones((trg_seq, trg_seq), jnp.int32))
    trg_mask = jnp.broadcast_to(causal, (batch, 1, trg_seq, trg_seq))
    src_valid = jnp.array([[1] * src_seq, [1] * (src_seq - 2) + [0, 0]], jnp.int32)
    src_mask = src_valid.reshape(batch, 1, 1, src_seq)

    noise = jax.random.normal(k_noise, trg.shape, jnp.float32)

    fwd = jax.jit(decoder_forward, static_argnums=(5,))
    out = fwd(trg, src, trg_mask, src_mask, params, n_heads, noise)
    out = jax.block_until_ready(out)

    ref = _ref_decoder(trg, src, trg_mask, src_mask, params, n_heads, noise)
    ref = jax.block_until_ready(ref)

    assert out.shape == (batch, trg_seq, vocab_size)
    assert bool(jnp.all(jnp.isfinite(out)))
    assert jnp.allclose(out, ref, atol=2e-2, rtol=2e-2), (
        f"max abs diff {float(jnp.max(jnp.abs(out - ref)))}"
    )

    print("KERNEL_OK")
</pallas_src>

<mosaic_0001>
module attributes {stable_mosaic.version = 11 : i64} {
  func.func @_self_attn_kernel(%arg0: i32, %arg1: memref<1x8x96xf32, #tpu.memory_space<vmem>>, %arg2: memref<1x8x8xi32, #tpu.memory_space<vmem>>, %arg3: memref<1x8x32xf32, #tpu.memory_space<vmem>>) attributes {dimension_semantics = [#tpu.dimension_semantics<parallel>], iteration_bounds = array<i64: 2>, scalar_prefetch = 0 : i64, scratch_operands = 0 : i64, tpu.core_type = #tpu.core_type<tc>, window_params = [{transform_indices = @transform_0, window_bounds = array<i64: 1, 8, 96>}, {transform_indices = @transform_1, window_bounds = array<i64: 1, 8, 8>}, {transform_indices = @transform_2, window_bounds = array<i64: 1, 8, 32>}]} {
    %c0 = arith.constant 0 : index
    %c0_0 = arith.constant 0 : index
    %c0_1 = arith.constant 0 : index
    %0 = vector.load %arg1[%c0, %c0_0, %c0_1] : memref<1x8x96xf32, #tpu.memory_space<vmem>>, vector<1x8x96xf32>
    %1 = vector.shape_cast %0 : vector<1x8x96xf32> to vector<8x96xf32>
    %2 = vector.extract_strided_slice %1 {offsets = [0, 0], sizes = [8, 32], strides = [1, 1]} : vector<8x96xf32> to vector<8x32xf32>
    %3 = vector.extract_strided_slice %1 {offsets = [0, 32], sizes = [8, 32], strides = [1, 1]} : vector<8x96xf32> to vector<8x32xf32>
    %4 = vector.extract_strided_slice %1 {offsets = [0, 64], sizes = [8, 32], strides = [1, 1]} : vector<8x96xf32> to vector<8x32xf32>
    %c0_2 = arith.constant 0 : index
    %c0_3 = arith.constant 0 : index
    %c0_4 = arith.constant 0 : index
    %5 = vector.load %arg2[%c0_2, %c0_3, %c0_4] : memref<1x8x8xi32, #tpu.memory_space<vmem>>, vector<1x8x8xi32>
    %6 = vector.shape_cast %5 : vector<1x8x8xi32> to vector<8x8xi32>
    %c0_i32 = arith.constant 0 : i32
    %7 = vector.broadcast %c0_i32 : i32 to vector<8x8xi32>
    %8 = arith.cmpi ne, %6, %7 : vector<8x8xi32>
    %9 = vector.extract_strided_slice %2 {offsets = [0, 0], sizes = [8, 8], strides = [1, 1]} : vector<8x32xf32> to vector<8x8xf32>
    %10 = vector.extract_strided_slice %3 {offsets = [0, 0], sizes = [8, 8], strides = [1, 1]} : vector<8x32xf32> to vector<8x8xf32>
    %cst = arith.constant dense<0.000000e+00> : vector<8x8xf32>
    %11 = tpu.matmul %9, %10, %cst {dimension_numbers = #tpu.dot_dimension_numbers<[1], [1], [0], [0], [0, 0, 1, 0], [], []>} : vector<8x8xf32>, vector<8x8xf32>, vector<8x8xf32> -> vector<8x8xf32>
    %cst_5 = arith.constant 0.353553385 : f32
    %12 = vector.broadcast %cst_5 : f32 to vector<8x8xf32>
    %13 = arith.mulf %11, %12 : vector<8x8xf32>
    %cst_6 = arith.constant -1.000000e+30 : f32
    %14 = vector.broadcast %cst_6 : f32 to vector<8x8xf32>
    %15 = arith.select %8, %13, %14 : vector<8x8xi1>, vector<8x8xf32>
    %cst_7 = arith.constant dense<0xFF800000> : vector<8xf32>
    %16 = vector.multi_reduction <maximumf>, %15, %cst_7 [1] : vector<8x8xf32> to vector<8xf32>
    %17 = vector.shape_cast %16 : vector<8xf32> to vector<8x1xf32>
    %18 = vector.broadcast %17 : vector<8x1xf32> to vector<8x8xf32>
    %19 = arith.subf %15, %18 : vector<8x8xf32>
    %20 = math.exp %19 : vector<8x8xf32>
    %cst_8 = arith.constant dense<0.000000e+00> : vector<8xf32>
    %21 = vector.multi_reduction <add>, %20, %cst_8 [1] : vector<8x8xf32> to vector<8xf32>
    %22 = vector.shape_cast %21 : vector<8xf32> to vector<8x1xf32>
    %23 = vector.extract_strided_slice %4 {offsets = [0, 0], sizes = [8, 8], strides = [1, 1]} : vector<8x32xf32> to vector<8x8xf32>
    %cst_9 = arith.constant dense<0.000000e+00> : vector<8x8xf32>
    %24 = tpu.matmul %20, %23, %cst_9 {dimension_numbers = #tpu.dot_dimension_numbers<[1], [0], [0], [1], [0, 0, 1, 1], [], []>} : vector<8x8xf32>, vector<8x8xf32>, vector<8x8xf32> -> vector<8x8xf32>
    %25 = tpu.reciprocal %22 {approx = true} : vector<8x1xf32> -> vector<8x1xf32>
    %26 = vector.broadcast %25 : vector<8x1xf32> to vector<8x8xf32>
    %27 = arith.mulf %24, %26 : vector<8x8xf32>
    %28 = vector.extract_strided_slice %2 {offsets = [0, 8], sizes = [8, 8], strides = [1, 1]} : vector<8x32xf32> to vector<8x8xf32>
    %29 = vector.extract_strided_slice %3 {offsets = [0, 8], sizes = [8, 8], strides = [1, 1]} : vector<8x32xf32> to vector<8x8xf32>
    %cst_10 = arith.constant dense<0.000000e+00> : vector<8x8xf32>
    %30 = tpu.matmul %28, %29, %cst_10 {dimension_numbers = #tpu.dot_dimension_numbers<[1], [1], [0], [0], [0, 0, 1, 0], [], []>} : vector<8x8xf32>, vector<8x8xf32>, vector<8x8xf32> -> vector<8x8xf32>
    %cst_11 = arith.constant 0.353553385 : f32
    %31 = vector.broadcast %cst_11 : f32 to vector<8x8xf32>
    %32 = arith.mulf %30, %31 : vector<8x8xf32>
    %cst_12 = arith.constant -1.000000e+30 : f32
    %33 = vector.broadcast %cst_12 : f32 to vector<8x8xf32>
    %34 = arith.select %8, %32, %33 : vector<8x8xi1>, vector<8x8xf32>
    %cst_13 = arith.constant dense<0xFF800000> : vector<8xf32>
    %35 = vector.multi_reduction <maximumf>, %34, %cst_13 [1] : vector<8x8xf32> to vector<8xf32>
    %36 = vector.shape_cast %35 : vector<8xf32> to vector<8x1xf32>
    %37 = vector.broadcast %36 : vector<8x1xf32> to vector<8x8xf32>
    %38 = arith.subf %34, %37 : vector<8x8xf32>
    %39 = math.exp %38 : vector<8x8xf32>
    %cst_14 = arith.constant dense<0.000000e+00> : vector<8xf32>
    %40 = vector.multi_reduction <add>, %39, %cst_14 [1] : vector<8x8xf32> to vector<8xf32>
    %41 = vector.shape_cast %40 : vector<8xf32> to vector<8x1xf32>
    %42 = vector.extract_strided_slice %4 {offsets = [0, 8], sizes = [8, 8], strides = [1, 1]} : vector<8x32xf32> to vector<8x8xf32>
    %cst_15 = arith.constant dense<0.000000e+00> : vector<8x8xf32>
    %43 = tpu.matmul %39, %42, %cst_15 {dimension_numbers = #tpu.dot_dimension_numbers<[1], [0], [0], [1], [0, 0, 1, 1], [], []>} : vector<8x8xf32>, vector<8x8xf32>, vector<8x8xf32> -> vector<8x8xf32>
    %44 = tpu.reciprocal %41 {approx = true} : vector<8x1xf32> -> vector<8x1xf32>
    %45 = vector.broadcast %44 : vector<8x1xf32> to vector<8x8xf32>
    %46 = arith.mulf %43, %45 : vector<8x8xf32>
    %47 = vector.extract_strided_slice %2 {offsets = [0, 16], sizes = [8, 8], strides = [1, 1]} : vector<8x32xf32> to vector<8x8xf32>
    %48 = vector.extract_strided_slice %3 {offsets = [0, 16], sizes = [8, 8], strides = [1, 1]} : vector<8x32xf32> to vector<8x8xf32>
    %cst_16 = arith.constant dense<0.000000e+00> : vector<8x8xf32>
    %49 = tpu.matmul %47, %48, %cst_16 {dimension_numbers = #tpu.dot_dimension_numbers<[1], [1], [0], [0], [0, 0, 1, 0], [], []>} : vector<8x8xf32>, vector<8x8xf32>, vector<8x8xf32> -> vector<8x8xf32>
    %cst_17 = arith.constant 0.353553385 : f32
    %50 = vector.broadcast %cst_17 : f32 to vector<8x8xf32>
    %51 = arith.mulf %49, %50 : vector<8x8xf32>
    %cst_18 = arith.constant -1.000000e+30 : f32
    %52 = vector.broadcast %cst_18 : f32 to vector<8x8xf32>
    %53 = arith.select %8, %51, %52 : vector<8x8xi1>, vector<8x8xf32>
    %cst_19 = arith.constant dense<0xFF800000> : vector<8xf32>
    %54 = vector.multi_reduction <maximumf>, %53, %cst_19 [1] : vector<8x8xf32> to vector<8xf32>
    %55 = vector.shape_cast %54 : vector<8xf32> to vector<8x1xf32>
    %56 = vector.broadcast %55 : vector<8x1xf32> to vector<8x8xf32>
    %57 = arith.subf %53, %56 : vector<8x8xf32>
    %58 = math.exp %57 : vector<8x8xf32>
    %cst_20 = arith.constant dense<0.000000e+00> : vector<8xf32>
    %59 = vector.multi_reduction <add>, %58, %cst_20 [1] : vector<8x8xf32> to vector<8xf32>
    %60 = vector.shape_cast %59 : vector<8xf32> to vector<8x1xf32>
    %61 = vector.extract_strided_slice %4 {offsets = [0, 16], sizes = [8, 8], strides = [1, 1]} : vector<8x32xf32> to vector<8x8xf32>
    %cst_21 = arith.constant dense<0.000000e+00> : vector<8x8xf32>
    %62 = tpu.matmul %58, %61, %cst_21 {dimension_numbers = #tpu.dot_dimension_numbers<[1], [0], [0], [1], [0, 0, 1, 1], [], []>} : vector<8x8xf32>, vector<8x8xf32>, vector<8x8xf32> -> vector<8x8xf32>
    %63 = tpu.reciprocal %60 {approx = true} : vector<8x1xf32> -> vector<8x1xf32>
    %64 = vector.broadcast %63 : vector<8x1xf32> to vector<8x8xf32>
    %65 = arith.mulf %62, %64 : vector<8x8xf32>
    %66 = vector.extract_strided_slice %2 {offsets = [0, 24], sizes = [8, 8], strides = [1, 1]} : vector<8x32xf32> to vector<8x8xf32>
    %67 = vector.extract_strided_slice %3 {offsets = [0, 24], sizes = [8, 8], strides = [1, 1]} : vector<8x32xf32> to vector<8x8xf32>
    %cst_22 = arith.constant dense<0.000000e+00> : vector<8x8xf32>
    %68 = tpu.matmul %66, %67, %cst_22 {dimension_numbers = #tpu.dot_dimension_numbers<[1], [1], [0], [0], [0, 0, 1, 0], [], []>} : vector<8x8xf32>, vector<8x8xf32>, vector<8x8xf32> -> vector<8x8xf32>
    %cst_23 = arith.constant 0.353553385 : f32
    %69 = vector.broadcast %cst_23 : f32 to vector<8x8xf32>
    %70 = arith.mulf %68, %69 : vector<8x8xf32>
    %cst_24 = arith.constant -1.000000e+30 : f32
    %71 = vector.broadcast %cst_24 : f32 to vector<8x8xf32>
    %72 = arith.select %8, %70, %71 : vector<8x8xi1>, vector<8x8xf32>
    %cst_25 = arith.constant dense<0xFF800000> : vector<8xf32>
    %73 = vector.multi_reduction <maximumf>, %72, %cst_25 [1] : vector<8x8xf32> to vector<8xf32>
    %74 = vector.shape_cast %73 : vector<8xf32> to vector<8x1xf32>
    %75 = vector.broadcast %74 : vector<8x1xf32> to vector<8x8xf32>
    %76 = arith.subf %72, %75 : vector<8x8xf32>
    %77 = math.exp %76 : vector<8x8xf32>
    %cst_26 = arith.constant dense<0.000000e+00> : vector<8xf32>
    %78 = vector.multi_reduction <add>, %77, %cst_26 [1] : vector<8x8xf32> to vector<8xf32>
    %79 = vector.shape_cast %78 : vector<8xf32> to vector<8x1xf32>
    %80 = vector.extract_strided_slice %4 {offsets = [0, 24], sizes = [8, 8], strides = [1, 1]} : vector<8x32xf32> to vector<8x8xf32>
    %cst_27 = arith.constant dense<0.000000e+00> : vector<8x8xf32>
    %81 = tpu.matmul %77, %80, %cst_27 {dimension_numbers = #tpu.dot_dimension_numbers<[1], [0], [0], [1], [0, 0, 1, 1], [], []>} : vector<8x8xf32>, vector<8x8xf32>, vector<8x8xf32> -> vector<8x8xf32>
    %82 = tpu.reciprocal %79 {approx = true} : vector<8x1xf32> -> vector<8x1xf32>
    %83 = vector.broadcast %82 : vector<8x1xf32> to vector<8x8xf32>
    %84 = arith.mulf %81, %83 : vector<8x8xf32>
    %85 = tpu.concatenate %27, %46, %65, %84 in 1 : vector<8x8xf32>, vector<8x8xf32>, vector<8x8xf32>, vector<8x8xf32> -> vector<8x32xf32>
    %c0_28 = arith.constant 0 : index
    %c0_29 = arith.constant 0 : index
    %c0_30 = arith.constant 0 : index
    %86 = vector.load %arg3[%c0_28, %c0_29, %c0_30] : memref<1x8x32xf32, #tpu.memory_space<vmem>>, vector<1x8x32xf32>
    %87 = vector.shape_cast %86 : vector<1x8x32xf32> to vector<8x32xf32>
    %88 = vector.shape_cast %85 : vector<8x32xf32> to vector<1x8x32xf32>
    tpu.vector_store %arg3[%c0_28, %c0_29, %c0_30], %88 {strides = array<i32>} : memref<1x8x32xf32, #tpu.memory_space<vmem>>, vector<1x8x32xf32>,
    return
  }
  func.func @transform_0(%arg0: i32) -> (i32, i32, i32) {
    %c0_i32 = arith.constant 0 : i32
    %c0_i32_0 = arith.constant 0 : i32
    %c0_i32_1 = arith.constant 0 : i32
    return %arg0, %c0_i32, %c0_i32_0 : i32, i32, i32
  }
  func.func @transform_1(%arg0: i32) -> (i32, i32, i32) {
    %c0_i32 = arith.constant 0 : i32
    %c0_i32_0 = arith.constant 0 : i32
    %c0_i32_1 = arith.constant 0 : i32
    return %arg0, %c0_i32, %c0_i32_0 : i32, i32, i32
  }
  func.func @transform_2(%arg0: i32) -> (i32, i32, i32) {
    %c0_i32 = arith.constant 0 : i32
    %c0_i32_0 = arith.constant 0 : i32
    %c0_i32_1 = arith.constant 0 : i32
    return %arg0, %c0_i32, %c0_i32_0 : i32, i32, i32
  }
}

module attributes {stable_mosaic.version = 11 : i64} {
  func.func @_linear_kernel(%arg0: i32, %arg1: i32, %arg2: i32, %arg3: memref<16x32xf32, #tpu.memory_space<vmem>>, %arg4: memref<32x96xf32, #tpu.memory_space<vmem>>, %arg5: memref<1x96xf32, #tpu.memory_space<vmem>>, %arg6: memref<16x96xf32, #tpu.memory_space<vmem>>, %arg7: memref<16x96xf32, #tpu.memory_space<vmem>>) attributes {dimension_semantics = [#tpu.dimension_semantics<parallel>, #tpu.dimension_semantics<parallel>, #tpu.dimension_semantics<arbitrary>], iteration_bounds = array<i64: 1, 1, 1>, scalar_prefetch = 0 : i64, scratch_operands = 1 : i64, tpu.core_type = #tpu.core_type<tc>, window_params = [{transform_indices = @transform_0, window_bounds = array<i64: 16, 32>}, {transform_indices = @transform_1, window_bounds = array<i64: 32, 96>}, {transform_indices = @transform_2, window_bounds = array<i64: 1, 96>}, {transform_indices = @transform_3, window_bounds = array<i64: 16, 96>}]} {
    %c0_i32 = arith.constant 0 : i32
    %0 = arith.cmpi eq, %arg2, %c0_i32 : i32
    %1 = arith.extui %0 : i1 to i32
    %c0_i32_0 = arith.constant 0 : i32
    %2 = arith.cmpi ne, %1, %c0_i32_0 : i32
    scf.if %2 {
      %cst_10 = arith.constant 0.000000e+00 : f32
      %12 = vector.broadcast %cst_10 : f32 to vector<16x96xf32>
      %c0_11 = arith.constant 0 : index
      %c0_12 = arith.constant 0 : index
      %13 = vector.load %arg7[%c0_11, %c0_12] : memref<16x96xf32, #tpu.memory_space<vmem>>, vector<16x96xf32>
      tpu.vector_store %arg7[%c0_11, %c0_12], %12 {strides = array<i32>} : memref<16x96xf32, #tpu.memory_space<vmem>>, vector<16x96xf32>,
    } else {
    }
    %c0 = arith.constant 0 : index
    %c0_1 = arith.constant 0 : index
    %3 = vector.load %arg3[%c0, %c0_1] : memref<16x32xf32, #tpu.memory_space<vmem>>, vector<16x32xf32>
    %c0_2 = arith.constant 0 : index
    %c0_3 = arith.constant 0 : index
    %4 = vector.load %arg7[%c0_2, %c0_3] : memref<16x96xf32, #tpu.memory_space<vmem>>, vector<16x96xf32>
    %c0_4 = arith.constant 0 : index
    %c0_5 = arith.constant 0 : index
    %5 = vector.load %arg4[%c0_4, %c0_5] : memref<32x96xf32, #tpu.memory_space<vmem>>, vector<32x96xf32>
    %cst = arith.constant dense<0.000000e+00> : vector<16x96xf32>
    %6 = tpu.matmul %3, %5, %cst {dimension_numbers = #tpu.dot_dimension_numbers<[1], [0], [0], [1], [0, 0, 1, 1], [], []>} : vector<16x32xf32>, vector<32x96xf32>, vector<16x96xf32> -> vector<16x96xf32>
    %7 = arith.addf %4, %6 : vector<16x96xf32>
    %c0_6 = arith.constant 0 : index
    %c0_7 = arith.constant 0 : index
    %8 = vector.load %arg7[%c0_6, %c0_7] : memref<16x96xf32, #tpu.memory_space<vmem>>, vector<16x96xf32>
    tpu.vector_store %arg7[%c0_6, %c0_7], %7 {strides = array<i32>} : memref<16x96xf32, #tpu.memory_space<vmem>>, vector<16x96xf32>,
    %c0_i32_8 = arith.constant 0 : i32
    %9 = arith.cmpi eq, %arg2, %c0_i32_8 : i32
    %10 = arith.extui %9 : i1 to i32
    %c0_i32_9 = arith.constant 0 : i32
    %11 = arith.cmpi ne, %10, %c0_i32_9 : i32
    scf.if %11 {
      %c0_10 = arith.constant 0 : index
      %c0_11 = arith.constant 0 : index
      %12 = vector.load %arg7[%c0_10, %c0_11] : memref<16x96xf32, #tpu.memory_space<vmem>>, vector<16x96xf32>
      %c0_12 = arith.constant 0 : index
      %c0_13 = arith.constant 0 : index
      %13 = vector.load %arg5[%c0_12, %c0_13] : memref<1x96xf32, #tpu.memory_space<vmem>>, vector<1x96xf32>
      %14 = vector.broadcast %13 : vector<1x96xf32> to vector<16x96xf32>
      %15 = arith.addf %12, %14 : vector<16x96xf32>
      %c0_14 = arith.constant 0 : index
      %c0_15 = arith.constant 0 : index
      %16 = vector.load %arg6[%c0_14, %c0_15] : memref<16x96xf32, #tpu.memory_space<vmem>>, vector<16x96xf32>
      tpu.vector_store %arg6[%c0_14, %c0_15], %15 {strides = array<i32>} : memref<16x96xf32, #tpu.memory_space<vmem>>, vector<16x96xf32>,
    } else {
    }
    return
  }
  func.func @transform_0(%arg0: i32, %arg1: i32, %arg2: i32) -> (i32, i32) {
    %c0_i32 = arith.constant 0 : i32
    return %arg0, %arg2 : i32, i32
  }
  func.func @transform_1(%arg0: i32, %arg1: i32, %arg2: i32) -> (i32, i32) {
    %c0_i32 = arith.constant 0 : i32
    return %arg2, %arg1 : i32, i32
  }
  func.func @transform_2(%arg0: i32, %arg1: i32, %arg2: i32) -> (i32, i32) {
    %c0_i32 = arith.constant 0 : i32
    %c0_i32_0 = arith.constant 0 : i32
    return %c0_i32, %arg1 : i32, i32
  }
  func.func @transform_3(%arg0: i32, %arg1: i32, %arg2: i32) -> (i32, i32) {
    %c0_i32 = arith.constant 0 : i32
    return %arg0, %arg1 : i32, i32
  }
}

module attributes {stable_mosaic.version = 11 : i64} {
  func.func @_linear_kernel(%arg0: i32, %arg1: i32, %arg2: i32, %arg3: memref<16x32xf32, #tpu.memory_space<vmem>>, %arg4: memref<32x32xf32, #tpu.memory_space<vmem>>, %arg5: memref<1x32xf32, #tpu.memory_space<vmem>>, %arg6: memref<16x32xf32, #tpu.memory_space<vmem>>, %arg7: memref<1x32xf32, #tpu.memory_space<vmem>>, %arg8: memref<1x32xf32, #tpu.memory_space<vmem>>, %arg9: memref<16x32xf32, #tpu.memory_space<vmem>>, %arg10: memref<16x32xf32, #tpu.memory_space<vmem>>) attributes {dimension_semantics = [#tpu.dimension_semantics<parallel>, #tpu.dimension_semantics<parallel>, #tpu.dimension_semantics<arbitrary>], iteration_bounds = array<i64: 1, 1, 1>, scalar_prefetch = 0 : i64, scratch_operands = 1 : i64, tpu.core_type = #tpu.core_type<tc>, window_params = [{transform_indices = @transform_0, window_bounds = array<i64: 16, 32>}, {transform_indices = @transform_1, window_bounds = array<i64: 32, 32>}, {transform_indices = @transform_2, window_bounds = array<i64: 1, 32>}, {transform_indices = @transform_3, window_bounds = array<i64: 16, 32>}, {transform_indices = @transform_4, window_bounds = array<i64: 1, 32>}, {transform_indices = @transform_5, window_bounds = array<i64: 1, 32>}, {transform_indices = @transform_6, window_bounds = array<i64: 16, 32>}]} {
    %c0_i32 = arith.constant 0 : i32
    %0 = arith.cmpi eq, %arg2, %c0_i32 : i32
    %1 = arith.extui %0 : i1 to i32
    %c0_i32_0 = arith.constant 0 : i32
    %2 = arith.cmpi ne, %1, %c0_i32_0 : i32
    scf.if %2 {
      %cst_10 = arith.constant 0.000000e+00 : f32
      %12 = vector.broadcast %cst_10 : f32 to vector<16x32xf32>
      %c0_11 = arith.constant 0 : index
      %c0_12 = arith.constant 0 : index
      %13 = vector.load %arg10[%c0_11, %c0_12] : memref<16x32xf32, #tpu.memory_space<vmem>>, vector<16x32xf32>
      tpu.vector_store %arg10[%c0_11, %c0_12], %12 {strides = array<i32>} : memref<16x32xf32, #tpu.memory_space<vmem>>, vector<16x32xf32>,
    } else {
    }
    %c0 = arith.constant 0 : index
    %c0_1 = arith.constant 0 : index
    %3 = vector.load %arg3[%c0, %c0_1] : memref<16x32xf32, #tpu.memory_space<vmem>>, vector<16x32xf32>
    %c0_2 = arith.constant 0 : index
    %c0_3 = arith.constant 0 : index
    %4 = vector.load %arg10[%c0_2, %c0_3] : memref<16x32xf32, #tpu.memory_space<vmem>>, vector<16x32xf32>
    %c0_4 = arith.constant 0 : index
    %c0_5 = arith.constant 0 : index
    %5 = vector.load %arg4[%c0_4, %c0_5] : memref<32x32xf32, #tpu.memory_space<vmem>>, vector<32x32xf32>
    %cst = arith.constant dense<0.000000e+00> : vector<16x32xf32>
    %6 = tpu.matmul %3, %5, %cst {dimension_numbers = #tpu.dot_dimension_numbers<[1], [0], [0], [1], [0, 0, 1, 1], [], []>} : vector<16x32xf32>, vector<32x32xf32>, vector<16x32xf32> -> vector<16x32xf32>
    %7 = arith.addf %4, %6 : vector<16x32xf32>
    %c0_6 = arith.constant 0 : index
    %c0_7 = arith.constant 0 : index
    %8 = vector.load %arg10[%c0_6, %c0_7] : memref<16x32xf32, #tpu.memory_space<vmem>>, vector<16x32xf32>
    tpu.vector_store %arg10[%c0_6, %c0_7], %7 {strides = array<i32>} : memref<16x32xf32, #tpu.memory_space<vmem>>, vector<16x32xf32>,
    %c0_i32_8 = arith.constant 0 : i32
    %9 = arith.cmpi eq, %arg2, %c0_i32_8 : i32
    %10 = arith.extui %9 : i1 to i32
    %c0_i32_9 = arith.constant 0 : i32
    %11 = arith.cmpi ne, %10, %c0_i32_9 : i32
    scf.if %11 {
      %c0_10 = arith.constant 0 : index
      %c0_11 = arith.constant 0 : index
      %12 = vector.load %arg10[%c0_10, %c0_11] : memref<16x32xf32, #tpu.memory_space<vmem>>, vector<16x32xf32>
      %c0_12 = arith.constant 0 : index
      %c0_13 = arith.constant 0 : index
      %13 = vector.load %arg5[%c0_12, %c0_13] : memref<1x32xf32, #tpu.memory_space<vmem>>, vector<1x32xf32>
      %14 = vector.broadcast %13 : vector<1x32xf32> to vector<16x32xf32>
      %15 = arith.addf %12, %14 : vector<16x32xf32>
      %c0_14 = arith.constant 0 : index
      %c0_15 = arith.constant 0 : index
      %16 = vector.load %arg6[%c0_14, %c0_15] : memref<16x32xf32, #tpu.memory_space<vmem>>, vector<16x32xf32>
      %17 = arith.addf %15, %16 : vector<16x32xf32>
      %cst_16 = arith.constant dense<0.000000e+00> : vector<16xf32>
      %18 = vector.multi_reduction <add>, %17, %cst_16 [1] : vector<16x32xf32> to vector<16xf32>
      %19 = vector.shape_cast %18 : vector<16xf32> to vector<16x1xf32>
      %cst_17 = arith.constant 3.200000e+01 : f32
      %20 = vector.broadcast %cst_17 : f32 to vector<16x1xf32>
      %21 = arith.divf %19, %20 : vector<16x1xf32>
      %22 = vector.broadcast %21 : vector<16x1xf32> to vector<16x32xf32>
      %23 = arith.subf %17, %22 : vector<16x32xf32>
      %24 = arith.mulf %23, %23 : vector<16x32xf32>
      %cst_18 = arith.constant dense<0.000000e+00> : vector<16xf32>
      %25 = vector.multi_reduction <add>, %24, %cst_18 [1] : vector<16x32xf32> to vector<16xf32>
      %26 = vector.shape_cast %25 : vector<16xf32> to vector<16x1xf32>
      %cst_19 = arith.constant 3.200000e+01 : f32
      %27 = vector.broadcast %cst_19 : f32 to vector<16x1xf32>
      %28 = arith.divf %26, %27 : vector<16x1xf32>
      %cst_20 = arith.constant 9.99999974E-6 : f32
      %29 = vector.broadcast %cst_20 : f32 to vector<16x1xf32>
      %30 = arith.addf %28, %29 : vector<16x1xf32>
      %31 = math.rsqrt %30 : vector<16x1xf32>
      %32 = vector.broadcast %31 : vector<16x1xf32> to vector<16x32xf32>
      %33 = arith.mulf %23, %32 : vector<16x32xf32>
      %c0_21 = arith.constant 0 : index
      %c0_22 = arith.constant 0 : index
      %34 = vector.load %arg7[%c0_21, %c0_22] : memref<1x32xf32, #tpu.memory_space<vmem>>, vector<1x32xf32>
      %35 = vector.broadcast %34 : vector<1x32xf32> to vector<16x32xf32>
      %36 = arith.mulf %33, %35 : vector<16x32xf32>
      %c0_23 = arith.constant 0 : index
      %c0_24 = arith.constant 0 : index
      %37 = vector.load %arg8[%c0_23, %c0_24] : memref<1x32xf32, #tpu.memory_space<vmem>>, vector<1x32xf32>
      %38 = vector.broadcast %37 : vector<1x32xf32> to vector<16x32xf32>
      %39 = arith.addf %36, %38 : vector<16x32xf32>
      %c0_25 = arith.constant 0 : index
      %c0_26 = arith.constant 0 : index
      %40 = vector.load %arg9[%c0_25, %c0_26] : memref<16x32xf32, #tpu.memory_space<vmem>>, vector<16x32xf32>
      tpu.vector_store %arg9[%c0_25, %c0_26], %39 {strides = array<i32>} : memref<16x32xf32, #tpu.memory_space<vmem>>, vector<16x32xf32>,
    } else {
    }
    return
  }
  func.func @transform_0(%arg0: i32, %arg1: i32, %arg2: i32) -> (i32, i32) {
    %c0_i32 = arith.constant 0 : i32
    return %arg0, %arg2 : i32, i32
  }
  func.func @transform_1(%arg0: i32, %arg1: i32, %arg2: i32) -> (i32, i32) {
    %c0_i32 = arith.constant 0 : i32
    return %arg2, %arg1 : i32, i32
  }
  func.func @transform_2(%arg0: i32, %arg1: i32, %arg2: i32) -> (i32, i32) {
    %c0_i32 = arith.constant 0 : i32
    %c0_i32_0 = arith.constant 0 : i32
    return %c0_i32, %arg1 : i32, i32
  }
  func.func @transform_3(%arg0: i32, %arg1: i32, %arg2: i32) -> (i32, i32) {
    %c0_i32 = arith.constant 0 : i32
    return %arg0, %arg1 : i32, i32
  }
  func.func @transform_4(%arg0: i32, %arg1: i32, %arg2: i32) -> (i32, i32) {
    %c0_i32 = arith.constant 0 : i32
    %c0_i32_0 = arith.constant 0 : i32
    return %c0_i32, %arg1 : i32, i32
  }
  func.func @transform_5(%arg0: i32, %arg1: i32, %arg2: i32) -> (i32, i32) {
    %c0_i32 = arith.constant 0 : i32
    %c0_i32_0 = arith.constant 0 : i32
    return %c0_i32, %arg1 : i32, i32
  }
  func.func @transform_6(%arg0: i32, %arg1: i32, %arg2: i32) -> (i32, i32) {
    %c0_i32 = arith.constant 0 : i32
    return %arg0, %arg1 : i32, i32
  }
}

module attributes {stable_mosaic.version = 11 : i64} {
  func.func @_linear_kernel(%arg0: i32, %arg1: i32, %arg2: i32, %arg3: memref<16x32xf32, #tpu.memory_space<vmem>>, %arg4: memref<32x32xf32, #tpu.memory_space<vmem>>, %arg5: memref<1x32xf32, #tpu.memory_space<vmem>>, %arg6: memref<16x32xf32, #tpu.memory_space<vmem>>, %arg7: memref<16x32xf32, #tpu.memory_space<vmem>>) attributes {dimension_semantics = [#tpu.dimension_semantics<parallel>, #tpu.dimension_semantics<parallel>, #tpu.dimension_semantics<arbitrary>], iteration_bounds = array<i64: 1, 1, 1>, scalar_prefetch = 0 : i64, scratch_operands = 1 : i64, tpu.core_type = #tpu.core_type<tc>, window_params = [{transform_indices = @transform_0, window_bounds = array<i64: 16, 32>}, {transform_indices = @transform_1, window_bounds = array<i64: 32, 32>}, {transform_indices = @transform_2, window_bounds = array<i64: 1, 32>}, {transform_indices = @transform_3, window_bounds = array<i64: 16, 32>}]} {
    %c0_i32 = arith.constant 0 : i32
    %0 = arith.cmpi eq, %arg2, %c0_i32 : i32
    %1 = arith.extui %0 : i1 to i32
    %c0_i32_0 = arith.constant 0 : i32
    %2 = arith.cmpi ne, %1, %c0_i32_0 : i32
    scf.if %2 {
      %cst_10 = arith.constant 0.000000e+00 : f32
      %12 = vector.broadcast %cst_10 : f32 to vector<16x32xf32>
      %c0_11 = arith.constant 0 : index
      %c0_12 = arith.constant 0 : index
      %13 = vector.load %arg7[%c0_11, %c0_12] : memref<16x32xf32, #tpu.memory_space<vmem>>, vector<16x32xf32>
      tpu.vector_store %arg7[%c0_11, %c0_12], %12 {strides = array<i32>} : memref<16x32xf32, #tpu.memory_space<vmem>>, vector<16x32xf32>,
    } else {
    }
    %c0 = arith.constant 0 : index
    %c0_1 = arith.constant 0 : index
    %3 = vector.load %arg3[%c0, %c0_1] : memref<16x32xf32, #tpu.memory_space<vmem>>, vector<16x32xf32>
    %c0_2 = arith.constant 0 : index
    %c0_3 = arith.constant 0 : index
    %4 = vector.load %arg7[%c0_2, %c0_3] : memref<16x32xf32, #tpu.memory_space<vmem>>, vector<16x32xf32>
    %c0_4 = arith.constant 0 : index
    %c0_5 = arith.constant 0 : index
    %5 = vector.load %arg4[%c0_4, %c0_5] : memref<32x32xf32, #tpu.memory_space<vmem>>, vector<32x32xf32>
    %cst = arith.constant dense<0.000000e+00> : vector<16x32xf32>
    %6 = tpu.matmul %3, %5, %cst {dimension_numbers = #tpu.dot_dimension_numbers<[1], [0], [0], [1], [0, 0, 1, 1], [], []>} : vector<16x32xf32>, vector<32x32xf32>, vector<16x32xf32> -> vector<16x32xf32>
    %7 = arith.addf %4, %6 : vector<16x32xf32>
    %c0_6 = arith.constant 0 : index
    %c0_7 = arith.constant 0 : index
    %8 = vector.load %arg7[%c0_6, %c0_7] : memref<16x32xf32, #tpu.memory_space<vmem>>, vector<16x32xf32>
    tpu.vector_store %arg7[%c0_6, %c0_7], %7 {strides = array<i32>} : memref<16x32xf32, #tpu.memory_space<vmem>>, vector<16x32xf32>,
    %c0_i32_8 = arith.constant 0 : i32
    %9 = arith.cmpi eq, %arg2, %c0_i32_8 : i32
    %10 = arith.extui %9 : i1 to i32
    %c0_i32_9 = arith.constant 0 : i32
    %11 = arith.cmpi ne, %10, %c0_i32_9 : i32
    scf.if %11 {
      %c0_10 = arith.constant 0 : index
      %c0_11 = arith.constant 0 : index
      %12 = vector.load %arg7[%c0_10, %c0_11] : memref<16x32xf32, #tpu.memory_space<vmem>>, vector<16x32xf32>
      %c0_12 = arith.constant 0 : index
      %c0_13 = arith.constant 0 : index
      %13 = vector.load %arg5[%c0_12, %c0_13] : memref<1x32xf32, #tpu.memory_space<vmem>>, vector<1x32xf32>
      %14 = vector.broadcast %13 : vector<1x32xf32> to vector<16x32xf32>
      %15 = arith.addf %12, %14 : vector<16x32xf32>
      %c0_14 = arith.constant 0 : index
      %c0_15 = arith.constant 0 : index
      %16 = vector.load %arg6[%c0_14, %c0_15] : memref<16x32xf32, #tpu.memory_space<vmem>>, vector<16x32xf32>
      tpu.vector_store %arg6[%c0_14, %c0_15], %15 {strides = array<i32>} : memref<16x32xf32, #tpu.memory_space<vmem>>, vector<16x32xf32>,
    } else {
    }
    return
  }
  func.func @transform_0(%arg0: i32, %arg1: i32, %arg2: i32) -> (i32, i32) {
    %c0_i32 = arith.constant 0 : i32
    return %arg0, %arg2 : i32, i32
  }
  func.func @transform_1(%arg0: i32, %arg1: i32, %arg2: i32) -> (i32, i32) {
    %c0_i32 = arith.constant 0 : i32
    return %arg2, %arg1 : i32, i32
  }
  func.func @transform_2(%arg0: i32, %arg1: i32, %arg2: i32) -> (i32, i32) {
    %c0_i32 = arith.constant 0 : i32
    %c0_i32_0 = arith.constant 0 : i32
    return %c0_i32, %arg1 : i32, i32
  }
  func.func @transform_3(%arg0: i32, %arg1: i32, %arg2: i32) -> (i32, i32) {
    %c0_i32 = arith.constant 0 : i32
    return %arg0, %arg1 : i32, i32
  }
}

module attributes {stable_mosaic.version = 11 : i64} {
  func.func @_linear_kernel(%arg0: i32, %arg1: i32, %arg2: i32, %arg3: memref<20x32xf32, #tpu.memory_space<vmem>>, %arg4: memref<32x64xf32, #tpu.memory_space<vmem>>, %arg5: memref<1x64xf32, #tpu.memory_space<vmem>>, %arg6: memref<20x64xf32, #tpu.memory_space<vmem>>, %arg7: memref<20x64xf32, #tpu.memory_space<vmem>>) attributes {dimension_semantics = [#tpu.dimension_semantics<parallel>, #tpu.dimension_semantics<parallel>, #tpu.dimension_semantics<arbitrary>], iteration_bounds = array<i64: 1, 1, 1>, scalar_prefetch = 0 : i64, scratch_operands = 1 : i64, tpu.core_type = #tpu.core_type<tc>, window_params = [{transform_indices = @transform_0, window_bounds = array<i64: 20, 32>}, {transform_indices = @transform_1, window_bounds = array<i64: 32, 64>}, {transform_indices = @transform_2, window_bounds = array<i64: 1, 64>}, {transform_indices = @transform_3, window_bounds = array<i64: 20, 64>}]} {
    %c0_i32 = arith.constant 0 : i32
    %0 = arith.cmpi eq, %arg2, %c0_i32 : i32
    %1 = arith.extui %0 : i1 to i32
    %c0_i32_0 = arith.constant 0 : i32
    %2 = arith.cmpi ne, %1, %c0_i32_0 : i32
    scf.if %2 {
      %cst_10 = arith.constant 0.000000e+00 : f32
      %12 = vector.broadcast %cst_10 : f32 to vector<20x64xf32>
      %c0_11 = arith.constant 0 : index
      %c0_12 = arith.constant 0 : index
      %13 = vector.load %arg7[%c0_11, %c0_12] : memref<20x64xf32, #tpu.memory_space<vmem>>, vector<20x64xf32>
      tpu.vector_store %arg7[%c0_11, %c0_12], %12 {strides = array<i32>} : memref<20x64xf32, #tpu.memory_space<vmem>>, vector<20x64xf32>,
    } else {
    }
    %c0 = arith.constant 0 : index
    %c0_1 = arith.constant 0 : index
    %3 = vector.load %arg3[%c0, %c0_1] : memref<20x32xf32, #tpu.memory_space<vmem>>, vector<20x32xf32>
    %c0_2 = arith.constant 0 : index
    %c0_3 = arith.constant 0 : index
    %4 = vector.load %arg7[%c0_2, %c0_3] : memref<20x64xf32, #tpu.memory_space<vmem>>, vector<20x64xf32>
    %c0_4 = arith.constant 0 : index
    %c0_5 = arith.constant 0 : index
    %5 = vector.load %arg4[%c0_4, %c0_5] : memref<32x64xf32, #tpu.memory_space<vmem>>, vector<32x64xf32>
    %cst = arith.constant dense<0.000000e+00> : vector<20x64xf32>
    %6 = tpu.matmul %3, %5, %cst {dimension_numbers = #tpu.dot_dimension_numbers<[1], [0], [0], [1], [0, 0, 1, 1], [], []>} : vector<20x32xf32>, vector<32x64xf32>, vector<20x64xf32> -> vector<20x64xf32>
    %7 = arith.addf %4, %6 : vector<20x64xf32>
    %c0_6 = arith.constant 0 : index
    %c0_7 = arith.constant 0 : index
    %8 = vector.load %arg7[%c0_6, %c0_7] : memref<20x64xf32, #tpu.memory_space<vmem>>, vector<20x64xf32>
    tpu.vector_store %arg7[%c0_6, %c0_7], %7 {strides = array<i32>} : memref<20x64xf32, #tpu.memory_space<vmem>>, vector<20x64xf32>,
    %c0_i32_8 = arith.constant 0 : i32
    %9 = arith.cmpi eq, %arg2, %c0_i32_8 : i32
    %10 = arith.extui %9 : i1 to i32
    %c0_i32_9 = arith.constant 0 : i32
    %11 = arith.cmpi ne, %10, %c0_i32_9 : i32
    scf.if %11 {
      %c0_10 = arith.constant 0 : index
      %c0_11 = arith.constant 0 : index
      %12 = vector.load %arg7[%c0_10, %c0_11] : memref<20x64xf32, #tpu.memory_space<vmem>>, vector<20x64xf32>
      %c0_12 = arith.constant 0 : index
      %c0_13 = arith.constant 0 : index
      %13 = vector.load %arg5[%c0_12, %c0_13] : memref<1x64xf32, #tpu.memory_space<vmem>>, vector<1x64xf32>
      %14 = vector.broadcast %13 : vector<1x64xf32> to vector<20x64xf32>
      %15 = arith.addf %12, %14 : vector<20x64xf32>
      %c0_14 = arith.constant 0 : index
      %c0_15 = arith.constant 0 : index
      %16 = vector.load %arg6[%c0_14, %c0_15] : memref<20x64xf32, #tpu.memory_space<vmem>>, vector<20x64xf32>
      tpu.vector_store %arg6[%c0_14, %c0_15], %15 {strides = array<i32>} : memref<20x64xf32, #tpu.memory_space<vmem>>, vector<20x64xf32>,
    } else {
    }
    return
  }
  func.func @transform_0(%arg0: i32, %arg1: i32, %arg2: i32) -> (i32, i32) {
    %c0_i32 = arith.constant 0 : i32
    return %arg0, %arg2 : i32, i32
  }
  func.func @transform_1(%arg0: i32, %arg1: i32, %arg2: i32) -> (i32, i32) {
    %c0_i32 = arith.constant 0 : i32
    return %arg2, %arg1 : i32, i32
  }
  func.func @transform_2(%arg0: i32, %arg1: i32, %arg2: i32) -> (i32, i32) {
    %c0_i32 = arith.constant 0 : i32
    %c0_i32_0 = arith.constant 0 : i32
    return %c0_i32, %arg1 : i32, i32
  }
  func.func @transform_3(%arg0: i32, %arg1: i32, %arg2: i32) -> (i32, i32) {
    %c0_i32 = arith.constant 0 : i32
    return %arg0, %arg1 : i32, i32
  }
}

module attributes {stable_mosaic.version = 11 : i64} {
  func.func @_linear_kernel(%arg0: i32, %arg1: i32, %arg2: i32, %arg3: memref<16x32xf32, #tpu.memory_space<vmem>>, %arg4: memref<32x64xf32, #tpu.memory_space<vmem>>, %arg5: memref<1x64xf32, #tpu.memory_space<vmem>>, %arg6: memref<16x64xf32, #tpu.memory_space<vmem>>, %arg7: memref<16x64xf32, #tpu.memory_space<vmem>>) attributes {dimension_semantics = [#tpu.dimension_semantics<parallel>, #tpu.dimension_semantics<parallel>, #tpu.dimension_semantics<arbitrary>], iteration_bounds = array<i64: 1, 1, 1>, scalar_prefetch = 0 : i64, scratch_operands = 1 : i64, tpu.core_type = #tpu.core_type<tc>, window_params = [{transform_indices = @transform_0, window_bounds = array<i64: 16, 32>}, {transform_indices = @transform_1, window_bounds = array<i64: 32, 64>}, {transform_indices = @transform_2, window_bounds = array<i64: 1, 64>}, {transform_indices = @transform_3, window_bounds = array<i64: 16, 64>}]} {
    %c0_i32 = arith.constant 0 : i32
    %0 = arith.cmpi eq, %arg2, %c0_i32 : i32
    %1 = arith.extui %0 : i1 to i32
    %c0_i32_0 = arith.constant 0 : i32
    %2 = arith.cmpi ne, %1, %c0_i32_0 : i32
    scf.if %2 {
      %cst_10 = arith.constant 0.000000e+00 : f32
      %12 = vector.broadcast %cst_10 : f32 to vector<16x64xf32>
      %c0_11 = arith.constant 0 : index
      %c0_12 = arith.constant 0 : index
      %13 = vector.load %arg7[%c0_11, %c0_12] : memref<16x64xf32, #tpu.memory_space<vmem>>, vector<16x64xf32>
      tpu.vector_store %arg7[%c0_11, %c0_12], %12 {strides = array<i32>} : memref<16x64xf32, #tpu.memory_space<vmem>>, vector<16x64xf32>,
    } else {
    }
    %c0 = arith.constant 0 : index
    %c0_1 = arith.constant 0 : index
    %3 = vector.load %arg3[%c0, %c0_1] : memref<16x32xf32, #tpu.memory_space<vmem>>, vector<16x32xf32>
    %c0_2 = arith.constant 0 : index
    %c0_3 = arith.constant 0 : index
    %4 = vector.load %arg7[%c0_2, %c0_3] : memref<16x64xf32, #tpu.memory_space<vmem>>, vector<16x64xf32>
    %c0_4 = arith.constant 0 : index
    %c0_5 = arith.constant 0 : index
    %5 = vector.load %arg4[%c0_4, %c0_5] : memref<32x64xf32, #tpu.memory_space<vmem>>, vector<32x64xf32>
    %cst = arith.constant dense<0.000000e+00> : vector<16x64xf32>
    %6 = tpu.matmul %3, %5, %cst {dimension_numbers = #tpu.dot_dimension_numbers<[1], [0], [0], [1], [0, 0, 1, 1], [], []>} : vector<16x32xf32>, vector<32x64xf32>, vector<16x64xf32> -> vector<16x64xf32>
    %7 = arith.addf %4, %6 : vector<16x64xf32>
    %c0_6 = arith.constant 0 : index
    %c0_7 = arith.constant 0 : index
    %8 = vector.load %arg7[%c0_6, %c0_7] : memref<16x64xf32, #tpu.memory_space<vmem>>, vector<16x64xf32>
    tpu.vector_store %arg7[%c0_6, %c0_7], %7 {strides = array<i32>} : memref<16x64xf32, #tpu.memory_space<vmem>>, vector<16x64xf32>,
    %c0_i32_8 = arith.constant 0 : i32
    %9 = arith.cmpi eq, %arg2, %c0_i32_8 : i32
    %10 = arith.extui %9 : i1 to i32
    %c0_i32_9 = arith.constant 0 : i32
    %11 = arith.cmpi ne, %10, %c0_i32_9 : i32
    scf.if %11 {
      %c0_10 = arith.constant 0 : index
      %c0_11 = arith.constant 0 : index
      %12 = vector.load %arg7[%c0_10, %c0_11] : memref<16x64xf32, #tpu.memory_space<vmem>>, vector<16x64xf32>
      %c0_12 = arith.constant 0 : index
      %c0_13 = arith.constant 0 : index
      %13 = vector.load %arg5[%c0_12, %c0_13] : memref<1x64xf32, #tpu.memory_space<vmem>>, vector<1x64xf32>
      %14 = vector.broadcast %13 : vector<1x64xf32> to vector<16x64xf32>
      %15 = arith.addf %12, %14 : vector<16x64xf32>
      %cst_14 = arith.constant 0.000000e+00 : f32
      %16 = vector.broadcast %cst_14 : f32 to vector<16x64xf32>
      %17 = arith.maximumf %15, %16 : vector<16x64xf32>
      %c0_15 = arith.constant 0 : index
      %c0_16 = arith.constant 0 : index
      %18 = vector.load %arg6[%c0_15, %c0_16] : memref<16x64xf32, #tpu.memory_space<vmem>>, vector<16x64xf32>
      tpu.vector_store %arg6[%c0_15, %c0_16], %17 {strides = array<i32>} : memref<16x64xf32, #tpu.memory_space<vmem>>, vector<16x64xf32>,
    } else {
    }
    return
  }
  func.func @transform_0(%arg0: i32, %arg1: i32, %arg2: i32) -> (i32, i32) {
    %c0_i32 = arith.constant 0 : i32
    return %arg0, %arg2 : i32, i32
  }
  func.func @transform_1(%arg0: i32, %arg1: i32, %arg2: i32) -> (i32, i32) {
    %c0_i32 = arith.constant 0 : i32
    return %arg2, %arg1 : i32, i32
  }
  func.func @transform_2(%arg0: i32, %arg1: i32, %arg2: i32) -> (i32, i32) {
    %c0_i32 = arith.constant 0 : i32
    %c0_i32_0 = arith.constant 0 : i32
    return %c0_i32, %arg1 : i32, i32
  }
  func.func @transform_3(%arg0: i32, %arg1: i32, %arg2: i32) -> (i32, i32) {
    %c0_i32 = arith.constant 0 : i32
    return %arg0, %arg1 : i32, i32
  }
}

module attributes {stable_mosaic.version = 11 : i64} {
  func.func @_cross_attn_kernel(%arg0: i32, %arg1: memref<1x8x32xf32, #tpu.memory_space<vmem>>, %arg2: memref<1x10x64xf32, #tpu.memory_space<vmem>>, %arg3: memref<1x1x10xi32, #tpu.memory_space<vmem>>, %arg4: memref<1x8x32xf32, #tpu.memory_space<vmem>>) attributes {dimension_semantics = [#tpu.dimension_semantics<parallel>], iteration_bounds = array<i64: 2>, scalar_prefetch = 0 : i64, scratch_operands = 0 : i64, tpu.core_type = #tpu.core_type<tc>, window_params = [{transform_indices = @transform_0, window_bounds = array<i64: 1, 8, 32>}, {transform_indices = @transform_1, window_bounds = array<i64: 1, 10, 64>}, {transform_indices = @transform_2, window_bounds = array<i64: 1, 1, 10>}, {transform_indices = @transform_3, window_bounds = array<i64: 1, 8, 32>}]} {
    %c0 = arith.constant 0 : index
    %c0_0 = arith.constant 0 : index
    %c0_1 = arith.constant 0 : index
    %0 = vector.load %arg2[%c0, %c0_0, %c0_1] : memref<1x10x64xf32, #tpu.memory_space<vmem>>, vector<1x10x64xf32>
    %1 = vector.shape_cast %0 : vector<1x10x64xf32> to vector<10x64xf32>
    %c0_2 = arith.constant 0 : index
    %c0_3 = arith.constant 0 : index
    %c0_4 = arith.constant 0 : index
    %2 = vector.load %arg1[%c0_2, %c0_3, %c0_4] : memref<1x8x32xf32, #tpu.memory_space<vmem>>, vector<1x8x32xf32>
    %3 = vector.shape_cast %2 : vector<1x8x32xf32> to vector<8x32xf32>
    %4 = vector.extract_strided_slice %1 {offsets = [0, 0], sizes = [10, 32], strides = [1, 1]} : vector<10x64xf32> to vector<10x32xf32>
    %5 = vector.extract_strided_slice %1 {offsets = [0, 32], sizes = [10, 32], strides = [1, 1]} : vector<10x64xf32> to vector<10x32xf32>
    %c0_5 = arith.constant 0 : index
    %c0_6 = arith.constant 0 : index
    %c0_7 = arith.constant 0 : index
    %6 = vector.load %arg3[%c0_5, %c0_6, %c0_7] : memref<1x1x10xi32, #tpu.memory_space<vmem>>, vector<1x1x10xi32>
    %7 = vector.shape_cast %6 : vector<1x1x10xi32> to vector<1x10xi32>
    %c0_i32 = arith.constant 0 : i32
    %8 = vector.broadcast %c0_i32 : i32 to vector<1x10xi32>
    %9 = arith.cmpi ne, %7, %8 : vector<1x10xi32>
    %10 = vector.extract_strided_slice %3 {offsets = [0, 0], sizes = [8, 8], strides = [1, 1]} : vector<8x32xf32> to vector<8x8xf32>
    %11 = vector.extract_strided_slice %4 {offsets = [0, 0], sizes = [10, 8], strides = [1, 1]} : vector<10x32xf32> to vector<10x8xf32>
    %cst = arith.constant dense<0.000000e+00> : vector<8x10xf32>
    %12 = tpu.matmul %10, %11, %cst {dimension_numbers = #tpu.dot_dimension_numbers<[1], [1], [0], [0], [0, 0, 1, 0], [], []>} : vector<8x8xf32>, vector<10x8xf32>, vector<8x10xf32> -> vector<8x10xf32>
    %cst_8 = arith.constant 0.353553385 : f32
    %13 = vector.broadcast %cst_8 : f32 to vector<8x10xf32>
    %14 = arith.mulf %12, %13 : vector<8x10xf32>
    %cst_9 = arith.constant -1.000000e+30 : f32
    %15 = vector.shape_cast %9 : vector<1x10xi1> to vector<1x10xi1>
    %16 = vector.broadcast %15 : vector<1x10xi1> to vector<8x10xi1>
    %17 = vector.broadcast %cst_9 : f32 to vector<8x10xf32>
    %18 = arith.select %16, %14, %17 : vector<8x10xi1>, vector<8x10xf32>
    %cst_10 = arith.constant dense<0xFF800000> : vector<8xf32>
    %19 = vector.multi_reduction <maximumf>, %18, %cst_10 [1] : vector<8x10xf32> to vector<8xf32>
    %20 = vector.shape_cast %19 : vector<8xf32> to vector<8x1xf32>
    %21 = vector.broadcast %20 : vector<8x1xf32> to vector<8x10xf32>
    %22 = arith.subf %18, %21 : vector<8x10xf32>
    %23 = math.exp %22 : vector<8x10xf32>
    %cst_11 = arith.constant dense<0.000000e+00> : vector<8xf32>
    %24 = vector.multi_reduction <add>, %23, %cst_11 [1] : vector<8x10xf32> to vector<8xf32>
    %25 = vector.shape_cast %24 : vector<8xf32> to vector<8x1xf32>
    %26 = vector.extract_strided_slice %5 {offsets = [0, 0], sizes = [10, 8], strides = [1, 1]} : vector<10x32xf32> to vector<10x8xf32>
    %cst_12 = arith.constant dense<0.000000e+00> : vector<8x8xf32>
    %27 = tpu.matmul %23, %26, %cst_12 {dimension_numbers = #tpu.dot_dimension_numbers<[1], [0], [0], [1], [0, 0, 1, 1], [], []>} : vector<8x10xf32>, vector<10x8xf32>, vector<8x8xf32> -> vector<8x8xf32>
    %28 = tpu.reciprocal %25 {approx = true} : vector<8x1xf32> -> vector<8x1xf32>
    %29 = vector.broadcast %28 : vector<8x1xf32> to vector<8x8xf32>
    %30 = arith.mulf %27, %29 : vector<8x8xf32>
    %31 = vector.extract_strided_slice %3 {offsets = [0, 8], sizes = [8, 8], strides = [1, 1]} : vector<8x32xf32> to vector<8x8xf32>
    %32 = vector.extract_strided_slice %4 {offsets = [0, 8], sizes = [10, 8], strides = [1, 1]} : vector<10x32xf32> to vector<10x8xf32>
    %cst_13 = arith.constant dense<0.000000e+00> : vector<8x10xf32>
    %33 = tpu.matmul %31, %32, %cst_13 {dimension_numbers = #tpu.dot_dimension_numbers<[1], [1], [0], [0], [0, 0, 1, 0], [], []>} : vector<8x8xf32>, vector<10x8xf32>, vector<8x10xf32> -> vector<8x10xf32>
    %cst_14 = arith.constant 0.353553385 : f32
    %34 = vector.broadcast %cst_14 : f32 to vector<8x10xf32>
    %35 = arith.mulf %33, %34 : vector<8x10xf32>
    %cst_15 = arith.constant -1.000000e+30 : f32
    %36 = vector.shape_cast %9 : vector<1x10xi1> to vector<1x10xi1>
    %37 = vector.broadcast %36 : vector<1x10xi1> to vector<8x10xi1>
    %38 = vector.broadcast %cst_15 : f32 to vector<8x10xf32>
    %39 = arith.select %37, %35, %38 : vector<8x10xi1>, vector<8x10xf32>
    %cst_16 = arith.constant dense<0xFF800000> : vector<8xf32>
    %40 = vector.multi_reduction <maximumf>, %39, %cst_16 [1] : vector<8x10xf32> to vector<8xf32>
    %41 = vector.shape_cast %40 : vector<8xf32> to vector<8x1xf32>
    %42 = vector.broadcast %41 : vector<8x1xf32> to vector<8x10xf32>
    %43 = arith.subf %39, %42 : vector<8x10xf32>
    %44 = math.exp %43 : vector<8x10xf32>
    %cst_17 = arith.constant dense<0.000000e+00> : vector<8xf32>
    %45 = vector.multi_reduction <add>, %44, %cst_17 [1] : vector<8x10xf32> to vector<8xf32>
    %46 = vector.shape_cast %45 : vector<8xf32> to vector<8x1xf32>
    %47 = vector.extract_strided_slice %5 {offsets = [0, 8], sizes = [10, 8], strides = [1, 1]} : vector<10x32xf32> to vector<10x8xf32>
    %cst_18 = arith.constant dense<0.000000e+00> : vector<8x8xf32>
    %48 = tpu.matmul %44, %47, %cst_18 {dimension_numbers = #tpu.dot_dimension_numbers<[1], [0], [0], [1], [0, 0, 1, 1], [], []>} : vector<8x10xf32>, vector<10x8xf32>, vector<8x8xf32> -> vector<8x8xf32>
    %49 = tpu.reciprocal %46 {approx = true} : vector<8x1xf32> -> vector<8x1xf32>
    %50 = vector.broadcast %49 : vector<8x1xf32> to vector<8x8xf32>
    %51 = arith.mulf %48, %50 : vector<8x8xf32>
    %52 = vector.extract_strided_slice %3 {offsets = [0, 16], sizes = [8, 8], strides = [1, 1]} : vector<8x32xf32> to vector<8x8xf32>
    %53 = vector.extract_strided_slice %4 {offsets = [0, 16], sizes = [10, 8], strides = [1, 1]} : vector<10x32xf32> to vector<10x8xf32>
    %cst_19 = arith.constant dense<0.000000e+00> : vector<8x10xf32>
    %54 = tpu.matmul %52, %53, %cst_19 {dimension_numbers = #tpu.dot_dimension_numbers<[1], [1], [0], [0], [0, 0, 1, 0], [], []>} : vector<8x8xf32>, vector<10x8xf32>, vector<8x10xf32> -> vector<8x10xf32>
    %cst_20 = arith.constant 0.353553385 : f32
    %55 = vector.broadcast %cst_20 : f32 to vector<8x10xf32>
    %56 = arith.mulf %54, %55 : vector<8x10xf32>
    %cst_21 = arith.constant -1.000000e+30 : f32
    %57 = vector.shape_cast %9 : vector<1x10xi1> to vector<1x10xi1>
    %58 = vector.broadcast %57 : vector<1x10xi1> to vector<8x10xi1>
    %59 = vector.broadcast %cst_21 : f32 to vector<8x10xf32>
    %60 = arith.select %58, %56, %59 : vector<8x10xi1>, vector<8x10xf32>
    %cst_22 = arith.constant dense<0xFF800000> : vector<8xf32>
    %61 = vector.multi_reduction <maximumf>, %60, %cst_22 [1] : vector<8x10xf32> to vector<8xf32>
    %62 = vector.shape_cast %61 : vector<8xf32> to vector<8x1xf32>
    %63 = vector.broadcast %62 : vector<8x1xf32> to vector<8x10xf32>
    %64 = arith.subf %60, %63 : vector<8x10xf32>
    %65 = math.exp %64 : vector<8x10xf32>
    %cst_23 = arith.constant dense<0.000000e+00> : vector<8xf32>
    %66 = vector.multi_reduction <add>, %65, %cst_23 [1] : vector<8x10xf32> to vector<8xf32>
    %67 = vector.shape_cast %66 : vector<8xf32> to vector<8x1xf32>
    %68 = vector.extract_strided_slice %5 {offsets = [0, 16], sizes = [10, 8], strides = [1, 1]} : vector<10x32xf32> to vector<10x8xf32>
    %cst_24 = arith.constant dense<0.000000e+00> : vector<8x8xf32>
    %69 = tpu.matmul %65, %68, %cst_24 {dimension_numbers = #tpu.dot_dimension_numbers<[1], [0], [0], [1], [0, 0, 1, 1], [], []>} : vector<8x10xf32>, vector<10x8xf32>, vector<8x8xf32> -> vector<8x8xf32>
    %70 = tpu.reciprocal %67 {approx = true} : vector<8x1xf32> -> vector<8x1xf32>
    %71 = vector.broadcast %70 : vector<8x1xf32> to vector<8x8xf32>
    %72 = arith.mulf %69, %71 : vector<8x8xf32>
    %73 = vector.extract_strided_slice %3 {offsets = [0, 24], sizes = [8, 8], strides = [1, 1]} : vector<8x32xf32> to vector<8x8xf32>
    %74 = vector.extract_strided_slice %4 {offsets = [0, 24], sizes = [10, 8], strides = [1, 1]} : vector<10x32xf32> to vector<10x8xf32>
    %cst_25 = arith.constant dense<0.000000e+00> : vector<8x10xf32>
    %75 = tpu.matmul %73, %74, %cst_25 {dimension_numbers = #tpu.dot_dimension_numbers<[1], [1], [0], [0], [0, 0, 1, 0], [], []>} : vector<8x8xf32>, vector<10x8xf32>, vector<8x10xf32> -> vector<8x10xf32>
    %cst_26 = arith.constant 0.353553385 : f32
    %76 = vector.broadcast %cst_26 : f32 to vector<8x10xf32>
    %77 = arith.mulf %75, %76 : vector<8x10xf32>
    %cst_27 = arith.constant -1.000000e+30 : f32
    %78 = vector.shape_cast %9 : vector<1x10xi1> to vector<1x10xi1>
    %79 = vector.broadcast %78 : vector<1x10xi1> to vector<8x10xi1>
    %80 = vector.broadcast %cst_27 : f32 to vector<8x10xf32>
    %81 = arith.select %79, %77, %80 : vector<8x10xi1>, vector<8x10xf32>
    %cst_28 = arith.constant dense<0xFF800000> : vector<8xf32>
    %82 = vector.multi_reduction <maximumf>, %81, %cst_28 [1] : vector<8x10xf32> to vector<8xf32>
    %83 = vector.shape_cast %82 : vector<8xf32> to vector<8x1xf32>
    %84 = vector.broadcast %83 : vector<8x1xf32> to vector<8x10xf32>
    %85 = arith.subf %81, %84 : vector<8x10xf32>
    %86 = math.exp %85 : vector<8x10xf32>
    %cst_29 = arith.constant dense<0.000000e+00> : vector<8xf32>
    %87 = vector.multi_reduction <add>, %86, %cst_29 [1] : vector<8x10xf32> to vector<8xf32>
    %88 = vector.shape_cast %87 : vector<8xf32> to vector<8x1xf32>
    %89 = vector.extract_strided_slice %5 {offsets = [0, 24], sizes = [10, 8], strides = [1, 1]} : vector<10x32xf32> to vector<10x8xf32>
    %cst_30 = arith.constant dense<0.000000e+00> : vector<8x8xf32>
    %90 = tpu.matmul %86, %89, %cst_30 {dimension_numbers = #tpu.dot_dimension_numbers<[1], [0], [0], [1], [0, 0, 1, 1], [], []>} : vector<8x10xf32>, vector<10x8xf32>, vector<8x8xf32> -> vector<8x8xf32>
    %91 = tpu.reciprocal %88 {approx = true} : vector<8x1xf32> -> vector<8x1xf32>
    %92 = vector.broadcast %91 : vector<8x1xf32> to vector<8x8xf32>
    %93 = arith.mulf %90, %92 : vector<8x8xf32>
    %94 = tpu.concatenate %30, %51, %72, %93 in 1 : vector<8x8xf32>, vector<8x8xf32>, vector<8x8xf32>, vector<8x8xf32> -> vector<8x32xf32>
    %c0_31 = arith.constant 0 : index
    %c0_32 = arith.constant 0 : index
    %c0_33 = arith.constant 0 : index
    %95 = vector.load %arg4[%c0_31, %c0_32, %c0_33] : memref<1x8x32xf32, #tpu.memory_space<vmem>>, vector<1x8x32xf32>
    %96 = vector.shape_cast %95 : vector<1x8x32xf32> to vector<8x32xf32>
    %97 = vector.shape_cast %94 : vector<8x32xf32> to vector<1x8x32xf32>
    tpu.vector_store %arg4[%c0_31, %c0_32, %c0_33], %97 {strides = array<i32>} : memref<1x8x32xf32, #tpu.memory_space<vmem>>, vector<1x8x32xf32>,
    return
  }
  func.func @transform_0(%arg0: i32) -> (i32, i32, i32) {
    %c0_i32 = arith.constant 0 : i32
    %c0_i32_0 = arith.constant 0 : i32
    %c0_i32_1 = arith.constant 0 : i32
    return %arg0, %c0_i32, %c0_i32_0 : i32, i32, i32
  }
  func.func @transform_1(%arg0: i32) -> (i32, i32, i32) {
    %c0_i32 = arith.constant 0 : i32
    %c0_i32_0 = arith.constant 0 : i32
    %c0_i32_1 = arith.constant 0 : i32
    return %arg0, %c0_i32, %c0_i32_0 : i32, i32, i32
  }
  func.func @transform_2(%arg0: i32) -> (i32, i32, i32) {
    %c0_i32 = arith.constant 0 : i32
    %c0_i32_0 = arith.constant 0 : i32
    %c0_i32_1 = arith.constant 0 : i32
    return %arg0, %c0_i32, %c0_i32_0 : i32, i32, i32
  }
  func.func @transform_3(%arg0: i32) -> (i32, i32, i32) {
    %c0_i32 = arith.constant 0 : i32
    %c0_i32_0 = arith.constant 0 : i32
    %c0_i32_1 = arith.constant 0 : i32
    return %arg0, %c0_i32, %c0_i32_0 : i32, i32, i32
  }
}

module attributes {stable_mosaic.version = 11 : i64} {
  func.func @_linear_kernel(%arg0: i32, %arg1: i32, %arg2: i32, %arg3: memref<16x64xf32, #tpu.memory_space<vmem>>, %arg4: memref<64x32xf32, #tpu.memory_space<vmem>>, %arg5: memref<1x32xf32, #tpu.memory_space<vmem>>, %arg6: memref<16x32xf32, #tpu.memory_space<vmem>>, %arg7: memref<1x32xf32, #tpu.memory_space<vmem>>, %arg8: memref<1x32xf32, #tpu.memory_space<vmem>>, %arg9: memref<16x32xf32, #tpu.memory_space<vmem>>, %arg10: memref<16x32xf32, #tpu.memory_space<vmem>>) attributes {dimension_semantics = [#tpu.dimension_semantics<parallel>, #tpu.dimension_semantics<parallel>, #tpu.dimension_semantics<arbitrary>], iteration_bounds = array<i64: 1, 1, 1>, scalar_prefetch = 0 : i64, scratch_operands = 1 : i64, tpu.core_type = #tpu.core_type<tc>, window_params = [{transform_indices = @transform_0, window_bounds = array<i64: 16, 64>}, {transform_indices = @transform_1, window_bounds = array<i64: 64, 32>}, {transform_indices = @transform_2, window_bounds = array<i64: 1, 32>}, {transform_indices = @transform_3, window_bounds = array<i64: 16, 32>}, {transform_indices = @transform_4, window_bounds = array<i64: 1, 32>}, {transform_indices = @transform_5, window_bounds = array<i64: 1, 32>}, {transform_indices = @transform_6, window_bounds = array<i64: 16, 32>}]} {
    %c0_i32 = arith.constant 0 : i32
    %0 = arith.cmpi eq, %arg2, %c0_i32 : i32
    %1 = arith.extui %0 : i1 to i32
    %c0_i32_0 = arith.constant 0 : i32
    %2 = arith.cmpi ne, %1, %c0_i32_0 : i32
    scf.if %2 {
      %cst_10 = arith.constant 0.000000e+00 : f32
      %12 = vector.broadcast %cst_10 : f32 to vector<16x32xf32>
      %c0_11 = arith.constant 0 : index
      %c0_12 = arith.constant 0 : index
      %13 = vector.load %arg10[%c0_11, %c0_12] : memref<16x32xf32, #tpu.memory_space<vmem>>, vector<16x32xf32>
      tpu.vector_store %arg10[%c0_11, %c0_12], %12 {strides = array<i32>} : memref<16x32xf32, #tpu.memory_space<vmem>>, vector<16x32xf32>,
    } else {
    }
    %c0 = arith.constant 0 : index
    %c0_1 = arith.constant 0 : index
    %3 = vector.load %arg3[%c0, %c0_1] : memref<16x64xf32, #tpu.memory_space<vmem>>, vector<16x64xf32>
    %c0_2 = arith.constant 0 : index
    %c0_3 = arith.constant 0 : index
    %4 = vector.load %arg10[%c0_2, %c0_3] : memref<16x32xf32, #tpu.memory_space<vmem>>, vector<16x32xf32>
    %c0_4 = arith.constant 0 : index
    %c0_5 = arith.constant 0 : index
    %5 = vector.load %arg4[%c0_4, %c0_5] : memref<64x32xf32, #tpu.memory_space<vmem>>, vector<64x32xf32>
    %cst = arith.constant dense<0.000000e+00> : vector<16x32xf32>
    %6 = tpu.matmul %3, %5, %cst {dimension_numbers = #tpu.dot_dimension_numbers<[1], [0], [0], [1], [0, 0, 1, 1], [], []>} : vector<16x64xf32>, vector<64x32xf32>, vector<16x32xf32> -> vector<16x32xf32>
    %7 = arith.addf %4, %6 : vector<16x32xf32>
    %c0_6 = arith.constant 0 : index
    %c0_7 = arith.constant 0 : index
    %8 = vector.load %arg10[%c0_6, %c0_7] : memref<16x32xf32, #tpu.memory_space<vmem>>, vector<16x32xf32>
    tpu.vector_store %arg10[%c0_6, %c0_7], %7 {strides = array<i32>} : memref<16x32xf32, #tpu.memory_space<vmem>>, vector<16x32xf32>,
    %c0_i32_8 = arith.constant 0 : i32
    %9 = arith.cmpi eq, %arg2, %c0_i32_8 : i32
    %10 = arith.extui %9 : i1 to i32
    %c0_i32_9 = arith.constant 0 : i32
    %11 = arith.cmpi ne, %10, %c0_i32_9 : i32
    scf.if %11 {
      %c0_10 = arith.constant 0 : index
      %c0_11 = arith.constant 0 : index
      %12 = vector.load %arg10[%c0_10, %c0_11] : memref<16x32xf32, #tpu.memory_space<vmem>>, vector<16x32xf32>
      %c0_12 = arith.constant 0 : index
      %c0_13 = arith.constant 0 : index
      %13 = vector.load %arg5[%c0_12, %c0_13] : memref<1x32xf32, #tpu.memory_space<vmem>>, vector<1x32xf32>
      %14 = vector.broadcast %13 : vector<1x32xf32> to vector<16x32xf32>
      %15 = arith.addf %12, %14 : vector<16x32xf32>
      %c0_14 = arith.constant 0 : index
      %c0_15 = arith.constant 0 : index
      %16 = vector.load %arg6[%c0_14, %c0_15] : memref<16x32xf32, #tpu.memory_space<vmem>>, vector<16x32xf32>
      %17 = arith.addf %15, %16 : vector<16x32xf32>
      %cst_16 = arith.constant dense<0.000000e+00> : vector<16xf32>
      %18 = vector.multi_reduction <add>, %17, %cst_16 [1] : vector<16x32xf32> to vector<16xf32>
      %19 = vector.shape_cast %18 : vector<16xf32> to vector<16x1xf32>
      %cst_17 = arith.constant 3.200000e+01 : f32
      %20 = vector.broadcast %cst_17 : f32 to vector<16x1xf32>
      %21 = arith.divf %19, %20 : vector<16x1xf32>
      %22 = vector.broadcast %21 : vector<16x1xf32> to vector<16x32xf32>
      %23 = arith.subf %17, %22 : vector<16x32xf32>
      %24 = arith.mulf %23, %23 : vector<16x32xf32>
      %cst_18 = arith.constant dense<0.000000e+00> : vector<16xf32>
      %25 = vector.multi_reduction <add>, %24, %cst_18 [1] : vector<16x32xf32> to vector<16xf32>
      %26 = vector.shape_cast %25 : vector<16xf32> to vector<16x1xf32>
      %cst_19 = arith.constant 3.200000e+01 : f32
      %27 = vector.broadcast %cst_19 : f32 to vector<16x1xf32>
      %28 = arith.divf %26, %27 : vector<16x1xf32>
      %cst_20 = arith.constant 9.99999974E-6 : f32
      %29 = vector.broadcast %cst_20 : f32 to vector<16x1xf32>
      %30 = arith.addf %28, %29 : vector<16x1xf32>
      %31 = math.rsqrt %30 : vector<16x1xf32>
      %32 = vector.broadcast %31 : vector<16x1xf32> to vector<16x32xf32>
      %33 = arith.mulf %23, %32 : vector<16x32xf32>
      %c0_21 = arith.constant 0 : index
      %c0_22 = arith.constant 0 : index
      %34 = vector.load %arg7[%c0_21, %c0_22] : memref<1x32xf32, #tpu.memory_space<vmem>>, vector<1x32xf32>
      %35 = vector.broadcast %34 : vector<1x32xf32> to vector<16x32xf32>
      %36 = arith.mulf %33, %35 : vector<16x32xf32>
      %c0_23 = arith.constant 0 : index
      %c0_24 = arith.constant 0 : index
      %37 = vector.load %arg8[%c0_23, %c0_24] : memref<1x32xf32, #tpu.memory_space<vmem>>, vector<1x32xf32>
      %38 = vector.broadcast %37 : vector<1x32xf32> to vector<16x32xf32>
      %39 = arith.addf %36, %38 : vector<16x32xf32>
      %c0_25 = arith.constant 0 : index
      %c0_26 = arith.constant 0 : index
      %40 = vector.load %arg9[%c0_25, %c0_26] : memref<16x32xf32, #tpu.memory_space<vmem>>, vector<16x32xf32>
      tpu.vector_store %arg9[%c0_25, %c0_26], %39 {strides = array<i32>} : memref<16x32xf32, #tpu.memory_space<vmem>>, vector<16x32xf32>,
    } else {
    }
    return
  }
  func.func @transform_0(%arg0: i32, %arg1: i32, %arg2: i32) -> (i32, i32) {
    %c0_i32 = arith.constant 0 : i32
    return %arg0, %arg2 : i32, i32
  }
  func.func @transform_1(%arg0: i32, %arg1: i32, %arg2: i32) -> (i32, i32) {
    %c0_i32 = arith.constant 0 : i32
    return %arg2, %arg1 : i32, i32
  }
  func.func @transform_2(%arg0: i32, %arg1: i32, %arg2: i32) -> (i32, i32) {
    %c0_i32 = arith.constant 0 : i32
    %c0_i32_0 = arith.constant 0 : i32
    return %c0_i32, %arg1 : i32, i32
  }
  func.func @transform_3(%arg0: i32, %arg1: i32, %arg2: i32) -> (i32, i32) {
    %c0_i32 = arith.constant 0 : i32
    return %arg0, %arg1 : i32, i32
  }
  func.func @transform_4(%arg0: i32, %arg1: i32, %arg2: i32) -> (i32, i32) {
    %c0_i32 = arith.constant 0 : i32
    %c0_i32_0 = arith.constant 0 : i32
    return %c0_i32, %arg1 : i32, i32
  }
  func.func @transform_5(%arg0: i32, %arg1: i32, %arg2: i32) -> (i32, i32) {
    %c0_i32 = arith.constant 0 : i32
    %c0_i32_0 = arith.constant 0 : i32
    return %c0_i32, %arg1 : i32, i32
  }
  func.func @transform_6(%arg0: i32, %arg1: i32, %arg2: i32) -> (i32, i32) {
    %c0_i32 = arith.constant 0 : i32
    return %arg0, %arg1 : i32, i32
  }
}

module attributes {stable_mosaic.version = 11 : i64} {
  func.func @_linear_kernel(%arg0: i32, %arg1: i32, %arg2: i32, %arg3: memref<16x32xf32, #tpu.memory_space<vmem>>, %arg4: memref<32x50xf32, #tpu.memory_space<vmem>>, %arg5: memref<1x50xf32, #tpu.memory_space<vmem>>, %arg6: memref<16x32xf32, #tpu.memory_space<vmem>>, %arg7: memref<16x50xf32, #tpu.memory_space<vmem>>, %arg8: memref<16x50xf32, #tpu.memory_space<vmem>>) attributes {dimension_semantics = [#tpu.dimension_semantics<parallel>, #tpu.dimension_semantics<parallel>, #tpu.dimension_semantics<arbitrary>], iteration_bounds = array<i64: 1, 1, 1>, scalar_prefetch = 0 : i64, scratch_operands = 1 : i64, tpu.core_type = #tpu.core_type<tc>, window_params = [{transform_indices = @transform_0, window_bounds = array<i64: 16, 32>}, {transform_indices = @transform_1, window_bounds = array<i64: 32, 50>}, {transform_indices = @transform_2, window_bounds = array<i64: 1, 50>}, {transform_indices = @transform_3, window_bounds = array<i64: 16, 32>}, {transform_indices = @transform_4, window_bounds = array<i64: 16, 50>}]} {
    %c0_i32 = arith.constant 0 : i32
    %0 = arith.cmpi eq, %arg2, %c0_i32 : i32
    %1 = arith.extui %0 : i1 to i32
    %c0_i32_0 = arith.constant 0 : i32
    %2 = arith.cmpi ne, %1, %c0_i32_0 : i32
    scf.if %2 {
      %cst_13 = arith.constant 0.000000e+00 : f32
      %16 = vector.broadcast %cst_13 : f32 to vector<16x50xf32>
      %c0_14 = arith.constant 0 : index
      %c0_15 = arith.constant 0 : index
      %17 = vector.load %arg8[%c0_14, %c0_15] : memref<16x50xf32, #tpu.memory_space<vmem>>, vector<16x50xf32>
      tpu.vector_store %arg8[%c0_14, %c0_15], %16 {strides = array<i32>} : memref<16x50xf32, #tpu.memory_space<vmem>>, vector<16x50xf32>,
    } else {
    }
    %c0 = arith.constant 0 : index
    %c0_1 = arith.constant 0 : index
    %3 = vector.load %arg3[%c0, %c0_1] : memref<16x32xf32, #tpu.memory_space<vmem>>, vector<16x32xf32>
    %c0_2 = arith.constant 0 : index
    %c0_3 = arith.constant 0 : index
    %4 = vector.load %arg6[%c0_2, %c0_3] : memref<16x32xf32, #tpu.memory_space<vmem>>, vector<16x32xf32>
    %cst = arith.constant 1.000000e-03 : f32
    %5 = vector.broadcast %cst : f32 to vector<16x32xf32>
    %6 = arith.mulf %4, %5 : vector<16x32xf32>
    %7 = arith.addf %3, %6 : vector<16x32xf32>
    %c0_4 = arith.constant 0 : index
    %c0_5 = arith.constant 0 : index
    %8 = vector.load %arg8[%c0_4, %c0_5] : memref<16x50xf32, #tpu.memory_space<vmem>>, vector<16x50xf32>
    %c0_6 = arith.constant 0 : index
    %c0_7 = arith.constant 0 : index
    %9 = vector.load %arg4[%c0_6, %c0_7] : memref<32x50xf32, #tpu.memory_space<vmem>>, vector<32x50xf32>
    %cst_8 = arith.constant dense<0.000000e+00> : vector<16x50xf32>
    %10 = tpu.matmul %7, %9, %cst_8 {dimension_numbers = #tpu.dot_dimension_numbers<[1], [0], [0], [1], [0, 0, 1, 1], [], []>} : vector<16x32xf32>, vector<32x50xf32>, vector<16x50xf32> -> vector<16x50xf32>
    %11 = arith.addf %8, %10 : vector<16x50xf32>
    %c0_9 = arith.constant 0 : index
    %c0_10 = arith.constant 0 : index
    %12 = vector.load %arg8[%c0_9, %c0_10] : memref<16x50xf32, #tpu.memory_space<vmem>>, vector<16x50xf32>
    tpu.vector_store %arg8[%c0_9, %c0_10], %11 {strides = array<i32>} : memref<16x50xf32, #tpu.memory_space<vmem>>, vector<16x50xf32>,
    %c0_i32_11 = arith.constant 0 : i32
    %13 = arith.cmpi eq, %arg2, %c0_i32_11 : i32
    %14 = arith.extui %13 : i1 to i32
    %c0_i32_12 = arith.constant 0 : i32
    %15 = arith.cmpi ne, %14, %c0_i32_12 : i32
    scf.if %15 {
      %c0_13 = arith.constant 0 : index
      %c0_14 = arith.constant 0 : index
      %16 = vector.load %arg8[%c0_13, %c0_14] : memref<16x50xf32, #tpu.memory_space<vmem>>, vector<16x50xf32>
      %c0_15 = arith.constant 0 : index
      %c0_16 = arith.constant 0 : index
      %17 = vector.load %arg5[%c0_15, %c0_16] : memref<1x50xf32, #tpu.memory_space<vmem>>, vector<1x50xf32>
      %18 = vector.broadcast %17 : vector<1x50xf32> to vector<16x50xf32>
      %19 = arith.addf %16, %18 : vector<16x50xf32>
      %c0_17 = arith.constant 0 : index
      %c0_18 = arith.constant 0 : index
      %20 = vector.load %arg7[%c0_17, %c0_18] : memref<16x50xf32, #tpu.memory_space<vmem>>, vector<16x50xf32>
      tpu.vector_store %arg7[%c0_17, %c0_18], %19 {strides = array<i32>} : memref<16x50xf32, #tpu.memory_space<vmem>>, vector<16x50xf32>,
    } else {
    }
    return
  }
  func.func @transform_0(%arg0: i32, %arg1: i32, %arg2: i32) -> (i32, i32) {
    %c0_i32 = arith.constant 0 : i32
    return %arg0, %arg2 : i32, i32
  }
  func.func @transform_1(%arg0: i32, %arg1: i32, %arg2: i32) -> (i32, i32) {
    %c0_i32 = arith.constant 0 : i32
    return %arg2, %arg1 : i32, i32
  }
  func.func @transform_2(%arg0: i32, %arg1: i32, %arg2: i32) -> (i32, i32) {
    %c0_i32 = arith.constant 0 : i32
    %c0_i32_0 = arith.constant 0 : i32
    return %c0_i32, %arg1 : i32, i32
  }
  func.func @transform_3(%arg0: i32, %arg1: i32, %arg2: i32) -> (i32, i32) {
    %c0_i32 = arith.constant 0 : i32
    return %arg0, %arg2 : i32, i32
  }
  func.func @transform_4(%arg0: i32, %arg1: i32, %arg2: i32) -> (i32, i32) {
    %c0_i32 = arith.constant 0 : i32
    return %arg0, %arg1 : i32, i32
  }
}

</mosaic_0001>

<llo_original>
// kernel: decoder_forward.19
$region0: #{decoder_forward.19}
  #allocation0 [shape = 'u32[]', space=smem, size = 0x4, offset = 0x4, fixed_abs, tag = 'smem constant byte address 0x4 - core index']
  #allocation1 [shape = 'u32[144,128]{1,0:T(1,128)}', space=vmem, size = 0x12000, scoped, tag = 'internal scratch']
  #allocation2 [shape = 'f32[16,96]{1,0:T(8,128)}', space=vmem, size = 0x2000, scoped, tag = 'scratch operand']
  %s0 = inlined_call_operand.vmem [shape: f32[16,32], index: 0, kind: input, shape index: {}]
  %s1 = inlined_call_operand.vmem [shape: f32[32,96], index: 1, kind: input, shape index: {}]
  %s2 = inlined_call_operand.vmem [shape: f32[1,96], index: 2, kind: input, shape index: {}]
  %s3 = inlined_call_operand.vmem [shape: f32[16,96], index: 3, kind: output, shape index: {}]
  %s4 = sld [smem:[#allocation0]]
  $region30: #{decoder_forward.19} parent=0
    _
  %s6 = ssub.s32 1, %s4
  %s7 = scalar_select 0, %s6, %s4
  // Predicated region
  $region2: #{decoder_forward.19} parent=0 // pred_check
    _
  $region3: #{decoder_forward.19} parent=0 // pred_check_branch
    %9 = sbr.rel (0) target = $region5
  $region4: #{decoder_forward.19} parent=0 // pred_region
    _
  $region5: #{decoder_forward.19} parent=0 // pred_fallthru
    _
  // Predicated region
  $region6: #{decoder_forward.19} parent=0 // pred_check
    _
  $region7: #{decoder_forward.19} parent=0 // pred_check_branch
    %11 = sbr.rel (0) target = $region9
  $region8: #{decoder_forward.19} parent=0 // pred_region
    _
  $region9: #{decoder_forward.19} parent=0 // pred_fallthru
    _
  // Predicated region
  $region10: #{decoder_forward.19} parent=0 // pred_check
    _
  $region11: #{decoder_forward.19} parent=0 // pred_check_branch
    %13 = sbr.rel (0) target = $region13
  $region12: #{decoder_forward.19} parent=0 // pred_region
    _
  $region13: #{decoder_forward.19} parent=0 // pred_fallthru
    _
  %p14 = scmp.eq.s32.totalorder 0, 0
  // Predicated region
  $region14: #{decoder_forward.19} parent=0 // pred_check
    %p15 = pneg %p14
  $region15: #{decoder_forward.19} parent=0 // pred_check_branch
    %17 = sbr.rel (%p15) target = $region17
  $region16: #{decoder_forward.19} parent=0 // pred_region
    %vm18 = vcmask 785408
    %19 = vst.msk [vmem:[#allocation2] sm:$0xff] %vm18, 0.0
    %20 = vst.msk [vmem:[#allocation2 + $0x8] sm:$0xff] %vm18, 0.0
  $region17: #{decoder_forward.19} parent=0 // pred_fallthru
    _
  %v21 = vld [vmem:[%s0] sm:$0xff]
  %v22 = vld [vmem:[%s0 + $0x8] sm:$0xff]
  %v23 = vld [vmem:[#allocation2] sm:$0xff]
  %v24 = vld [vmem:[#allocation2 + $0x8] sm:$0xff]
  %v25 = vld [vmem:[%s1] sm:$0xff]
  %v26 = vld [vmem:[%s1 + $0x8] sm:$0xff]
  %v27 = vld [vmem:[%s1 + $0x10] sm:$0xff]
  %v28 = vld [vmem:[%s1 + $0x18] sm:$0xff]
  %vm29 = vcmask 261120
  %v31 = vsel %vm29, %v21, 0
  %v34 = vsel %vm29, %v22, 0
  %36 = vmatprep.subr.mxu0 0.0
  %37 = vmatpush1.msra.mxu0 %v25
  %38 = vmatprep.subr.mxu0 0.0
  %39 = vmatpush1.msra.mxu0 %v26
  %40 = vmatprep.subr.mxu0 0.0
  %41 = vmatpush1.msra.mxu0 %v27
  %42 = vmatprep.subr.mxu0 0.0
  %43 = vmatpush1.msra.mxu0 %v28
  %44 = vmatprep.subr.mxu0 0.0
  %45 = vmatpush1.msra.mxu0 0.0
  %46 = vmatprep.subr.mxu0 0.0
  %47 = vmatpush1.msra.mxu0 0.0
  %48 = vmatprep.subr.mxu0 0.0
  %49 = vmatpush1.msra.mxu0 0.0
  %50 = vmatprep.subr.mxu0 0.0
  %51 = vmatpush1.msra.mxu0 0.0
  %52 = vmatprep.subr.mxu0 0.0
  %53 = vmatpush1.msra.mxu0 0.0
  %54 = vmatprep.subr.mxu0 0.0
  %55 = vmatpush1.msra.mxu0 0.0
  %56 = vmatprep.subr.mxu0 0.0
  %57 = vmatpush1.msra.mxu0 0.0
  %58 = vmatprep.subr.mxu0 0.0
  %59 = vmatpush1.msra.mxu0 0.0
  %60 = vmatprep.subr.mxu0 0.0
  %61 = vmatpush1.msra.mxu0 0.0
  %62 = vmatprep.subr.mxu0 0.0
  %63 = vmatpush1.msra.mxu0 0.0
  %64 = vmatprep.subr.mxu0 0.0
  %65 = vmatpush1.msra.mxu0 0.0
  %66 = vmatprep.subr.mxu0 0.0
  %67 = vmatpush1.msra.mxu0 0.0
  %68 = vmatprep.subr.mxu0 0.0
  %69 = vmatpush1.msra.mxu0 0.0
  %70 = vmatprep.subr.mxu0 0.0
  %71 = vmatpush1.msra.mxu0 0.0
  %72 = vmatprep.subr.mxu0 0.0
  %73 = vmatpush1.msra.mxu0 0.0
  %74 = vmatprep.subr.mxu0 0.0
  %75 = vmatpush1.msra.mxu0 0.0
  %76 = vmatprep.subr.mxu0 0.0
  %77 = vmatpush1.msra.mxu0 0.0
  %78 = vmatprep.subr.mxu0 0.0
  %79 = vmatpush1.msra.mxu0 0.0
  %80 = vmatprep.subr.mxu0 0.0
  %81 = vmatpush1.msra.mxu0 0.0
  %82 = vmatprep.subr.mxu0 0.0
  %83 = vmatpush1.msra.mxu0 0.0
  %84 = vmatprep.subr.mxu0 0.0
  %85 = vmatpush1.msra.mxu0 0.0
  %86 = vmatprep.subr.mxu0 0.0
  %87 = vmatpush1.msra.mxu0 0.0
  %88 = vmatprep.subr.mxu0 0.0
  %89 = vmatpush1.msra.mxu0 0.0
  %90 = vmatprep.subr.mxu0 0.0
  %91 = vmatpush1.msra.mxu0 0.0
  %92 = vmatprep.subr.mxu0 0.0
  %93 = vmatpush1.msra.mxu0 0.0
  %94 = vmatprep.subr.mxu0 0.0
  %95 = vmatpush1.msra.mxu0 0.0
  %96 = vmatprep.subr.mxu0 0.0
  %97 = vmatpush1.msra.mxu0 0.0
  %98 = vmatprep.subr.mxu0 0.0
  %99 = vmatpush1.msra.mxu0 0.0
  %100 = vmatprep.mubr.f32.mxu0 0.0
  %101 = vmatmul.mubr.f32.gmra.mrb[0].mxu0 %v31
  %v102 = vpop.f32.mrb[0].mxu0
  %v103 = vadd.f32 0.0, %v102
  %v104 = vpop.f32.mrb[0].mxu0
  %105 = vmatprep.mubr.f32.mxu0 0.0
  %106 = vmatmul.mubr.f32.gmra.mrb[0].mxu0 %v34
  %v107 = vpop.f32.mrb[0].mxu0
  %v108 = vadd.f32 0.0, %v107
  %v109 = vpop.f32.mrb[0].mxu0
  %110 = vdwg.mxu0
  %v111 = vadd.f32 %v23, %v103
  %v112 = vadd.f32 %v24, %v108
  %vm113 = vcmask 785408
  %114 = vst.msk [vmem:[#allocation2] sm:$0xff] %vm113, %v111
  %115 = vst.msk [vmem:[#allocation2 + $0x8] sm:$0xff] %vm113, %v112
  // Predicated region
  $region18: #{decoder_forward.19} parent=0 // pred_check
    %p116 = pneg %p14
  $region19: #{decoder_forward.19} parent=0 // pred_check_branch
    %118 = sbr.rel (%p116) target = $region21
  $region20: #{decoder_forward.19} parent=0 // pred_region
    %v119 = vld [vmem:[#allocation2] sm:$0xff]
    %v120 = vld [vmem:[#allocation2 + $0x8] sm:$0xff]
    %v121 = vld [vmem:[%s2] sm:$0x1]
    %v123 = vlaneseq
    %v124 = vshrl.u32 %v123, 7
    %v125 = vsub.s32 0, %v124
    %v126 = vrot.slane %v121, %v125
    %v128 = vadd.f32 %v119, %v126
    %v129 = vadd.f32 %v120, %v126
    %130 = vst.msk [vmem:[%s3] sm:$0xff] %vm113, %v128
    %131 = vst.msk [vmem:[%s3 + $0x8] sm:$0xff] %vm113, %v129
  $region21: #{decoder_forward.19} parent=0 // pred_fallthru
    _
  // Predicated region
  $region22: #{decoder_forward.19} parent=0 // pred_check
    _
  $region23: #{decoder_forward.19} parent=0 // pred_check_branch
    %133 = sbr.rel (0) target = $region25
  $region24: #{decoder_forward.19} parent=0 // pred_region
    _
  $region25: #{decoder_forward.19} parent=0 // pred_fallthru
    _
  // Predicated region
  $region26: #{decoder_forward.19} parent=0 // pred_check
    _
  $region27: #{decoder_forward.19} parent=0 // pred_check_branch
    %135 = sbr.rel (0) target = $region29
  $region28: #{decoder_forward.19} parent=0 // pred_region
    _
  $region29: #{decoder_forward.19} parent=0 // pred_fallthru
    _

// kernel: decoder_forward.21
$region0: #{decoder_forward.21}
  #allocation0 [shape = 'u32[]', space=smem, size = 0x4, offset = 0x4, fixed_abs, tag = 'smem constant byte address 0x4 - core index']
  #allocation1 [shape = 'u32[144,128]{1,0:T(1,128)}', space=vmem, size = 0x12000, scoped, tag = 'internal scratch']
  #allocation2 [shape = 'f32[16,32]{1,0:T(8,128)}', space=vmem, size = 0x2000, scoped, tag = 'scratch operand']
  %s0 = inlined_call_operand.vmem [shape: f32[16,32], index: 0, kind: input, shape index: {}]
  %s1 = inlined_call_operand.vmem [shape: f32[32,32], index: 1, kind: input, shape index: {}]
  %s2 = inlined_call_operand.vmem [shape: f32[1,32], index: 2, kind: input, shape index: {}]
  %s3 = inlined_call_operand.vmem [shape: f32[16,32], index: 3, kind: input, shape index: {}]
  %s4 = inlined_call_operand.vmem [shape: f32[1,32], index: 4, kind: input, shape index: {}]
  %s5 = inlined_call_operand.vmem [shape: f32[1,32], index: 5, kind: input, shape index: {}]
  %s6 = inlined_call_operand.vmem [shape: f32[16,32], index: 6, kind: output, shape index: {}]
  %s7 = sld [smem:[#allocation0]]
  $region42: #{decoder_forward.21} parent=0
    _
  %s9 = ssub.s32 1, %s7
  %s10 = scalar_select 0, %s9, %s7
  // Predicated region
  $region2: #{decoder_forward.21} parent=0 // pred_check
    _
  $region3: #{decoder_forward.21} parent=0 // pred_check_branch
    %12 = sbr.rel (0) target = $region5
  $region4: #{decoder_forward.21} parent=0 // pred_region
    _
  $region5: #{decoder_forward.21} parent=0 // pred_fallthru
    _
  // Predicated region
  $region6: #{decoder_forward.21} parent=0 // pred_check
    _
  $region7: #{decoder_forward.21} parent=0 // pred_check_branch
    %14 = sbr.rel (0) target = $region9
  $region8: #{decoder_forward.21} parent=0 // pred_region
    _
  $region9: #{decoder_forward.21} parent=0 // pred_fallthru
    _
  // Predicated region
  $region10: #{decoder_forward.21} parent=0 // pred_check
    _
  $region11: #{decoder_forward.21} parent=0 // pred_check_branch
    %16 = sbr.rel (0) target = $region13
  $region12: #{decoder_forward.21} parent=0 // pred_region
    _
  $region13: #{decoder_forward.21} parent=0 // pred_fallthru
    _
  // Predicated region
  $region14: #{decoder_forward.21} parent=0 // pred_check
    _
  $region15: #{decoder_forward.21} parent=0 // pred_check_branch
    %18 = sbr.rel (0) target = $region17
  $region16: #{decoder_forward.21} parent=0 // pred_region
    _
  $region17: #{decoder_forward.21} parent=0 // pred_fallthru
    _
  // Predicated region
  $region18: #{decoder_forward.21} parent=0 // pred_check
    _
  $region19: #{decoder_forward.21} parent=0 // pred_check_branch
    %20 = sbr.rel (0) target = $region21
  $region20: #{decoder_forward.21} parent=0 // pred_region
    _
  $region21: #{decoder_forward.21} parent=0 // pred_fallthru
    _
  // Predicated region
  $region22: #{decoder_forward.21} parent=0 // pred_check
    _
  $region23: #{decoder_forward.21} parent=0 // pred_check_branch
    %22 = sbr.rel (0) target = $region25
  $region24: #{decoder_forward.21} parent=0 // pred_region
    _
  $region25: #{decoder_forward.21} parent=0 // pred_fallthru
    _
  %p23 = scmp.eq.s32.totalorder 0, 0
  // Predicated region
  $region26: #{decoder_forward.21} parent=0 // pred_check
    %p24 = pneg %p23
  $region27: #{decoder_forward.21} parent=0 // pred_check_branch
    %26 = sbr.rel (%p24) target = $region29
  $region28: #{decoder_forward.21} parent=0 // pred_region
    %vm27 = vcmask 261120
    %28 = vst.msk [vmem:[#allocation2] sm:$0xff] %vm27, 0.0
    %29 = vst.msk [vmem:[#allocation2 + $0x8] sm:$0xff] %vm27, 0.0
  $region29: #{decoder_forward.21} parent=0 // pred_fallthru
    _
  %v30 = vld [vmem:[%s0] sm:$0xff]
  %v31 = vld [vmem:[%s0 + $0x8] sm:$0xff]
  %v32 = vld [vmem:[#allocation2] sm:$0xff]
  %v33 = vld [vmem:[#allocation2 + $0x8] sm:$0xff]
  %v34 = vld [vmem:[%s1] sm:$0xff]
  %v35 = vld [vmem:[%s1 + $0x8] sm:$0xff]
  %v36 = vld [vmem:[%s1 + $0x10] sm:$0xff]
  %v37 = vld [vmem:[%s1 + $0x18] sm:$0xff]
  %vm38 = vcmask 261120
  %v40 = vsel %vm38, %v30, 0
  %v43 = vsel %vm38, %v31, 0
  %45 = vmatprep.subr.mxu0 0.0
  %46 = vmatpush1.msra.mxu0 %v34
  %47 = vmatprep.subr.mxu0 0.0
  %48 = vmatpush1.msra.mxu0 %v35
  %49 = vmatprep.subr.mxu0 0.0
  %50 = vmatpush1.msra.mxu0 %v36
  %51 = vmatprep.subr.mxu0 0.0
  %52 = vmatpush1.msra.mxu0 %v37
  %53 = vmatprep.subr.mxu0 0.0
  %54 = vmatpush1.msra.mxu0 0.0
  %55 = vmatprep.subr.mxu0 0.0
  %56 = vmatpush1.msra.mxu0 0.0
  %57 = vmatprep.subr.mxu0 0.0
  %58 = vmatpush1.msra.mxu0 0.0
  %59 = vmatprep.subr.mxu0 0.0
  %60 = vmatpush1.msra.mxu0 0.0
  %61 = vmatprep.subr.mxu0 0.0
  %62 = vmatpush1.msra.mxu0 0.0
  %63 = vmatprep.subr.mxu0 0.0
  %64 = vmatpush1.msra.mxu0 0.0
  %65 = vmatprep.subr.mxu0 0.0
  %66 = vmatpush1.msra.mxu0 0.0
  %67 = vmatprep.subr.mxu0 0.0
  %68 = vmatpush1.msra.mxu0 0.0
  %69 = vmatprep.subr.mxu0 0.0
  %70 = vmatpush1.msra.mxu0 0.0
  %71 = vmatprep.subr.mxu0 0.0
  %72 = vmatpush1.msra.mxu0 0.0
  %73 = vmatprep.subr.mxu0 0.0
  %74 = vmatpush1.msra.mxu0 0.0
  %75 = vmatprep.subr.mxu0 0.0
  %76 = vmatpush1.msra.mxu0 0.0
  %77 = vmatprep.subr.mxu0 0.0
  %78 = vmatpush1.msra.mxu0 0.0
  %79 = vmatprep.subr.mxu0 0.0
  %80 = vmatpush1.msra.mxu0 0.0
  %81 = vmatprep.subr.mxu0 0.0
  %82 = vmatpush1.msra.mxu0 0.0
  %83 = vmatprep.subr.mxu0 0.0
  %84 = vmatpush1.msra.mxu0 0.0
  %85 = vmatprep.subr.mxu0 0.0
  %86 = vmatpush1.msra.mxu0 0.0
  %87 = vmatprep.subr.mxu0 0.0
  %88 = vmatpush1.msra.mxu0 0.0
  %89 = vmatprep.subr.mxu0 0.0
  %90 = vmatpush1.msra.mxu0 0.0
  %91 = vmatprep.subr.mxu0 0.0
  %92 = vmatpush1.msra.mxu0 0.0
  %93 = vmatprep.subr.mxu0 0.0
  %94 = vmatpush1.msra.mxu0 0.0
  %95 = vmatprep.subr.mxu0 0.0
  %96 = vmatpush1.msra.mxu0 0.0
  %97 = vmatprep.subr.mxu0 0.0
  %98 = vmatpush1.msra.mxu0 0.0
  %99 = vmatprep.subr.mxu0 0.0
  %100 = vmatpush1.msra.mxu0 0.0
  %101 = vmatprep.subr.mxu0 0.0
  %102 = vmatpush1.msra.mxu0 0.0
  %103 = vmatprep.subr.mxu0 0.0
  %104 = vmatpush1.msra.mxu0 0.0
  %105 = vmatprep.subr.mxu0 0.0
  %106 = vmatpush1.msra.mxu0 0.0
  %107 = vmatprep.subr.mxu0 0.0
  %108 = vmatpush1.msra.mxu0 0.0
  %109 = vmatprep.mubr.f32.mxu0 0.0
  %110 = vmatmul.mubr.f32.gmra.mrb[0].mxu0 %v40
  %v111 = vpop.f32.mrb[0].mxu0
  %v112 = vadd.f32 0.0, %v111
  %v113 = vpop.f32.mrb[0].mxu0
  %114 = vmatprep.mubr.f32.mxu0 0.0
  %115 = vmatmul.mubr.f32.gmra.mrb[0].mxu0 %v43
  %v116 = vpop.f32.mrb[0].mxu0
  %v117 = vadd.f32 0.0, %v116
  %v118 = vpop.f32.mrb[0].mxu0
  %119 = vdwg.mxu0
  %v120 = vadd.f32 %v32, %v112
  %v121 = vadd.f32 %v33, %v117
  %122 = vst.msk [vmem:[#allocation2] sm:$0xff] %vm38, %v120
  %123 = vst.msk [vmem:[#allocation2 + $0x8] sm:$0xff] %vm38, %v121
  // Predicated region
  $region30: #{decoder_forward.21} parent=0 // pred_check
    %p124 = pneg %p23
  $region31: #{decoder_forward.21} parent=0 // pred_check_branch
    %126 = sbr.rel (%p124) target = $region33
  $region32: #{decoder_forward.21} parent=0 // pred_region
    %v127 = vld [vmem:[#allocation2] sm:$0xff]
    %v128 = vld [vmem:[#allocation2 + $0x8] sm:$0xff]
    %v129 = vld [vmem:[%s2] sm:$0x1]
    %v131 = vlaneseq
    %v132 = vshrl.u32 %v131, 7
    %v133 = vsub.s32 0, %v132
    %v134 = vrot.slane %v129, %v133
    %v136 = vadd.f32 %v127, %v134
    %v137 = vadd.f32 %v128, %v134
    %v138 = vld [vmem:[%s3] sm:$0xff]
    %v139 = vld [vmem:[%s3 + $0x8] sm:$0xff]
    %v140 = vadd.f32 %v136, %v138
    %v141 = vadd.f32 %v137, %v139
    %v142 = vsel %vm38, %v140, 0.0
    %143 = vadd.xlane.f32.xlu0 %v142
    %v144 = vpop.xlane.xlu0 %143
    %v145 = vsel %vm38, %v141, 0.0
    %146 = vadd.xlane.f32.xlu0 %v145
    %v147 = vpop.xlane.xlu0 %146
    %v148 = vrcp.pop 32.0
    %v149 = vmul.f32 %v144, %v148
    %v150 = vmul.f32 %v147, %v148
    %v151 = vsub.f32 %v140, %v149
    %v152 = vsub.f32 %v141, %v150
    %v153 = vmul.f32 %v151, %v151
    %v154 = vmul.f32 %v152, %v152
    %v155 = vsel %vm38, %v153, 0.0
    %156 = vadd.xlane.f32.xlu0 %v155
    %v157 = vpop.xlane.xlu0 %156
    %v158 = vsel %vm38, %v154, 0.0
    %159 = vadd.xlane.f32.xlu0 %v158
    %v160 = vpop.xlane.xlu0 %159
    %v161 = vmul.f32 %v157, %v148
    %v162 = vmul.f32 %v160, %v148
    %v163 = vadd.f32 %v161, 1e-05
    %v164 = vadd.f32 %v162, 1e-05
    %v165 = vrsqrt.pop %v163
    %v166 = vrsqrt.pop %v164
    %v167 = vmul.f32 %v151, %v165
    %v168 = vmul.f32 %v152, %v166
    %v169 = vld [vmem:[%s4] sm:$0x1]
    %v171 = vlaneseq
    %v172 = vshrl.u32 %v171, 7
    %v173 = vsub.s32 0, %v172
    %v174 = vrot.slane %v169, %v173
    %v176 = vmul.f32 %v167, %v174
    %v177 = vmul.f32 %v168, %v174
    %v178 = vld [vmem:[%s5] sm:$0x1]
    %v180 = vlaneseq
    %v181 = vshrl.u32 %v180, 7
    %v182 = vsub.s32 0, %v181
    %v183 = vrot.slane %v178, %v182
    %v185 = vadd.f32 %v176, %v183
    %v186 = vadd.f32 %v177, %v183
    %187 = vst.msk [vmem:[%s6] sm:$0xff] %vm38, %v185
    %188 = vst.msk [vmem:[%s6 + $0x8] sm:$0xff] %vm38, %v186
  $region33: #{decoder_forward.21} parent=0 // pred_fallthru
    _
  // Predicated region
  $region34: #{decoder_forward.21} parent=0 // pred_check
    _
  $region35: #{decoder_forward.21} parent=0 // pred_check_branch
    %190 = sbr.rel (0) target = $region37
  $region36: #{decoder_forward.21} parent=0 // pred_region
    _
  $region37: #{decoder_forward.21} parent=0 // pred_fallthru
    _
  // Predicated region
  $region38: #{decoder_forward.21} parent=0 // pred_check
    _
  $region39: #{decoder_forward.21} parent=0 // pred_check_branch
    %192 = sbr.rel (0) target = $region41
  $region40: #{decoder_forward.21} parent=0 // pred_region
    _
  $region41: #{decoder_forward.21} parent=0 // pred_fallthru
    _

// kernel: decoder_forward.20
$region0: #{decoder_forward.20}
  #allocation0 [shape = 'u32[]', space=smem, size = 0x4, offset = 0x4, fixed_abs, tag = 'smem constant byte address 0x4 - core index']
  #allocation1 [shape = 'u32[144,128]{1,0:T(1,128)}', space=vmem, size = 0x12000, scoped, tag = 'internal scratch']
  %s0 = inlined_call_operand.vmem [shape: f32[2,8,96], index: 0, kind: input, shape index: {}]
  %s1 = inlined_call_operand.vmem [shape: s32[2,8,8], index: 1, kind: input, shape index: {}]
  %s2 = inlined_call_operand.vmem [shape: f32[2,8,32], index: 2, kind: output, shape index: {}]
  %s3 = sld [smem:[#allocation0]]
  $region41: #{decoder_forward.20} parent=0
    _
  %s5 = ssub.s32 1, %s3
  %s6 = scalar_select 0, %s5, %s3
  loop: start=0, step=1, limit=4
  $region2: #{decoder_forward.20} parent=0 // loop_pre_header
    _
  $region3: #{decoder_forward.20} parent=0 // loop_header
    %s8 = sphi 0, %s12
    %p9 = scmp.ge.s32.totalorder %s8, 4
    %s18 = sphi 0, %s20
    %s21 = sphi 0, %s18
    %s22 = sphi 0, %s21
    %s38 = sphi 0, %s22
    %s44 = sphi 0, %s46
    %s47 = sphi 0, %s44
    %s48 = sphi 0, %s47
    %s64 = sphi 0, %s48
    %s70 = sphi 0, %s72
    %s73 = sphi 0, %s70
    %s74 = sphi 0, %s73
    %s90 = sphi 0, %s74
  $region4: #{decoder_forward.20} parent=0 // loop_header_branch
    %11 = sbr.rel (%p9) target = $region8
  $region5: #{decoder_forward.20} parent=0 // loop_body
    %s13 = ssub.s32 %s8, 1
    %s14 = ssub.s32 %s8, 2
    %s15 = sadd.s32 %s8, 1
    %s16 = ssub.s32 %s8, %s15
    %p17 = scmp.eq.s32.totalorder %s16, 0
    %s19 = sadd.s32 %s18, 1
    %s20 = scalar_select %p17, %s18, %s19
    %p23 = pneg %p17
    %p24 = scmp.eq.s32.totalorder %s8, 1
    %p25 = por %p23, %p24
    %p26 = scmp.ne.s32.totalorder %s18, %s21
    %p27 = scmp.eq.s32.totalorder %s8, 0
    %p28 = por %p26, %p27
    %p29 = scmp.ne.s32.totalorder %s18, %s21
    %p30 = scmp.eq.s32.totalorder %s13, 1
    %p31 = por %p29, %p30
    %p32 = scmp.ne.s32.totalorder %s21, %s22
    %p33 = scmp.eq.s32.totalorder %s13, 0
    %p34 = por %p32, %p33
    %p35 = scmp.ne.s32.totalorder %s21, %s22
    %p36 = scmp.eq.s32.totalorder %s14, 1
    %p37 = por %p35, %p36
    %p39 = scmp.ne.s32.totalorder %s22, %s38
    %p40 = scmp.eq.s32.totalorder %s14, 0
    %p41 = por %p39, %p40
    %s42 = ssub.s32 %s8, %s15
    %p43 = scmp.eq.s32.totalorder %s42, 0
    %s45 = sadd.s32 %s44, 1
    %s46 = scalar_select %p43, %s44, %s45
    %p49 = pneg %p43
    %p50 = scmp.eq.s32.totalorder %s8, 1
    %p51 = por %p49, %p50
    %p52 = scmp.ne.s32.totalorder %s44, %s47
    %p53 = scmp.eq.s32.totalorder %s8, 0
    %p54 = por %p52, %p53
    %p55 = scmp.ne.s32.totalorder %s44, %s47
    %p56 = scmp.eq.s32.totalorder %s13, 1
    %p57 = por %p55, %p56
    %p58 = scmp.ne.s32.totalorder %s47, %s48
    %p59 = scmp.eq.s32.totalorder %s13, 0
    %p60 = por %p58, %p59
    %p61 = scmp.ne.s32.totalorder %s47, %s48
    %p62 = scmp.eq.s32.totalorder %s14, 1
    %p63 = por %p61, %p62
    %p65 = scmp.ne.s32.totalorder %s48, %s64
    %p66 = scmp.eq.s32.totalorder %s14, 0
    %p67 = por %p65, %p66
    %s68 = ssub.s32 %s8, %s15
    %p69 = scmp.eq.s32.totalorder %s68, 0
    %s71 = sadd.s32 %s70, 1
    %s72 = scalar_select %p69, %s70, %s71
    %p75 = pneg %p69
    %p76 = scmp.eq.s32.totalorder %s8, 1
    %p77 = por %p75, %p76
    %p78 = scmp.ne.s32.totalorder %s70, %s73
    %p79 = scmp.eq.s32.totalorder %s8, 0
    %p80 = por %p78, %p79
    %p81 = scmp.ne.s32.totalorder %s70, %s73
    %p82 = scmp.eq.s32.totalorder %s13, 1
    %p83 = por %p81, %p82
    %p84 = scmp.ne.s32.totalorder %s73, %s74
    %p85 = scmp.eq.s32.totalorder %s13, 0
    %p86 = por %p84, %p85
    %p87 = scmp.ne.s32.totalorder %s73, %s74
    %p88 = scmp.eq.s32.totalorder %s14, 1
    %p89 = por %p87, %p88
    %p91 = scmp.ne.s32.totalorder %s74, %s90
    %p92 = scmp.eq.s32.totalorder %s14, 0
    %p93 = por %p91, %p92
    %p94 = scmp.le.s32.totalorder 1, %s8
    %p95 = scmp.lt.s32.totalorder %s8, 3
    %p96 = pnand %p94, %p95
    %p97 = pneg %p96
    // Predicated region
    $region9: #{decoder_forward.20} parent=5 // pred_check
      _
    $region10: #{decoder_forward.20} parent=5 // pred_check_branch
      %99 = sbr.rel (%p96) target = $region12
    $region11: #{decoder_forward.20} parent=5 // pred_region
      %s100 = ssub.s32 %s8, 1
    $region12: #{decoder_forward.20} parent=5 // pred_fallthru
      _
    %p101 = scmp.lt.s32.totalorder %s8, 2
    // Predicated region
    $region13: #{decoder_forward.20} parent=5 // pred_check
      %p102 = pneg %p101
    $region14: #{decoder_forward.20} parent=5 // pred_check_branch
      %104 = sbr.rel (%p102) target = $region16
    $region15: #{decoder_forward.20} parent=5 // pred_region
      // Predicated region
      $region17: #{decoder_forward.20} parent=15 // pred_check
        %p105 = pneg %p28
      $region18: #{decoder_forward.20} parent=15 // pred_check_branch
        %107 = sbr.rel (%p105) target = $region20
      $region19: #{decoder_forward.20} parent=15 // pred_region
        %p108 = scmp.lt.s32.totalorder %s8, 1
        %s109 = scalar_select %p108, %s8, 1
        %s110 = smul.addr %s109, 8
        %s111 = scalar_lea.vmem %s0, %s110
      $region20: #{decoder_forward.20} parent=15 // pred_fallthru
        _
      // Predicated region
      $region21: #{decoder_forward.20} parent=15 // pred_check
        %p112 = pneg %p54
      $region22: #{decoder_forward.20} parent=15 // pred_check_branch
        %114 = sbr.rel (%p112) target = $region24
      $region23: #{decoder_forward.20} parent=15 // pred_region
        %p115 = scmp.lt.s32.totalorder %s8, 1
        %s116 = scalar_select %p115, %s8, 1
        %s117 = smul.addr %s116, 8
        %s118 = scalar_lea.vmem %s1, %s117
      $region24: #{decoder_forward.20} parent=15 // pred_fallthru
        _
    $region16: #{decoder_forward.20} parent=5 // pred_fallthru
      _
    %p119 = scmp.le.s32.totalorder 1, %s8
    %p120 = scmp.lt.s32.totalorder %s8, 3
    %p121 = pnand %p119, %p120
    %p122 = pneg %p121
    // Predicated region
    $region25: #{decoder_forward.20} parent=5 // pred_check
      _
    $region26: #{decoder_forward.20} parent=5 // pred_check_branch
      %124 = sbr.rel (%p121) target = $region28
    $region27: #{decoder_forward.20} parent=5 // pred_region
      %s125 = ssub.s32 %s8, 1
      %p126 = scmp.lt.s32.totalorder %s13, 1
      %s127 = scalar_select %p126, %s13, 1
      %s128 = smul.addr %s127, 8
      %s129 = scalar_lea.vmem %s0, %s128
      %p130 = pneg %p34
      %p131 = pneg %p31
      %p132 = scmp.lt.s32.totalorder %s13, 1
      %s133 = scalar_select %p132, %s13, 1
      %s134 = smul.addr %s133, 8
      %s135 = scalar_lea.vmem %s1, %s134
      %p136 = pneg %p60
      %p137 = pneg %p57
      %p138 = pneg %p86
      %p139 = pneg %p83
      %p140 = scmp.lt.s32.totalorder %s13, 1
      %s141 = scalar_select %p140, %s13, 1
      %s142 = smul.addr %s141, 8
      %s143 = scalar_lea.vmem %s2, %s142
      %p144 = scmp.lt.s32.totalorder %s13, 1
      %s145 = scalar_select %p144, %s13, 1
      %s146 = smul.addr %s145, 8
      %s147 = scalar_lea.vmem %s0, %s146
      %p148 = scmp.lt.s32.totalorder %s13, 1
      %s149 = scalar_select %p148, %s13, 1
      %s150 = smul.addr %s149, 8
      %s151 = scalar_lea.vmem %s1, %s150
      %p152 = scmp.lt.s32.totalorder %s13, 1
      %s153 = scalar_select %p152, %s13, 1
      %s154 = smul.addr %s153, 8
      %s155 = scalar_lea.vmem %s2, %s154
      %v156 = vld [vmem:[%s147] sm:$0xff]
      %v157 = vld [vmem:[%s151] sm:$0xff]
      %vm158 = vcmp.ne.s32.totalorder %v157, 0
      %160 = vrot.lane.b32.xlu0 %v156, 96
      %v161 = vpop.permute.xlu0 %160
      %vm162 = vcmask 64512
      %v163 = vsel %vm162, %v156, 0
      %v165 = vsel %vm162, %v161, 0
      %167 = vmatprep.subr.mxu0 0.0
      %168 = vmatpush1.xpose.msra.mxu0 %v165
      %169 = vmatprep.subr.mxu0 0.0
      %170 = vmatpush1.xpose.msra.mxu0 0.0
      %171 = vmatprep.subr.mxu0 0.0
      %172 = vmatpush1.xpose.msra.mxu0 0.0
      %173 = vmatprep.subr.mxu0 0.0
      %174 = vmatpush1.xpose.msra.mxu0 0.0
      %175 = vmatprep.subr.mxu0 0.0
      %176 = vmatpush1.xpose.msra.mxu0 0.0
      %177 = vmatprep.subr.mxu0 0.0
      %178 = vmatpush1.xpose.msra.mxu0 0.0
      %179 = vmatprep.subr.mxu0 0.0
      %180 = vmatpush1.xpose.msra.mxu0 0.0
      %181 = vmatprep.subr.mxu0 0.0
      %182 = vmatpush1.xpose.msra.mxu0 0.0
      %183 = vmatprep.subr.mxu0 0.0
      %184 = vmatpush1.xpose.msra.mxu0 0.0
      %185 = vmatprep.subr.mxu0 0.0
      %186 = vmatpush1.xpose.msra.mxu0 0.0
      %187 = vmatprep.subr.mxu0 0.0
      %188 = vmatpush1.xpose.msra.mxu0 0.0
      %189 = vmatprep.subr.mxu0 0.0
      %190 = vmatpush1.xpose.msra.mxu0 0.0
      %191 = vmatprep.subr.mxu0 0.0
      %192 = vmatpush1.xpose.msra.mxu0 0.0
      %193 = vmatprep.subr.mxu0 0.0
      %194 = vmatpush1.xpose.msra.mxu0 0.0
      %195 = vmatprep.subr.mxu0 0.0
      %196 = vmatpush1.xpose.msra.mxu0 0.0
      %197 = vmatprep.subr.mxu0 0.0
      %198 = vmatpush1.xpose.msra.mxu0 0.0
      %199 = vmatprep.subr.mxu0 0.0
      %200 = vmatpush1.xpose.msra.mxu0 0.0
      %201 = vmatprep.subr.mxu0 0.0
      %202 = vmatpush1.xpose.msra.mxu0 0.0
      %203 = vmatprep.subr.mxu0 0.0
      %204 = vmatpush1.xpose.msra.mxu0 0.0
      %205 = vmatprep.subr.mxu0 0.0
      %206 = vmatpush1.xpose.msra.mxu0 0.0
      %207 = vmatprep.subr.mxu0 0.0
      %208 = vmatpush1.xpose.msra.mxu0 0.0
      %209 = vmatprep.subr.mxu0 0.0
      %210 = vmatpush1.xpose.msra.mxu0 0.0
      %211 = vmatprep.subr.mxu0 0.0
      %212 = vmatpush1.xpose.msra.mxu0 0.0
      %213 = vmatprep.subr.mxu0 0.0
      %214 = vmatpush1.xpose.msra.mxu0 0.0
      %215 = vmatprep.subr.mxu0 0.0
      %216 = vmatpush1.xpose.msra.mxu0 0.0
      %217 = vmatprep.subr.mxu0 0.0
      %218 = vmatpush1.xpose.msra.mxu0 0.0
      %219 = vmatprep.subr.mxu0 0.0
      %220 = vmatpush1.xpose.msra.mxu0 0.0
      %221 = vmatprep.subr.mxu0 0.0
      %222 = vmatpush1.xpose.msra.mxu0 0.0
      %223 = vmatprep.subr.mxu0 0.0
      %224 = vmatpush1.xpose.msra.mxu0 0.0
      %225 = vmatprep.subr.mxu0 0.0
      %226 = vmatpush1.xpose.msra.mxu0 0.0
      %227 = vmatprep.subr.mxu0 0.0
      %228 = vmatpush1.xpose.msra.mxu0 0.0
      %229 = vmatprep.subr.mxu0 0.0
      %230 = vmatpush1.xpose.msra.mxu0 0.0
      %231 = vmatprep.mubr.f32.mxu0 0.0
      %232 = vmatmul.mubr.f32.gmra.mrb[0].mxu0 %v163
      %v233 = vpop.f32.mrb[0].mxu0
      %v234 = vadd.f32 0.0, %v233
      %v235 = vpop.f32.mrb[0].mxu0
      %236 = vdwg.mxu0
      %v237 = vmul.f32 %v234, 0.35355338
      %v238 = vsel %vm158, %v237, -1e+30
      %v239 = vsel %vm162, %v238, -inf
      %240 = vmax.xlane.f32.xlu0 %v239
      %v241 = vpop.xlane.xlu0 %240
      %v242 = vsub.f32 %v238, %v241
      %v243 = vmul.f32 %v242, 1.442695
      %v244 = vpow.pop %v243
      %v245 = vsel %vm162, %v244, 0.0
      %246 = vadd.xlane.f32.xlu0 %v245
      %v247 = vpop.xlane.xlu0 %246
      %248 = vrot.lane.b32.xlu0 %v156, 64
      %v249 = vpop.permute.xlu0 %248
      %v252 = vsel %vm162, %v244, 0
      %254 = vmatprep.subr.mxu0 0.0
      %255 = vmatpush1.msra.mxu0 %v249
      %256 = vmatprep.subr.mxu0 0.0
      %257 = vmatpush1.msra.mxu0 0.0
      %258 = vmatprep.subr.mxu0 0.0
      %259 = vmatpush1.msra.mxu0 0.0
      %260 = vmatprep.subr.mxu0 0.0
      %261 = vmatpush1.msra.mxu0 0.0
      %262 = vmatprep.subr.mxu0 0.0
      %263 = vmatpush1.msra.mxu0 0.0
      %264 = vmatprep.subr.mxu0 0.0
      %265 = vmatpush1.msra.mxu0 0.0
      %266 = vmatprep.subr.mxu0 0.0
      %267 = vmatpush1.msra.mxu0 0.0
      %268 = vmatprep.subr.mxu0 0.0
      %269 = vmatpush1.msra.mxu0 0.0
      %270 = vmatprep.subr.mxu0 0.0
      %271 = vmatpush1.msra.mxu0 0.0
      %272 = vmatprep.subr.mxu0 0.0
      %273 = vmatpush1.msra.mxu0 0.0
      %274 = vmatprep.subr.mxu0 0.0
      %275 = vmatpush1.msra.mxu0 0.0
      %276 = vmatprep.subr.mxu0 0.0
      %277 = vmatpush1.msra.mxu0 0.0
      %278 = vmatprep.subr.mxu0 0.0
      %279 = vmatpush1.msra.mxu0 0.0
      %280 = vmatprep.subr.mxu0 0.0
      %281 = vmatpush1.msra.mxu0 0.0
      %282 = vmatprep.subr.mxu0 0.0
      %283 = vmatpush1.msra.mxu0 0.0
      %284 = vmatprep.subr.mxu0 0.0
      %285 = vmatpush1.msra.mxu0 0.0
      %286 = vmatprep.subr.mxu0 0.0
      %287 = vmatpush1.msra.mxu0 0.0
      %288 = vmatprep.subr.mxu0 0.0
      %289 = vmatpush1.msra.mxu0 0.0
      %290 = vmatprep.subr.mxu0 0.0
      %291 = vmatpush1.msra.mxu0 0.0
      %292 = vmatprep.subr.mxu0 0.0
      %293 = vmatpush1.msra.mxu0 0.0
      %294 = vmatprep.subr.mxu0 0.0
      %295 = vmatpush1.msra.mxu0 0.0
      %296 = vmatprep.subr.mxu0 0.0
      %297 = vmatpush1.msra.mxu0 0.0
      %298 = vmatprep.subr.mxu0 0.0
      %299 = vmatpush1.msra.mxu0 0.0
      %300 = vmatprep.subr.mxu0 0.0
      %301 = vmatpush1.msra.mxu0 0.0
      %302 = vmatprep.subr.mxu0 0.0
      %303 = vmatpush1.msra.mxu0 0.0
      %304 = vmatprep.subr.mxu0 0.0
      %305 = vmatpush1.msra.mxu0 0.0
      %306 = vmatprep.subr.mxu0 0.0
      %307 = vmatpush1.msra.mxu0 0.0
      %308 = vmatprep.subr.mxu0 0.0
      %309 = vmatpush1.msra.mxu0 0.0
      %310 = vmatprep.subr.mxu0 0.0
      %311 = vmatpush1.msra.mxu0 0.0
      %312 = vmatprep.subr.mxu0 0.0
      %313 = vmatpush1.msra.mxu0 0.0
      %314 = vmatprep.subr.mxu0 0.0
      %315 = vmatpush1.msra.mxu0 0.0
      %316 = vmatprep.subr.mxu0 0.0
      %317 = vmatpush1.msra.mxu0 0.0
      %318 = vmatprep.mubr.f32.mxu0 0.0
      %319 = vmatmul.mubr.f32.gmra.mrb[0].mxu0 %v252
      %v320 = vpop.f32.mrb[0].mxu0
      %v321 = vadd.f32 0.0, %v320
      %v322 = vpop.f32.mrb[0].mxu0
      %323 = vdwg.mxu0
      %v324 = vrcp.pop %v247
      %v325 = vmul.f32 %v321, %v324
      %326 = vrot.lane.b32.xlu0 %v156, 120
      %v327 = vpop.permute.xlu0 %326
      %328 = vrot.lane.b32.xlu0 %v156, 88
      %v329 = vpop.permute.xlu0 %328
      %v330 = vsel %vm162, %v327, 0
      %v332 = vsel %vm162, %v329, 0
      %334 = vmatprep.subr.mxu0 0.0
      %335 = vmatpush1.xpose.msra.mxu0 %v332
      %336 = vmatprep.subr.mxu0 0.0
      %337 = vmatpush1.xpose.msra.mxu0 0.0
      %338 = vmatprep.subr.mxu0 0.0
      %339 = vmatpush1.xpose.msra.mxu0 0.0
      %340 = vmatprep.subr.mxu0 0.0
      %341 = vmatpush1.xpose.msra.mxu0 0.0
      %342 = vmatprep.subr.mxu0 0.0
      %343 = vmatpush1.xpose.msra.mxu0 0.0
      %344 = vmatprep.subr.mxu0 0.0
      %345 = vmatpush1.xpose.msra.mxu0 0.0
      %346 = vmatprep.subr.mxu0 0.0
      %347 = vmatpush1.xpose.msra.mxu0 0.0
      %348 = vmatprep.subr.mxu0 0.0
      %349 = vmatpush1.xpose.msra.mxu0 0.0
      %350 = vmatprep.subr.mxu0 0.0
      %351 = vmatpush1.xpose.msra.mxu0 0.0
      %352 = vmatprep.subr.mxu0 0.0
      %353 = vmatpush1.xpose.msra.mxu0 0.0
      %354 = vmatprep.subr.mxu0 0.0
      %355 = vmatpush1.xpose.msra.mxu0 0.0
      %356 = vmatprep.subr.mxu0 0.0
      %357 = vmatpush1.xpose.msra.mxu0 0.0
      %358 = vmatprep.subr.mxu0 0.0
      %359 = vmatpush1.xpose.msra.mxu0 0.0
      %360 = vmatprep.subr.mxu0 0.0
      %361 = vmatpush1.xpose.msra.mxu0 0.0
      %362 = vmatprep.subr.mxu0 0.0
      %363 = vmatpush1.xpose.msra.mxu0 0.0
      %364 = vmatprep.subr.mxu0 0.0
      %365 = vmatpush1.xpose.msra.mxu0 0.0
      %366 = vmatprep.subr.mxu0 0.0
      %367 = vmatpush1.xpose.msra.mxu0 0.0
      %368 = vmatprep.subr.mxu0 0.0
      %369 = vmatpush1.xpose.msra.mxu0 0.0
      %370 = vmatprep.subr.mxu0 0.0
      %371 = vmatpush1.xpose.msra.mxu0 0.0
      %372 = vmatprep.subr.mxu0 0.0
      %373 = vmatpush1.xpose.msra.mxu0 0.0
      %374 = vmatprep.subr.mxu0 0.0
      %375 = vmatpush1.xpose.msra.mxu0 0.0
      %376 = vmatprep.subr.mxu0 0.0
      %377 = vmatpush1.xpose.msra.mxu0 0.0
      %378 = vmatprep.subr.mxu0 0.0
      %379 = vmatpush1.xpose.msra.mxu0 0.0
      %380 = vmatprep.subr.mxu0 0.0
      %381 = vmatpush1.xpose.msra.mxu0 0.0
      %382 = vmatprep.subr.mxu0 0.0
      %383 = vmatpush1.xpose.msra.mxu0 0.0
      %384 = vmatprep.subr.mxu0 0.0
      %385 = vmatpush1.xpose.msra.mxu0 0.0
      %386 = vmatprep.subr.mxu0 0.0
      %387 = vmatpush1.xpose.msra.mxu0 0.0
      %388 = vmatprep.subr.mxu0 0.0
      %389 = vmatpush1.xpose.msra.mxu0 0.0
      %390 = vmatprep.subr.mxu0 0.0
      %391 = vmatpush1.xpose.msra.mxu0 0.0
      %392 = vmatprep.subr.mxu0 0.0
      %393 = vmatpush1.xpose.msra.mxu0 0.0
      %394 = vmatprep.subr.mxu0 0.0
      %395 = vmatpush1.xpose.msra.mxu0 0.0
      %396 = vmatprep.subr.mxu0 0.0
      %397 = vmatpush1.xpose.msra.mxu0 0.0
      %398 = vmatprep.mubr.f32.mxu0 0.0
      %399 = vmatmul.mubr.f32.gmra.mrb[0].mxu0 %v330
      %v400 = vpop.f32.mrb[0].mxu0
      %v401 = vadd.f32 0.0, %v400
      %v402 = vpop.f32.mrb[0].mxu0
      %403 = vdwg.mxu0
      %v404 = vmul.f32 %v401, 0.35355338
      %v405 = vsel %vm158, %v404, -1e+30
      %v406 = vsel %vm162, %v405, -inf
      %407 = vmax.xlane.f32.xlu0 %v406
      %v408 = vpop.xlane.xlu0 %407
      %v409 = vsub.f32 %v405, %v408
      %v410 = vmul.f32 %v409, 1.442695
      %v411 = vpow.pop %v410
      %v412 = vsel %vm162, %v411, 0.0
      %413 = vadd.xlane.f32.xlu0 %v412
      %v414 = vpop.xlane.xlu0 %413
      %415 = vrot.lane.b32.xlu0 %v156, 56
      %v416 = vpop.permute.xlu0 %415
      %v419 = vsel %vm162, %v411, 0
      %421 = vmatprep.subr.mxu0 0.0
      %422 = vmatpush1.msra.mxu0 %v416
      %423 = vmatprep.subr.mxu0 0.0
      %424 = vmatpush1.msra.mxu0 0.0
      %425 = vmatprep.subr.mxu0 0.0
      %426 = vmatpush1.msra.mxu0 0.0
      %427 = vmatprep.subr.mxu0 0.0
      %428 = vmatpush1.msra.mxu0 0.0
      %429 = vmatprep.subr.mxu0 0.0
      %430 = vmatpush1.msra.mxu0 0.0
      %431 = vmatprep.subr.mxu0 0.0
      %432 = vmatpush1.msra.mxu0 0.0
      %433 = vmatprep.subr.mxu0 0.0
      %434 = vmatpush1.msra.mxu0 0.0
      %435 = vmatprep.subr.mxu0 0.0
      %436 = vmatpush1.msra.mxu0 0.0
      %437 = vmatprep.subr.mxu0 0.0
      %438 = vmatpush1.msra.mxu0 0.0
      %439 = vmatprep.subr.mxu0 0.0
      %440 = vmatpush1.msra.mxu0 0.0
      %441 = vmatprep.subr.mxu0 0.0
      %442 = vmatpush1.msra.mxu0 0.0
      %443 = vmatprep.subr.mxu0 0.0
      %444 = vmatpush1.msra.mxu0 0.0
      %445 = vmatprep.subr.mxu0 0.0
      %446 = vmatpush1.msra.mxu0 0.0
      %447 = vmatprep.subr.mxu0 0.0
      %448 = vmatpush1.msra.mxu0 0.0
      %449 = vmatprep.subr.mxu0 0.0
      %450 = vmatpush1.msra.mxu0 0.0
      %451 = vmatprep.subr.mxu0 0.0
      %452 = vmatpush1.msra.mxu0 0.0
      %453 = vmatprep.subr.mxu0 0.0
      %454 = vmatpush1.msra.mxu0 0.0
      %455 = vmatprep.subr.mxu0 0.0
      %456 = vmatpush1.msra.mxu0 0.0
      %457 = vmatprep.subr.mxu0 0.0
      %458 = vmatpush1.msra.mxu0 0.0
      %459 = vmatprep.subr.mxu0 0.0
      %460 = vmatpush1.msra.mxu0 0.0
      %461 = vmatprep.subr.mxu0 0.0
      %462 = vmatpush1.msra.mxu0 0.0
      %463 = vmatprep.subr.mxu0 0.0
      %464 = vmatpush1.msra.mxu0 0.0
      %465 = vmatprep.subr.mxu0 0.0
      %466 = vmatpush1.msra.mxu0 0.0
      %467 = vmatprep.subr.mxu0 0.0
      %468 = vmatpush1.msra.mxu0 0.0
      %469 = vmatprep.subr.mxu0 0.0
      %470 = vmatpush1.msra.mxu0 0.0
      %471 = vmatprep.subr.mxu0 0.0
      %472 = vmatpush1.msra.mxu0 0.0
      %473 = vmatprep.subr.mxu0 0.0
      %474 = vmatpush1.msra.mxu0 0.0
      %475 = vmatprep.subr.mxu0 0.0
      %476 = vmatpush1.msra.mxu0 0.0
      %477 = vmatprep.subr.mxu0 0.0
      %478 = vmatpush1.msra.mxu0 0.0
      %479 = vmatprep.subr.mxu0 0.0
      %480 = vmatpush1.msra.mxu0 0.0
      %481 = vmatprep.subr.mxu0 0.0
      %482 = vmatpush1.msra.mxu0 0.0
      %483 = vmatprep.subr.mxu0 0.0
      %484 = vmatpush1.msra.mxu0 0.0
      %485 = vmatprep.mubr.f32.mxu0 0.0
      %486 = vmatmul.mubr.f32.gmra.mrb[0].mxu0 %v419
      %v487 = vpop.f32.mrb[0].mxu0
      %v488 = vadd.f32 0.0, %v487
      %v489 = vpop.f32.mrb[0].mxu0
      %490 = vdwg.mxu0
      %v491 = vrcp.pop %v414
      %v492 = vmul.f32 %v488, %v491
      %493 = vrot.lane.b32.xlu0 %v156, 112
      %v494 = vpop.permute.xlu0 %493
      %495 = vrot.lane.b32.xlu0 %v156, 80
      %v496 = vpop.permute.xlu0 %495
      %v497 = vsel %vm162, %v494, 0
      %v499 = vsel %vm162, %v496, 0
      %501 = vmatprep.subr.mxu0 0.0
      %502 = vmatpush1.xpose.msra.mxu0 %v499
      %503 = vmatprep.subr.mxu0 0.0
      %504 = vmatpush1.xpose.msra.mxu0 0.0
      %505 = vmatprep.subr.mxu0 0.0
      %506 = vmatpush1.xpose.msra.mxu0 0.0
      %507 = vmatprep.subr.mxu0 0.0
      %508 = vmatpush1.xpose.msra.mxu0 0.0
      %509 = vmatprep.subr.mxu0 0.0
      %510 = vmatpush1.xpose.msra.mxu0 0.0
      %511 = vmatprep.subr.mxu0 0.0
      %512 = vmatpush1.xpose.msra.mxu0 0.0
      %513 = vmatprep.subr.mxu0 0.0
      %514 = vmatpush1.xpose.msra.mxu0 0.0
      %515 = vmatprep.subr.mxu0 0.0
      %516 = vmatpush1.xpose.msra.mxu0 0.0
      %517 = vmatprep.subr.mxu0 0.0
      %518 = vmatpush1.xpose.msra.mxu0 0.0
      %519 = vmatprep.subr.mxu0 0.0
      %520 = vmatpush1.xpose.msra.mxu0 0.0
      %521 = vmatprep.subr.mxu0 0.0
      %522 = vmatpush1.xpose.msra.mxu0 0.0
      %523 = vmatprep.subr.mxu0 0.0
      %524 = vmatpush1.xpose.msra.mxu0 0.0
      %525 = vmatprep.subr.mxu0 0.0
      %526 = vmatpush1.xpose.msra.mxu0 0.0
      %527 = vmatprep.subr.mxu0 0.0
      %528 = vmatpush1.xpose.msra.mxu0 0.0
      %529 = vmatprep.subr.mxu0 0.0
      %530 = vmatpush1.xpose.msra.mxu0 0.0
      %531 = vmatprep.subr.mxu0 0.0
      %532 = vmatpush1.xpose.msra.mxu0 0.0
      %533 = vmatprep.subr.mxu0 0.0
      %534 = vmatpush1.xpose.msra.mxu0 0.0
      %535 = vmatprep.subr.mxu0 0.0
      %536 = vmatpush1.xpose.msra.mxu0 0.0
      %537 = vmatprep.subr.mxu0 0.0
      %538 = vmatpush1.xpose.msra.mxu0 0.0
      %539 = vmatprep.subr.mxu0 0.0
      %540 = vmatpush1.xpose.msra.mxu0 0.0
      %541 = vmatprep.subr.mxu0 0.0
      %542 = vmatpush1.xpose.msra.mxu0 0.0
      %543 = vmatprep.subr.mxu0 0.0
      %544 = vmatpush1.xpose.msra.mxu0 0.0
      %545 = vmatprep.subr.mxu0 0.0
      %546 = vmatpush1.xpose.msra.mxu0 0.0
      %547 = vmatprep.subr.mxu0 0.0
      %548 = vmatpush1.xpose.msra.mxu0 0.0
      %549 = vmatprep.subr.mxu0 0.0
      %550 = vmatpush1.xpose.msra.mxu0 0.0
      %551 = vmatprep.subr.mxu0 0.0
      %552 = vmatpush1.xpose.msra.mxu0 0.0
      %553 = vmatprep.subr.mxu0 0.0
      %554 = vmatpush1.xpose.msra.mxu0 0.0
      %555 = vmatprep.subr.mxu0 0.0
      %556 = vmatpush1.xpose.msra.mxu0 0.0
      %557 = vmatprep.subr.mxu0 0.0
      %558 = vmatpush1.xpose.msra.mxu0 0.0
      %559 = vmatprep.subr.mxu0 0.0
      %560 = vmatpush1.xpose.msra.mxu0 0.0
      %561 = vmatprep.subr.mxu0 0.0
      %562 = vmatpush1.xpose.msra.mxu0 0.0
      %563 = vmatprep.subr.mxu0 0.0
      %564 = vmatpush1.xpose.msra.mxu0 0.0
      %565 = vmatprep.mubr.f32.mxu0 0.0
      %566 = vmatmul.mubr.f32.gmra.mrb[0].mxu0 %v497
      %v567 = vpop.f32.mrb[0].mxu0
      %v568 = vadd.f32 0.0, %v567
      %v569 = vpop.f32.mrb[0].mxu0
      %570 = vdwg.mxu0
      %v571 = vmul.f32 %v568, 0.35355338
      %v572 = vsel %vm158, %v571, -1e+30
      %v573 = vsel %vm162, %v572, -inf
      %574 = vmax.xlane.f32.xlu0 %v573
      %v575 = vpop.xlane.xlu0 %574
      %v576 = vsub.f32 %v572, %v575
      %v577 = vmul.f32 %v576, 1.442695
      %v578 = vpow.pop %v577
      %v579 = vsel %vm162, %v578, 0.0
      %580 = vadd.xlane.f32.xlu0 %v579
      %v581 = vpop.xlane.xlu0 %580
      %582 = vrot.lane.b32.xlu0 %v156, 48
      %v583 = vpop.permute.xlu0 %582
      %v586 = vsel %vm162, %v578, 0
      %588 = vmatprep.subr.mxu0 0.0
      %589 = vmatpush1.msra.mxu0 %v583
      %590 = vmatprep.subr.mxu0 0.0
      %591 = vmatpush1.msra.mxu0 0.0
      %592 = vmatprep.subr.mxu0 0.0
      %593 = vmatpush1.msra.mxu0 0.0
      %594 = vmatprep.subr.mxu0 0.0
      %595 = vmatpush1.msra.mxu0 0.0
      %596 = vmatprep.subr.mxu0 0.0
      %597 = vmatpush1.msra.mxu0 0.0
      %598 = vmatprep.subr.mxu0 0.0
      %599 = vmatpush1.msra.mxu0 0.0
      %600 = vmatprep.subr.mxu0 0.0
      %601 = vmatpush1.msra.mxu0 0.0
      %602 = vmatprep.subr.mxu0 0.0
      %603 = vmatpush1.msra.mxu0 0.0
      %604 = vmatprep.subr.mxu0 0.0
      %605 = vmatpush1.msra.mxu0 0.0
      %606 = vmatprep.subr.mxu0 0.0
      %607 = vmatpush1.msra.mxu0 0.0
      %608 = vmatprep.subr.mxu0 0.0
      %609 = vmatpush1.msra.mxu0 0.0
      %610 = vmatprep.subr.mxu0 0.0
      %611 = vmatpush1.msra.mxu0 0.0
      %612 = vmatprep.subr.mxu0 0.0
      %613 = vmatpush1.msra.mxu0 0.0
      %614 = vmatprep.subr.mxu0 0.0
      %615 = vmatpush1.msra.mxu0 0.0
      %616 = vmatprep.subr.mxu0 0.0
      %617 = vmatpush1.msra.mxu0 0.0
      %618 = vmatprep.subr.mxu0 0.0
      %619 = vmatpush1.msra.mxu0 0.0
      %620 = vmatprep.subr.mxu0 0.0
      %621 = vmatpush1.msra.mxu0 0.0
      %622 = vmatprep.subr.mxu0 0.0
      %623 = vmatpush1.msra.mxu0 0.0
      %624 = vmatprep.subr.mxu0 0.0
      %625 = vmatpush1.msra.mxu0 0.0
      %626 = vmatprep.subr.mxu0 0.0
      %627 = vmatpush1.msra.mxu0 0.0
      %628 = vmatprep.subr.mxu0 0.0
      %629 = vmatpush1.msra.mxu0 0.0
      %630 = vmatprep.subr.mxu0 0.0
      %631 = vmatpush1.msra.mxu0 0.0
      %632 = vmatprep.subr.mxu0 0.0
      %633 = vmatpush1.msra.mxu0 0.0
      %634 = vmatprep.subr.mxu0 0.0
      %635 = vmatpush1.msra.mxu0 0.0
      %636 = vmatprep.subr.mxu0 0.0
      %637 = vmatpush1.msra.mxu0 0.0
      %638 = vmatprep.subr.mxu0 0.0
      %639 = vmatpush1.msra.mxu0 0.0
      %640 = vmatprep.subr.mxu0 0.0
      %641 = vmatpush1.msra.mxu0 0.0
      %642 = vmatprep.subr.mxu0 0.0
      %643 = vmatpush1.msra.mxu0 0.0
      %644 = vmatprep.subr.mxu0 0.0
      %645 = vmatpush1.msra.mxu0 0.0
      %646 = vmatprep.subr.mxu0 0.0
      %647 = vmatpush1.msra.mxu0 0.0
      %648 = vmatprep.subr.mxu0 0.0
      %649 = vmatpush1.msra.mxu0 0.0
      %650 = vmatprep.subr.mxu0 0.0
      %651 = vmatpush1.msra.mxu0 0.0
      %652 = vmatprep.mubr.f32.mxu0 0.0
      %653 = vmatmul.mubr.f32.gmra.mrb[0].mxu0 %v586
      %v654 = vpop.f32.mrb[0].mxu0
      %v655 = vadd.f32 0.0, %v654
      %v656 = vpop.f32.mrb[0].mxu0
      %657 = vdwg.mxu0
      %v658 = vrcp.pop %v581
      %v659 = vmul.f32 %v655, %v658
      %660 = vrot.lane.b32.xlu0 %v156, 104
      %v661 = vpop.permute.xlu0 %660
      %662 = vrot.lane.b32.xlu0 %v156, 72
      %v663 = vpop.permute.xlu0 %662
      %v664 = vsel %vm162, %v661, 0
      %v666 = vsel %vm162, %v663, 0
      %668 = vmatprep.subr.mxu0 0.0
      %669 = vmatpush1.xpose.msra.mxu0 %v666
      %670 = vmatprep.subr.mxu0 0.0
      %671 = vmatpush1.xpose.msra.mxu0 0.0
      %672 = vmatprep.subr.mxu0 0.0
      %673 = vmatpush1.xpose.msra.mxu0 0.0
      %674 = vmatprep.subr.mxu0 0.0
      %675 = vmatpush1.xpose.msra.mxu0 0.0
      %676 = vmatprep.subr.mxu0 0.0
      %677 = vmatpush1.xpose.msra.mxu0 0.0
      %678 = vmatprep.subr.mxu0 0.0
      %679 = vmatpush1.xpose.msra.mxu0 0.0
      %680 = vmatprep.subr.mxu0 0.0
      %681 = vmatpush1.xpose.msra.mxu0 0.0
      %682 = vmatprep.subr.mxu0 0.0
      %683 = vmatpush1.xpose.msra.mxu0 0.0
      %684 = vmatprep.subr.mxu0 0.0
      %685 = vmatpush1.xpose.msra.mxu0 0.0
      %686 = vmatprep.subr.mxu0 0.0
      %687 = vmatpush1.xpose.msra.mxu0 0.0
      %688 = vmatprep.subr.mxu0 0.0
      %689 = vmatpush1.xpose.msra.mxu0 0.0
      %690 = vmatprep.subr.mxu0 0.0
      %691 = vmatpush1.xpose.msra.mxu0 0.0
      %692 = vmatprep.subr.mxu0 0.0
      %693 = vmatpush1.xpose.msra.mxu0 0.0
      %694 = vmatprep.subr.mxu0 0.0
      %695 = vmatpush1.xpose.msra.mxu0 0.0
      %696 = vmatprep.subr.mxu0 0.0
      %697 = vmatpush1.xpose.msra.mxu0 0.0
      %698 = vmatprep.subr.mxu0 0.0
      %699 = vmatpush1.xpose.msra.mxu0 0.0
      %700 = vmatprep.subr.mxu0 0.0
      %701 = vmatpush1.xpose.msra.mxu0 0.0
      %702 = vmatprep.subr.mxu0 0.0
      %703 = vmatpush1.xpose.msra.mxu0 0.0
      %704 = vmatprep.subr.mxu0 0.0
      %705 = vmatpush1.xpose.msra.mxu0 0.0
      %706 = vmatprep.subr.mxu0 0.0
      %707 = vmatpush1.xpose.msra.mxu0 0.0
      %708 = vmatprep.subr.mxu0 0.0
      %709 = vmatpush1.xpose.msra.mxu0 0.0
      %710 = vmatprep.subr.mxu0 0.0
      %711 = vmatpush1.xpose.msra.mxu0 0.0
      %712 = vmatprep.subr.mxu0 0.0
      %713 = vmatpush1.xpose.msra.mxu0 0.0
      %714 = vmatprep.subr.mxu0 0.0
      %715 = vmatpush1.xpose.msra.mxu0 0.0
      %716 = vmatprep.subr.mxu0 0.0
      %717 = vmatpush1.xpose.msra.mxu0 0.0
      %718 = vmatprep.subr.mxu0 0.0
      %719 = vmatpush1.xpose.msra.mxu0 0.0
      %720 = vmatprep.subr.mxu0 0.0
      %721 = vmatpush1.xpose.msra.mxu0 0.0
      %722 = vmatprep.subr.mxu0 0.0
      %723 = vmatpush1.xpose.msra.mxu0 0.0
      %724 = vmatprep.subr.mxu0 0.0
      %725 = vmatpush1.xpose.msra.mxu0 0.0
      %726 = vmatprep.subr.mxu0 0.0
      %727 = vmatpush1.xpose.msra.mxu0 0.0
      %728 = vmatprep.subr.mxu0 0.0
      %729 = vmatpush1.xpose.msra.mxu0 0.0
      %730 = vmatprep.subr.mxu0 0.0
      %731 = vmatpush1.xpose.msra.mxu0 0.0
      %732 = vmatprep.mubr.f32.mxu0 0.0
      %733 = vmatmul.mubr.f32.gmra.mrb[0].mxu0 %v664
      %v734 = vpop.f32.mrb[0].mxu0
      %v735 = vadd.f32 0.0, %v734
      %v736 = vpop.f32.mrb[0].mxu0
      %737 = vdwg.mxu0
      %v738 = vmul.f32 %v735, 0.35355338
      %v739 = vsel %vm158, %v738, -1e+30
      %v740 = vsel %vm162, %v739, -inf
      %741 = vmax.xlane.f32.xlu0 %v740
      %v742 = vpop.xlane.xlu0 %741
      %v743 = vsub.f32 %v739, %v742
      %v744 = vmul.f32 %v743, 1.442695
      %v745 = vpow.pop %v744
      %v746 = vsel %vm162, %v745, 0.0
      %747 = vadd.xlane.f32.xlu0 %v746
      %v748 = vpop.xlane.xlu0 %747
      %749 = vrot.lane.b32.xlu0 %v156, 40
      %v750 = vpop.permute.xlu0 %749
      %v753 = vsel %vm162, %v745, 0
      %755 = vmatprep.subr.mxu0 0.0
      %756 = vmatpush1.msra.mxu0 %v750
      %757 = vmatprep.subr.mxu0 0.0
      %758 = vmatpush1.msra.mxu0 0.0
      %759 = vmatprep.subr.mxu0 0.0
      %760 = vmatpush1.msra.mxu0 0.0
      %761 = vmatprep.subr.mxu0 0.0
      %762 = vmatpush1.msra.mxu0 0.0
      %763 = vmatprep.subr.mxu0 0.0
      %764 = vmatpush1.msra.mxu0 0.0
      %765 = vmatprep.subr.mxu0 0.0
      %766 = vmatpush1.msra.mxu0 0.0
      %767 = vmatprep.subr.mxu0 0.0
      %768 = vmatpush1.msra.mxu0 0.0
      %769 = vmatprep.subr.mxu0 0.0
      %770 = vmatpush1.msra.mxu0 0.0
      %771 = vmatprep.subr.mxu0 0.0
      %772 = vmatpush1.msra.mxu0 0.0
      %773 = vmatprep.subr.mxu0 0.0
      %774 = vmatpush1.msra.mxu0 0.0
      %775 = vmatprep.subr.mxu0 0.0
      %776 = vmatpush1.msra.mxu0 0.0
      %777 = vmatprep.subr.mxu0 0.0
      %778 = vmatpush1.msra.mxu0 0.0
      %779 = vmatprep.subr.mxu0 0.0
      %780 = vmatpush1.msra.mxu0 0.0
      %781 = vmatprep.subr.mxu0 0.0
      %782 = vmatpush1.msra.mxu0 0.0
      %783 = vmatprep.subr.mxu0 0.0
      %784 = vmatpush1.msra.mxu0 0.0
      %785 = vmatprep.subr.mxu0 0.0
      %786 = vmatpush1.msra.mxu0 0.0
      %787 = vmatprep.subr.mxu0 0.0
      %788 = vmatpush1.msra.mxu0 0.0
      %789 = vmatprep.subr.mxu0 0.0
      %790 = vmatpush1.msra.mxu0 0.0
      %791 = vmatprep.subr.mxu0 0.0
      %792 = vmatpush1.msra.mxu0 0.0
      %793 = vmatprep.subr.mxu0 0.0
      %794 = vmatpush1.msra.mxu0 0.0
      %795 = vmatprep.subr.mxu0 0.0
      %796 = vmatpush1.msra.mxu0 0.0
      %797 = vmatprep.subr.mxu0 0.0
      %798 = vmatpush1.msra.mxu0 0.0
      %799 = vmatprep.subr.mxu0 0.0
      %800 = vmatpush1.msra.mxu0 0.0
      %801 = vmatprep.subr.mxu0 0.0
      %802 = vmatpush1.msra.mxu0 0.0
      %803 = vmatprep.subr.mxu0 0.0
      %804 = vmatpush1.msra.mxu0 0.0
      %805 = vmatprep.subr.mxu0 0.0
      %806 = vmatpush1.msra.mxu0 0.0
      %807 = vmatprep.subr.mxu0 0.0
      %808 = vmatpush1.msra.mxu0 0.0
      %809 = vmatprep.subr.mxu0 0.0
      %810 = vmatpush1.msra.mxu0 0.0
      %811 = vmatprep.subr.mxu0 0.0
      %812 = vmatpush1.msra.mxu0 0.0
      %813 = vmatprep.subr.mxu0 0.0
      %814 = vmatpush1.msra.mxu0 0.0
      %815 = vmatprep.subr.mxu0 0.0
      %816 = vmatpush1.msra.mxu0 0.0
      %817 = vmatprep.subr.mxu0 0.0
      %818 = vmatpush1.msra.mxu0 0.0
      %819 = vmatprep.mubr.f32.mxu0 0.0
      %820 = vmatmul.mubr.f32.gmra.mrb[0].mxu0 %v753
      %v821 = vpop.f32.mrb[0].mxu0
      %v822 = vadd.f32 0.0, %v821
      %v823 = vpop.f32.mrb[0].mxu0
      %824 = vdwg.mxu0
      %v825 = vrcp.pop %v748
      %v826 = vmul.f32 %v822, %v825
      %828 = vrot.lane.b32.xlu0 %v492, 8
      %v829 = vpop.permute.xlu0 %828
      %832 = vrot.lane.b32.xlu0 %v659, 16
      %v833 = vpop.permute.xlu0 %832
      %836 = vrot.lane.b32.xlu0 %v826, 24
      %v837 = vpop.permute.xlu0 %836
      %v839 = vsel %vm162, %v325, %v829
      %vm840 = vcmask 130048
      %v841 = vsel %vm840, %v839, %v833
      %vm842 = vcmask 195584
      %v843 = vsel %vm842, %v841, %v837
      %vm844 = vcmask 261120
      %845 = vst.msk [vmem:[%s155] sm:$0xff] %vm844, %v843
      %p846 = scmp.lt.s32.totalorder %s13, 1
      %s847 = scalar_select %p846, %s13, 1
      %s848 = smul.addr %s847, 8
      %s849 = scalar_lea.vmem %s2, %s848
      // Predicated region
      $region29: #{decoder_forward.20} parent=27 // pred_check
        %p850 = pneg %p83
      $region30: #{decoder_forward.20} parent=27 // pred_check_branch
        %852 = sbr.rel (%p850) target = $region32
      $region31: #{decoder_forward.20} parent=27 // pred_region
        _
      $region32: #{decoder_forward.20} parent=27 // pred_fallthru
        _
    $region28: #{decoder_forward.20} parent=5 // pred_fallthru
      _
    %p853 = scmp.le.s32.totalorder 2, %s8
    // Predicated region
    $region33: #{decoder_forward.20} parent=5 // pred_check
      %p854 = pneg %p853
    $region34: #{decoder_forward.20} parent=5 // pred_check_branch
      %856 = sbr.rel (%p854) target = $region36
    $region35: #{decoder_forward.20} parent=5 // pred_region
      %s857 = ssub.s32 %s8, 2
      // Predicated region
      $region37: #{decoder_forward.20} parent=35 // pred_check
        %p858 = pneg %p89
      $region38: #{decoder_forward.20} parent=35 // pred_check_branch
        %860 = sbr.rel (%p858) target = $region40
      $region39: #{decoder_forward.20} parent=35 // pred_region
        %p861 = scmp.lt.s32.totalorder %s14, 1
        %s862 = scalar_select %p861, %s14, 1
        %s863 = smul.addr %s862, 8
        %s864 = scalar_lea.vmem %s2, %s863
      $region40: #{decoder_forward.20} parent=35 // pred_fallthru
        _
    $region36: #{decoder_forward.20} parent=5 // pred_fallthru
      _
  $region6: #{decoder_forward.20} parent=0 // loop_footer
    %s12 = sadd.s32 1, %s8
  $region7: #{decoder_forward.20} parent=0 // loop_footer_branch
    %7 = sbr.rel target = $region3
  $region8: #{decoder_forward.20} parent=0 // loop_exit
    _

// kernel: decoder_forward.22
$region0: #{decoder_forward.22}
  #allocation0 [shape = 'u32[]', space=smem, size = 0x4, offset = 0x4, fixed_abs, tag = 'smem constant byte address 0x4 - core index']
  #allocation1 [shape = 'u32[144,128]{1,0:T(1,128)}', space=vmem, size = 0x12000, scoped, tag = 'internal scratch']
  #allocation2 [shape = 'f32[16,32]{1,0:T(8,128)}', space=vmem, size = 0x2000, scoped, tag = 'scratch operand']
  %s0 = inlined_call_operand.vmem [shape: f32[16,32], index: 0, kind: input, shape index: {}]
  %s1 = inlined_call_operand.vmem [shape: f32[32,32], index: 1, kind: input, shape index: {}]
  %s2 = inlined_call_operand.vmem [shape: f32[1,32], index: 2, kind: input, shape index: {}]
  %s3 = inlined_call_operand.vmem [shape: f32[16,32], index: 3, kind: output, shape index: {}]
  %s4 = sld [smem:[#allocation0]]
  $region30: #{decoder_forward.22} parent=0
    _
  %s6 = ssub.s32 1, %s4
  %s7 = scalar_select 0, %s6, %s4
  // Predicated region
  $region2: #{decoder_forward.22} parent=0 // pred_check
    _
  $region3: #{decoder_forward.22} parent=0 // pred_check_branch
    %9 = sbr.rel (0) target = $region5
  $region4: #{decoder_forward.22} parent=0 // pred_region
    _
  $region5: #{decoder_forward.22} parent=0 // pred_fallthru
    _
  // Predicated region
  $region6: #{decoder_forward.22} parent=0 // pred_check
    _
  $region7: #{decoder_forward.22} parent=0 // pred_check_branch
    %11 = sbr.rel (0) target = $region9
  $region8: #{decoder_forward.22} parent=0 // pred_region
    _
  $region9: #{decoder_forward.22} parent=0 // pred_fallthru
    _
  // Predicated region
  $region10: #{decoder_forward.22} parent=0 // pred_check
    _
  $region11: #{decoder_forward.22} parent=0 // pred_check_branch
    %13 = sbr.rel (0) target = $region13
  $region12: #{decoder_forward.22} parent=0 // pred_region
    _
  $region13: #{decoder_forward.22} parent=0 // pred_fallthru
    _
  %p14 = scmp.eq.s32.totalorder 0, 0
  // Predicated region
  $region14: #{decoder_forward.22} parent=0 // pred_check
    %p15 = pneg %p14
  $region15: #{decoder_forward.22} parent=0 // pred_check_branch
    %17 = sbr.rel (%p15) target = $region17
  $region16: #{decoder_forward.22} parent=0 // pred_region
    %vm18 = vcmask 261120
    %19 = vst.msk [vmem:[#allocation2] sm:$0xff] %vm18, 0.0
    %20 = vst.msk [vmem:[#allocation2 + $0x8] sm:$0xff] %vm18, 0.0
  $region17: #{decoder_forward.22} parent=0 // pred_fallthru
    _
  %v21 = vld [vmem:[%s0] sm:$0xff]
  %v22 = vld [vmem:[%s0 + $0x8] sm:$0xff]
  %v23 = vld [vmem:[#allocation2] sm:$0xff]
  %v24 = vld [vmem:[#allocation2 + $0x8] sm:$0xff]
  %v25 = vld [vmem:[%s1] sm:$0xff]
  %v26 = vld [vmem:[%s1 + $0x8] sm:$0xff]
  %v27 = vld [vmem:[%s1 + $0x10] sm:$0xff]
  %v28 = vld [vmem:[%s1 + $0x18] sm:$0xff]
  %vm29 = vcmask 261120
  %v31 = vsel %vm29, %v21, 0
  %v34 = vsel %vm29, %v22, 0
  %36 = vmatprep.subr.mxu0 0.0
  %37 = vmatpush1.msra.mxu0 %v25
  %38 = vmatprep.subr.mxu0 0.0
  %39 = vmatpush1.msra.mxu0 %v26
  %40 = vmatprep.subr.mxu0 0.0
  %41 = vmatpush1.msra.mxu0 %v27
  %42 = vmatprep.subr.mxu0 0.0
  %43 = vmatpush1.msra.mxu0 %v28
  %44 = vmatprep.subr.mxu0 0.0
  %45 = vmatpush1.msra.mxu0 0.0
  %46 = vmatprep.subr.mxu0 0.0
  %47 = vmatpush1.msra.mxu0 0.0
  %48 = vmatprep.subr.mxu0 0.0
  %49 = vmatpush1.msra.mxu0 0.0
  %50 = vmatprep.subr.mxu0 0.0
  %51 = vmatpush1.msra.mxu0 0.0
  %52 = vmatprep.subr.mxu0 0.0
  %53 = vmatpush1.msra.mxu0 0.0
  %54 = vmatprep.subr.mxu0 0.0
  %55 = vmatpush1.msra.mxu0 0.0
  %56 = vmatprep.subr.mxu0 0.0
  %57 = vmatpush1.msra.mxu0 0.0
  %58 = vmatprep.subr.mxu0 0.0
  %59 = vmatpush1.msra.mxu0 0.0
  %60 = vmatprep.subr.mxu0 0.0
  %61 = vmatpush1.msra.mxu0 0.0
  %62 = vmatprep.subr.mxu0 0.0
  %63 = vmatpush1.msra.mxu0 0.0
  %64 = vmatprep.subr.mxu0 0.0
  %65 = vmatpush1.msra.mxu0 0.0
  %66 = vmatprep.subr.mxu0 0.0
  %67 = vmatpush1.msra.mxu0 0.0
  %68 = vmatprep.subr.mxu0 0.0
  %69 = vmatpush1.msra.mxu0 0.0
  %70 = vmatprep.subr.mxu0 0.0
  %71 = vmatpush1.msra.mxu0 0.0
  %72 = vmatprep.subr.mxu0 0.0
  %73 = vmatpush1.msra.mxu0 0.0
  %74 = vmatprep.subr.mxu0 0.0
  %75 = vmatpush1.msra.mxu0 0.0
  %76 = vmatprep.subr.mxu0 0.0
  %77 = vmatpush1.msra.mxu0 0.0
  %78 = vmatprep.subr.mxu0 0.0
  %79 = vmatpush1.msra.mxu0 0.0
  %80 = vmatprep.subr.mxu0 0.0
  %81 = vmatpush1.msra.mxu0 0.0
  %82 = vmatprep.subr.mxu0 0.0
  %83 = vmatpush1.msra.mxu0 0.0
  %84 = vmatprep.subr.mxu0 0.0
  %85 = vmatpush1.msra.mxu0 0.0
  %86 = vmatprep.subr.mxu0 0.0
  %87 = vmatpush1.msra.mxu0 0.0
  %88 = vmatprep.subr.mxu0 0.0
  %89 = vmatpush1.msra.mxu0 0.0
  %90 = vmatprep.subr.mxu0 0.0
  %91 = vmatpush1.msra.mxu0 0.0
  %92 = vmatprep.subr.mxu0 0.0
  %93 = vmatpush1.msra.mxu0 0.0
  %94 = vmatprep.subr.mxu0 0.0
  %95 = vmatpush1.msra.mxu0 0.0
  %96 = vmatprep.subr.mxu0 0.0
  %97 = vmatpush1.msra.mxu0 0.0
  %98 = vmatprep.subr.mxu0 0.0
  %99 = vmatpush1.msra.mxu0 0.0
  %100 = vmatprep.mubr.f32.mxu0 0.0
  %101 = vmatmul.mubr.f32.gmra.mrb[0].mxu0 %v31
  %v102 = vpop.f32.mrb[0].mxu0
  %v103 = vadd.f32 0.0, %v102
  %v104 = vpop.f32.mrb[0].mxu0
  %105 = vmatprep.mubr.f32.mxu0 0.0
  %106 = vmatmul.mubr.f32.gmra.mrb[0].mxu0 %v34
  %v107 = vpop.f32.mrb[0].mxu0
  %v108 = vadd.f32 0.0, %v107
  %v109 = vpop.f32.mrb[0].mxu0
  %110 = vdwg.mxu0
  %v111 = vadd.f32 %v23, %v103
  %v112 = vadd.f32 %v24, %v108
  %113 = vst.msk [vmem:[#allocation2] sm:$0xff] %vm29, %v111
  %114 = vst.msk [vmem:[#allocation2 + $0x8] sm:$0xff] %vm29, %v112
  // Predicated region
  $region18: #{decoder_forward.22} parent=0 // pred_check
    %p115 = pneg %p14
  $region19: #{decoder_forward.22} parent=0 // pred_check_branch
    %117 = sbr.rel (%p115) target = $region21
  $region20: #{decoder_forward.22} parent=0 // pred_region
    %v118 = vld [vmem:[#allocation2] sm:$0xff]
    %v119 = vld [vmem:[#allocation2 + $0x8] sm:$0xff]
    %v120 = vld [vmem:[%s2] sm:$0x1]
    %v122 = vlaneseq
    %v123 = vshrl.u32 %v122, 7
    %v124 = vsub.s32 0, %v123
    %v125 = vrot.slane %v120, %v124
    %v127 = vadd.f32 %v118, %v125
    %v128 = vadd.f32 %v119, %v125
    %129 = vst.msk [vmem:[%s3] sm:$0xff] %vm29, %v127
    %130 = vst.msk [vmem:[%s3 + $0x8] sm:$0xff] %vm29, %v128
  $region21: #{decoder_forward.22} parent=0 // pred_fallthru
    _
  // Predicated region
  $region22: #{decoder_forward.22} parent=0 // pred_check
    _
  $region23: #{decoder_forward.22} parent=0 // pred_check_branch
    %132 = sbr.rel (0) target = $region25
  $region24: #{decoder_forward.22} parent=0 // pred_region
    _
  $region25: #{decoder_forward.22} parent=0 // pred_fallthru
    _
  // Predicated region
  $region26: #{decoder_forward.22} parent=0 // pred_check
    _
  $region27: #{decoder_forward.22} parent=0 // pred_check_branch
    %134 = sbr.rel (0) target = $region29
  $region28: #{decoder_forward.22} parent=0 // pred_region
    _
  $region29: #{decoder_forward.22} parent=0 // pred_fallthru
    _

// kernel: decoder_forward.23
$region0: #{decoder_forward.23}
  #allocation0 [shape = 'u32[]', space=smem, size = 0x4, offset = 0x4, fixed_abs, tag = 'smem constant byte address 0x4 - core index']
  #allocation1 [shape = 'u32[144,128]{1,0:T(1,128)}', space=vmem, size = 0x12000, scoped, tag = 'internal scratch']
  #allocation2 [shape = 'f32[20,64]{1,0:T(8,128)}', space=vmem, size = 0x3000, scoped, tag = 'scratch operand']
  %s0 = inlined_call_operand.vmem [shape: f32[20,32], index: 0, kind: input, shape index: {}]
  %s1 = inlined_call_operand.vmem [shape: f32[32,64], index: 1, kind: input, shape index: {}]
  %s2 = inlined_call_operand.vmem [shape: f32[1,64], index: 2, kind: input, shape index: {}]
  %s3 = inlined_call_operand.vmem [shape: f32[20,64], index: 3, kind: output, shape index: {}]
  %s4 = sld [smem:[#allocation0]]
  $region30: #{decoder_forward.23} parent=0
    _
  %s6 = ssub.s32 1, %s4
  %s7 = scalar_select 0, %s6, %s4
  // Predicated region
  $region2: #{decoder_forward.23} parent=0 // pred_check
    _
  $region3: #{decoder_forward.23} parent=0 // pred_check_branch
    %9 = sbr.rel (0) target = $region5
  $region4: #{decoder_forward.23} parent=0 // pred_region
    _
  $region5: #{decoder_forward.23} parent=0 // pred_fallthru
    _
  // Predicated region
  $region6: #{decoder_forward.23} parent=0 // pred_check
    _
  $region7: #{decoder_forward.23} parent=0 // pred_check_branch
    %11 = sbr.rel (0) target = $region9
  $region8: #{decoder_forward.23} parent=0 // pred_region
    _
  $region9: #{decoder_forward.23} parent=0 // pred_fallthru
    _
  // Predicated region
  $region10: #{decoder_forward.23} parent=0 // pred_check
    _
  $region11: #{decoder_forward.23} parent=0 // pred_check_branch
    %13 = sbr.rel (0) target = $region13
  $region12: #{decoder_forward.23} parent=0 // pred_region
    _
  $region13: #{decoder_forward.23} parent=0 // pred_fallthru
    _
  %p14 = scmp.eq.s32.totalorder 0, 0
  // Predicated region
  $region14: #{decoder_forward.23} parent=0 // pred_check
    %p15 = pneg %p14
  $region15: #{decoder_forward.23} parent=0 // pred_check_branch
    %17 = sbr.rel (%p15) target = $region17
  $region16: #{decoder_forward.23} parent=0 // pred_region
    %vm18 = vcmask 523264
    %19 = vst.msk [vmem:[#allocation2] sm:$0xff] %vm18, 0.0
    %20 = vst.msk [vmem:[#allocation2 + $0x8] sm:$0xff] %vm18, 0.0
    %vm21 = vcmask 519168
    %22 = vst.msk [vmem:[#allocation2 + $0x10] sm:$0xf] %vm21, 0.0
  $region17: #{decoder_forward.23} parent=0 // pred_fallthru
    _
  %v23 = vld [vmem:[%s0] sm:$0xff]
  %v24 = vld [vmem:[%s0 + $0x8] sm:$0xff]
  %v25 = vld [vmem:[%s0 + $0x10] sm:$0xf]
  %v26 = vld [vmem:[#allocation2] sm:$0xff]
  %v27 = vld [vmem:[#allocation2 + $0x8] sm:$0xff]
  %v28 = vld [vmem:[#allocation2 + $0x10] sm:$0xf]
  %v29 = vld [vmem:[%s1] sm:$0xff]
  %v30 = vld [vmem:[%s1 + $0x8] sm:$0xff]
  %v31 = vld [vmem:[%s1 + $0x10] sm:$0xff]
  %v32 = vld [vmem:[%s1 + $0x18] sm:$0xff]
  %vm33 = vcmask 261120
  %v35 = vsel %vm33, %v23, 0
  %v38 = vsel %vm33, %v24, 0
  %v41 = vsel %vm33, %v25, 0
  %43 = vmatprep.subr.mxu0 0.0
  %44 = vmatpush1.msra.mxu0 %v29
  %45 = vmatprep.subr.mxu0 0.0
  %46 = vmatpush1.msra.mxu0 %v30
  %47 = vmatprep.subr.mxu0 0.0
  %48 = vmatpush1.msra.mxu0 %v31
  %49 = vmatprep.subr.mxu0 0.0
  %50 = vmatpush1.msra.mxu0 %v32
  %51 = vmatprep.subr.mxu0 0.0
  %52 = vmatpush1.msra.mxu0 0.0
  %53 = vmatprep.subr.mxu0 0.0
  %54 = vmatpush1.msra.mxu0 0.0
  %55 = vmatprep.subr.mxu0 0.0
  %56 = vmatpush1.msra.mxu0 0.0
  %57 = vmatprep.subr.mxu0 0.0
  %58 = vmatpush1.msra.mxu0 0.0
  %59 = vmatprep.subr.mxu0 0.0
  %60 = vmatpush1.msra.mxu0 0.0
  %61 = vmatprep.subr.mxu0 0.0
  %62 = vmatpush1.msra.mxu0 0.0
  %63 = vmatprep.subr.mxu0 0.0
  %64 = vmatpush1.msra.mxu0 0.0
  %65 = vmatprep.subr.mxu0 0.0
  %66 = vmatpush1.msra.mxu0 0.0
  %67 = vmatprep.subr.mxu0 0.0
  %68 = vmatpush1.msra.mxu0 0.0
  %69 = vmatprep.subr.mxu0 0.0
  %70 = vmatpush1.msra.mxu0 0.0
  %71 = vmatprep.subr.mxu0 0.0
  %72 = vmatpush1.msra.mxu0 0.0
  %73 = vmatprep.subr.mxu0 0.0
  %74 = vmatpush1.msra.mxu0 0.0
  %75 = vmatprep.subr.mxu0 0.0
  %76 = vmatpush1.msra.mxu0 0.0
  %77 = vmatprep.subr.mxu0 0.0
  %78 = vmatpush1.msra.mxu0 0.0
  %79 = vmatprep.subr.mxu0 0.0
  %80 = vmatpush1.msra.mxu0 0.0
  %81 = vmatprep.subr.mxu0 0.0
  %82 = vmatpush1.msra.mxu0 0.0
  %83 = vmatprep.subr.mxu0 0.0
  %84 = vmatpush1.msra.mxu0 0.0
  %85 = vmatprep.subr.mxu0 0.0
  %86 = vmatpush1.msra.mxu0 0.0
  %87 = vmatprep.subr.mxu0 0.0
  %88 = vmatpush1.msra.mxu0 0.0
  %89 = vmatprep.subr.mxu0 0.0
  %90 = vmatpush1.msra.mxu0 0.0
  %91 = vmatprep.subr.mxu0 0.0
  %92 = vmatpush1.msra.mxu0 0.0
  %93 = vmatprep.subr.mxu0 0.0
  %94 = vmatpush1.msra.mxu0 0.0
  %95 = vmatprep.subr.mxu0 0.0
  %96 = vmatpush1.msra.mxu0 0.0
  %97 = vmatprep.subr.mxu0 0.0
  %98 = vmatpush1.msra.mxu0 0.0
  %99 = vmatprep.subr.mxu0 0.0
  %100 = vmatpush1.msra.mxu0 0.0
  %101 = vmatprep.subr.mxu0 0.0
  %102 = vmatpush1.msra.mxu0 0.0
  %103 = vmatprep.subr.mxu0 0.0
  %104 = vmatpush1.msra.mxu0 0.0
  %105 = vmatprep.subr.mxu0 0.0
  %106 = vmatpush1.msra.mxu0 0.0
  %107 = vmatprep.mubr.f32.mxu0 0.0
  %108 = vmatmul.mubr.f32.gmra.mrb[0].mxu0 %v35
  %v109 = vpop.f32.mrb[0].mxu0
  %v110 = vadd.f32 0.0, %v109
  %v111 = vpop.f32.mrb[0].mxu0
  %112 = vmatprep.mubr.f32.mxu0 0.0
  %113 = vmatmul.mubr.f32.gmra.mrb[0].mxu0 %v38
  %v114 = vpop.f32.mrb[0].mxu0
  %v115 = vadd.f32 0.0, %v114
  %v116 = vpop.f32.mrb[0].mxu0
  %117 = vmatprep.mubr.f32.mxu0 0.0
  %118 = vmatmul.mubr.f32.gmra.mrb[0].mxu0 %v41
  %v119 = vpop.f32.mrb[0].mxu0
  %v120 = vadd.f32 0.0, %v119
  %v121 = vpop.f32.mrb[0].mxu0
  %122 = vdwg.mxu0
  %v123 = vadd.f32 %v26, %v110
  %v124 = vadd.f32 %v27, %v115
  %v125 = vadd.f32 %v28, %v120
  %vm126 = vcmask 523264
  %127 = vst.msk [vmem:[#allocation2] sm:$0xff] %vm126, %v123
  %128 = vst.msk [vmem:[#allocation2 + $0x8] sm:$0xff] %vm126, %v124
  %vm129 = vcmask 519168
  %130 = vst.msk [vmem:[#allocation2 + $0x10] sm:$0xf] %vm129, %v125
  // Predicated region
  $region18: #{decoder_forward.23} parent=0 // pred_check
    %p131 = pneg %p14
  $region19: #{decoder_forward.23} parent=0 // pred_check_branch
    %133 = sbr.rel (%p131) target = $region21
  $region20: #{decoder_forward.23} parent=0 // pred_region
    %v134 = vld [vmem:[#allocation2] sm:$0xff]
    %v135 = vld [vmem:[#allocation2 + $0x8] sm:$0xff]
    %v136 = vld [vmem:[#allocation2 + $0x10] sm:$0xf]
    %v137 = vld [vmem:[%s2] sm:$0x1]
    %v139 = vlaneseq
    %v140 = vshrl.u32 %v139, 7
    %v141 = vsub.s32 0, %v140
    %v142 = vrot.slane %v137, %v141
    %v144 = vadd.f32 %v134, %v142
    %v145 = vadd.f32 %v135, %v142
    %v146 = vadd.f32 %v136, %v142
    %147 = vst.msk [vmem:[%s3] sm:$0xff] %vm126, %v144
    %148 = vst.msk [vmem:[%s3 + $0x8] sm:$0xff] %vm126, %v145
    %149 = vst.msk [vmem:[%s3 + $0x10] sm:$0xf] %vm129, %v146
  $region21: #{decoder_forward.23} parent=0 // pred_fallthru
    _
  // Predicated region
  $region22: #{decoder_forward.23} parent=0 // pred_check
    _
  $region23: #{decoder_forward.23} parent=0 // pred_check_branch
    %151 = sbr.rel (0) target = $region25
  $region24: #{decoder_forward.23} parent=0 // pred_region
    _
  $region25: #{decoder_forward.23} parent=0 // pred_fallthru
    _
  // Predicated region
  $region26: #{decoder_forward.23} parent=0 // pred_check
    _
  $region27: #{decoder_forward.23} parent=0 // pred_check_branch
    %153 = sbr.rel (0) target = $region29
  $region28: #{decoder_forward.23} parent=0 // pred_region
    _
  $region29: #{decoder_forward.23} parent=0 // pred_fallthru
    _

// kernel: decoder_forward.26
$region0: #{decoder_forward.26}
  #allocation0 [shape = 'u32[]', space=smem, size = 0x4, offset = 0x4, fixed_abs, tag = 'smem constant byte address 0x4 - core index']
  #allocation1 [shape = 'u32[144,128]{1,0:T(1,128)}', space=vmem, size = 0x12000, scoped, tag = 'internal scratch']
  #allocation2 [shape = 'f32[16,64]{1,0:T(8,128)}', space=vmem, size = 0x2000, scoped, tag = 'scratch operand']
  %s0 = inlined_call_operand.vmem [shape: f32[16,32], index: 0, kind: input, shape index: {}]
  %s1 = inlined_call_operand.vmem [shape: f32[32,64], index: 1, kind: input, shape index: {}]
  %s2 = inlined_call_operand.vmem [shape: f32[1,64], index: 2, kind: input, shape index: {}]
  %s3 = inlined_call_operand.vmem [shape: f32[16,64], index: 3, kind: output, shape index: {}]
  %s4 = sld [smem:[#allocation0]]
  $region30: #{decoder_forward.26} parent=0
    _
  %s6 = ssub.s32 1, %s4
  %s7 = scalar_select 0, %s6, %s4
  // Predicated region
  $region2: #{decoder_forward.26} parent=0 // pred_check
    _
  $region3: #{decoder_forward.26} parent=0 // pred_check_branch
    %9 = sbr.rel (0) target = $region5
  $region4: #{decoder_forward.26} parent=0 // pred_region
    _
  $region5: #{decoder_forward.26} parent=0 // pred_fallthru
    _
  // Predicated region
  $region6: #{decoder_forward.26} parent=0 // pred_check
    _
  $region7: #{decoder_forward.26} parent=0 // pred_check_branch
    %11 = sbr.rel (0) target = $region9
  $region8: #{decoder_forward.26} parent=0 // pred_region
    _
  $region9: #{decoder_forward.26} parent=0 // pred_fallthru
    _
  // Predicated region
  $region10: #{decoder_forward.26} parent=0 // pred_check
    _
  $region11: #{decoder_forward.26} parent=0 // pred_check_branch
    %13 = sbr.rel (0) target = $region13
  $region12: #{decoder_forward.26} parent=0 // pred_region
    _
  $region13: #{decoder_forward.26} parent=0 // pred_fallthru
    _
  %p14 = scmp.eq.s32.totalorder 0, 0
  // Predicated region
  $region14: #{decoder_forward.26} parent=0 // pred_check
    %p15 = pneg %p14
  $region15: #{decoder_forward.26} parent=0 // pred_check_branch
    %17 = sbr.rel (%p15) target = $region17
  $region16: #{decoder_forward.26} parent=0 // pred_region
    %vm18 = vcmask 523264
    %19 = vst.msk [vmem:[#allocation2] sm:$0xff] %vm18, 0.0
    %20 = vst.msk [vmem:[#allocation2 + $0x8] sm:$0xff] %vm18, 0.0
  $region17: #{decoder_forward.26} parent=0 // pred_fallthru
    _
  %v21 = vld [vmem:[%s0] sm:$0xff]
  %v22 = vld [vmem:[%s0 + $0x8] sm:$0xff]
  %v23 = vld [vmem:[#allocation2] sm:$0xff]
  %v24 = vld [vmem:[#allocation2 + $0x8] sm:$0xff]
  %v25 = vld [vmem:[%s1] sm:$0xff]
  %v26 = vld [vmem:[%s1 + $0x8] sm:$0xff]
  %v27 = vld [vmem:[%s1 + $0x10] sm:$0xff]
  %v28 = vld [vmem:[%s1 + $0x18] sm:$0xff]
  %vm29 = vcmask 261120
  %v31 = vsel %vm29, %v21, 0
  %v34 = vsel %vm29, %v22, 0
  %36 = vmatprep.subr.mxu0 0.0
  %37 = vmatpush1.msra.mxu0 %v25
  %38 = vmatprep.subr.mxu0 0.0
  %39 = vmatpush1.msra.mxu0 %v26
  %40 = vmatprep.subr.mxu0 0.0
  %41 = vmatpush1.msra.mxu0 %v27
  %42 = vmatprep.subr.mxu0 0.0
  %43 = vmatpush1.msra.mxu0 %v28
  %44 = vmatprep.subr.mxu0 0.0
  %45 = vmatpush1.msra.mxu0 0.0
  %46 = vmatprep.subr.mxu0 0.0
  %47 = vmatpush1.msra.mxu0 0.0
  %48 = vmatprep.subr.mxu0 0.0
  %49 = vmatpush1.msra.mxu0 0.0
  %50 = vmatprep.subr.mxu0 0.0
  %51 = vmatpush1.msra.mxu0 0.0
  %52 = vmatprep.subr.mxu0 0.0
  %53 = vmatpush1.msra.mxu0 0.0
  %54 = vmatprep.subr.mxu0 0.0
  %55 = vmatpush1.msra.mxu0 0.0
  %56 = vmatprep.subr.mxu0 0.0
  %57 = vmatpush1.msra.mxu0 0.0
  %58 = vmatprep.subr.mxu0 0.0
  %59 = vmatpush1.msra.mxu0 0.0
  %60 = vmatprep.subr.mxu0 0.0
  %61 = vmatpush1.msra.mxu0 0.0
  %62 = vmatprep.subr.mxu0 0.0
  %63 = vmatpush1.msra.mxu0 0.0
  %64 = vmatprep.subr.mxu0 0.0
  %65 = vmatpush1.msra.mxu0 0.0
  %66 = vmatprep.subr.mxu0 0.0
  %67 = vmatpush1.msra.mxu0 0.0
  %68 = vmatprep.subr.mxu0 0.0
  %69 = vmatpush1.msra.mxu0 0.0
  %70 = vmatprep.subr.mxu0 0.0
  %71 = vmatpush1.msra.mxu0 0.0
  %72 = vmatprep.subr.mxu0 0.0
  %73 = vmatpush1.msra.mxu0 0.0
  %74 = vmatprep.subr.mxu0 0.0
  %75 = vmatpush1.msra.mxu0 0.0
  %76 = vmatprep.subr.mxu0 0.0
  %77 = vmatpush1.msra.mxu0 0.0
  %78 = vmatprep.subr.mxu0 0.0
  %79 = vmatpush1.msra.mxu0 0.0
  %80 = vmatprep.subr.mxu0 0.0
  %81 = vmatpush1.msra.mxu0 0.0
  %82 = vmatprep.subr.mxu0 0.0
  %83 = vmatpush1.msra.mxu0 0.0
  %84 = vmatprep.subr.mxu0 0.0
  %85 = vmatpush1.msra.mxu0 0.0
  %86 = vmatprep.subr.mxu0 0.0
  %87 = vmatpush1.msra.mxu0 0.0
  %88 = vmatprep.subr.mxu0 0.0
  %89 = vmatpush1.msra.mxu0 0.0
  %90 = vmatprep.subr.mxu0 0.0
  %91 = vmatpush1.msra.mxu0 0.0
  %92 = vmatprep.subr.mxu0 0.0
  %93 = vmatpush1.msra.mxu0 0.0
  %94 = vmatprep.subr.mxu0 0.0
  %95 = vmatpush1.msra.mxu0 0.0
  %96 = vmatprep.subr.mxu0 0.0
  %97 = vmatpush1.msra.mxu0 0.0
  %98 = vmatprep.subr.mxu0 0.0
  %99 = vmatpush1.msra.mxu0 0.0
  %100 = vmatprep.mubr.f32.mxu0 0.0
  %101 = vmatmul.mubr.f32.gmra.mrb[0].mxu0 %v31
  %v102 = vpop.f32.mrb[0].mxu0
  %v103 = vadd.f32 0.0, %v102
  %v104 = vpop.f32.mrb[0].mxu0
  %105 = vmatprep.mubr.f32.mxu0 0.0
  %106 = vmatmul.mubr.f32.gmra.mrb[0].mxu0 %v34
  %v107 = vpop.f32.mrb[0].mxu0
  %v108 = vadd.f32 0.0, %v107
  %v109 = vpop.f32.mrb[0].mxu0
  %110 = vdwg.mxu0
  %v111 = vadd.f32 %v23, %v103
  %v112 = vadd.f32 %v24, %v108
  %vm113 = vcmask 523264
  %114 = vst.msk [vmem:[#allocation2] sm:$0xff] %vm113, %v111
  %115 = vst.msk [vmem:[#allocation2 + $0x8] sm:$0xff] %vm113, %v112
  // Predicated region
  $region18: #{decoder_forward.26} parent=0 // pred_check
    %p116 = pneg %p14
  $region19: #{decoder_forward.26} parent=0 // pred_check_branch
    %118 = sbr.rel (%p116) target = $region21
  $region20: #{decoder_forward.26} parent=0 // pred_region
    %v119 = vld [vmem:[#allocation2] sm:$0xff]
    %v120 = vld [vmem:[#allocation2 + $0x8] sm:$0xff]
    %v121 = vld [vmem:[%s2] sm:$0x1]
    %v123 = vlaneseq
    %v124 = vshrl.u32 %v123, 7
    %v125 = vsub.s32 0, %v124
    %v126 = vrot.slane %v121, %v125
    %v128 = vadd.f32 %v119, %v126
    %v129 = vadd.f32 %v120, %v126
    %v130 = vmax.f32 %v128, 0.0
    %v131 = vmax.f32 %v129, 0.0
    %132 = vst.msk [vmem:[%s3] sm:$0xff] %vm113, %v130
    %133 = vst.msk [vmem:[%s3 + $0x8] sm:$0xff] %vm113, %v131
  $region21: #{decoder_forward.26} parent=0 // pred_fallthru
    _
  // Predicated region
  $region22: #{decoder_forward.26} parent=0 // pred_check
    _
  $region23: #{decoder_forward.26} parent=0 // pred_check_branch
    %135 = sbr.rel (0) target = $region25
  $region24: #{decoder_forward.26} parent=0 // pred_region
    _
  $region25: #{decoder_forward.26} parent=0 // pred_fallthru
    _
  // Predicated region
  $region26: #{decoder_forward.26} parent=0 // pred_check
    _
  $region27: #{decoder_forward.26} parent=0 // pred_check_branch
    %137 = sbr.rel (0) target = $region29
  $region28: #{decoder_forward.26} parent=0 // pred_region
    _
  $region29: #{decoder_forward.26} parent=0 // pred_fallthru
    _

// kernel: decoder_forward.27
$region0: #{decoder_forward.27}
  #allocation0 [shape = 'u32[]', space=smem, size = 0x4, offset = 0x4, fixed_abs, tag = 'smem constant byte address 0x4 - core index']
  #allocation1 [shape = 'u32[144,128]{1,0:T(1,128)}', space=vmem, size = 0x12000, scoped, tag = 'internal scratch']
  #allocation2 [shape = 'f32[16,32]{1,0:T(8,128)}', space=vmem, size = 0x2000, scoped, tag = 'scratch operand']
  %s0 = inlined_call_operand.vmem [shape: f32[16,64], index: 0, kind: input, shape index: {}]
  %s1 = inlined_call_operand.vmem [shape: f32[64,32], index: 1, kind: input, shape index: {}]
  %s2 = inlined_call_operand.vmem [shape: f32[1,32], index: 2, kind: input, shape index: {}]
  %s3 = inlined_call_operand.vmem [shape: f32[16,32], index: 3, kind: input, shape index: {}]
  %s4 = inlined_call_operand.vmem [shape: f32[1,32], index: 4, kind: input, shape index: {}]
  %s5 = inlined_call_operand.vmem [shape: f32[1,32], index: 5, kind: input, shape index: {}]
  %s6 = inlined_call_operand.vmem [shape: f32[16,32], index: 6, kind: output, shape index: {}]
  %s7 = sld [smem:[#allocation0]]
  $region42: #{decoder_forward.27} parent=0
    _
  %s9 = ssub.s32 1, %s7
  %s10 = scalar_select 0, %s9, %s7
  // Predicated region
  $region2: #{decoder_forward.27} parent=0 // pred_check
    _
  $region3: #{decoder_forward.27} parent=0 // pred_check_branch
    %12 = sbr.rel (0) target = $region5
  $region4: #{decoder_forward.27} parent=0 // pred_region
    _
  $region5: #{decoder_forward.27} parent=0 // pred_fallthru
    _
  // Predicated region
  $region6: #{decoder_forward.27} parent=0 // pred_check
    _
  $region7: #{decoder_forward.27} parent=0 // pred_check_branch
    %14 = sbr.rel (0) target = $region9
  $region8: #{decoder_forward.27} parent=0 // pred_region
    _
  $region9: #{decoder_forward.27} parent=0 // pred_fallthru
    _
  // Predicated region
  $region10: #{decoder_forward.27} parent=0 // pred_check
    _
  $region11: #{decoder_forward.27} parent=0 // pred_check_branch
    %16 = sbr.rel (0) target = $region13
  $region12: #{decoder_forward.27} parent=0 // pred_region
    _
  $region13: #{decoder_forward.27} parent=0 // pred_fallthru
    _
  // Predicated region
  $region14: #{decoder_forward.27} parent=0 // pred_check
    _
  $region15: #{decoder_forward.27} parent=0 // pred_check_branch
    %18 = sbr.rel (0) target = $region17
  $region16: #{decoder_forward.27} parent=0 // pred_region
    _
  $region17: #{decoder_forward.27} parent=0 // pred_fallthru
    _
  // Predicated region
  $region18: #{decoder_forward.27} parent=0 // pred_check
    _
  $region19: #{decoder_forward.27} parent=0 // pred_check_branch
    %20 = sbr.rel (0) target = $region21
  $region20: #{decoder_forward.27} parent=0 // pred_region
    _
  $region21: #{decoder_forward.27} parent=0 // pred_fallthru
    _
  // Predicated region
  $region22: #{decoder_forward.27} parent=0 // pred_check
    _
  $region23: #{decoder_forward.27} parent=0 // pred_check_branch
    %22 = sbr.rel (0) target = $region25
  $region24: #{decoder_forward.27} parent=0 // pred_region
    _
  $region25: #{decoder_forward.27} parent=0 // pred_fallthru
    _
  %p23 = scmp.eq.s32.totalorder 0, 0
  // Predicated region
  $region26: #{decoder_forward.27} parent=0 // pred_check
    %p24 = pneg %p23
  $region27: #{decoder_forward.27} parent=0 // pred_check_branch
    %26 = sbr.rel (%p24) target = $region29
  $region28: #{decoder_forward.27} parent=0 // pred_region
    %vm27 = vcmask 261120
    %28 = vst.msk [vmem:[#allocation2] sm:$0xff] %vm27, 0.0
    %29 = vst.msk [vmem:[#allocation2 + $0x8] sm:$0xff] %vm27, 0.0
  $region29: #{decoder_forward.27} parent=0 // pred_fallthru
    _
  %v30 = vld [vmem:[%s0] sm:$0xff]
  %v31 = vld [vmem:[%s0 + $0x8] sm:$0xff]
  %v32 = vld [vmem:[#allocation2] sm:$0xff]
  %v33 = vld [vmem:[#allocation2 + $0x8] sm:$0xff]
  %v34 = vld [vmem:[%s1] sm:$0xff]
  %v35 = vld [vmem:[%s1 + $0x8] sm:$0xff]
  %v36 = vld [vmem:[%s1 + $0x10] sm:$0xff]
  %v37 = vld [vmem:[%s1 + $0x18] sm:$0xff]
  %v38 = vld [vmem:[%s1 + $0x20] sm:$0xff]
  %v39 = vld [vmem:[%s1 + $0x28] sm:$0xff]
  %v40 = vld [vmem:[%s1 + $0x30] sm:$0xff]
  %v41 = vld [vmem:[%s1 + $0x38] sm:$0xff]
  %vm42 = vcmask 523264
  %v44 = vsel %vm42, %v30, 0
  %v47 = vsel %vm42, %v31, 0
  %49 = vmatprep.subr.mxu0 0.0
  %50 = vmatpush1.msra.mxu0 %v34
  %51 = vmatprep.subr.mxu0 0.0
  %52 = vmatpush1.msra.mxu0 %v35
  %53 = vmatprep.subr.mxu0 0.0
  %54 = vmatpush1.msra.mxu0 %v36
  %55 = vmatprep.subr.mxu0 0.0
  %56 = vmatpush1.msra.mxu0 %v37
  %57 = vmatprep.subr.mxu0 0.0
  %58 = vmatpush1.msra.mxu0 %v38
  %59 = vmatprep.subr.mxu0 0.0
  %60 = vmatpush1.msra.mxu0 %v39
  %61 = vmatprep.subr.mxu0 0.0
  %62 = vmatpush1.msra.mxu0 %v40
  %63 = vmatprep.subr.mxu0 0.0
  %64 = vmatpush1.msra.mxu0 %v41
  %65 = vmatprep.subr.mxu0 0.0
  %66 = vmatpush1.msra.mxu0 0.0
  %67 = vmatprep.subr.mxu0 0.0
  %68 = vmatpush1.msra.mxu0 0.0
  %69 = vmatprep.subr.mxu0 0.0
  %70 = vmatpush1.msra.mxu0 0.0
  %71 = vmatprep.subr.mxu0 0.0
  %72 = vmatpush1.msra.mxu0 0.0
  %73 = vmatprep.subr.mxu0 0.0
  %74 = vmatpush1.msra.mxu0 0.0
  %75 = vmatprep.subr.mxu0 0.0
  %76 = vmatpush1.msra.mxu0 0.0
  %77 = vmatprep.subr.mxu0 0.0
  %78 = vmatpush1.msra.mxu0 0.0
  %79 = vmatprep.subr.mxu0 0.0
  %80 = vmatpush1.msra.mxu0 0.0
  %81 = vmatprep.subr.mxu0 0.0
  %82 = vmatpush1.msra.mxu0 0.0
  %83 = vmatprep.subr.mxu0 0.0
  %84 = vmatpush1.msra.mxu0 0.0
  %85 = vmatprep.subr.mxu0 0.0
  %86 = vmatpush1.msra.mxu0 0.0
  %87 = vmatprep.subr.mxu0 0.0
  %88 = vmatpush1.msra.mxu0 0.0
  %89 = vmatprep.subr.mxu0 0.0
  %90 = vmatpush1.msra.mxu0 0.0
  %91 = vmatprep.subr.mxu0 0.0
  %92 = vmatpush1.msra.mxu0 0.0
  %93 = vmatprep.subr.mxu0 0.0
  %94 = vmatpush1.msra.mxu0 0.0
  %95 = vmatprep.subr.mxu0 0.0
  %96 = vmatpush1.msra.mxu0 0.0
  %97 = vmatprep.subr.mxu0 0.0
  %98 = vmatpush1.msra.mxu0 0.0
  %99 = vmatprep.subr.mxu0 0.0
  %100 = vmatpush1.msra.mxu0 0.0
  %101 = vmatprep.subr.mxu0 0.0
  %102 = vmatpush1.msra.mxu0 0.0
  %103 = vmatprep.subr.mxu0 0.0
  %104 = vmatpush1.msra.mxu0 0.0
  %105 = vmatprep.subr.mxu0 0.0
  %106 = vmatpush1.msra.mxu0 0.0
  %107 = vmatprep.subr.mxu0 0.0
  %108 = vmatpush1.msra.mxu0 0.0
  %109 = vmatprep.subr.mxu0 0.0
  %110 = vmatpush1.msra.mxu0 0.0
  %111 = vmatprep.subr.mxu0 0.0
  %112 = vmatpush1.msra.mxu0 0.0
  %113 = vmatprep.mubr.f32.mxu0 0.0
  %114 = vmatmul.mubr.f32.gmra.mrb[0].mxu0 %v44
  %v115 = vpop.f32.mrb[0].mxu0
  %v116 = vadd.f32 0.0, %v115
  %v117 = vpop.f32.mrb[0].mxu0
  %118 = vmatprep.mubr.f32.mxu0 0.0
  %119 = vmatmul.mubr.f32.gmra.mrb[0].mxu0 %v47
  %v120 = vpop.f32.mrb[0].mxu0
  %v121 = vadd.f32 0.0, %v120
  %v122 = vpop.f32.mrb[0].mxu0
  %123 = vdwg.mxu0
  %v124 = vadd.f32 %v32, %v116
  %v125 = vadd.f32 %v33, %v121
  %vm126 = vcmask 261120
  %127 = vst.msk [vmem:[#allocation2] sm:$0xff] %vm126, %v124
  %128 = vst.msk [vmem:[#allocation2 + $0x8] sm:$0xff] %vm126, %v125
  // Predicated region
  $region30: #{decoder_forward.27} parent=0 // pred_check
    %p129 = pneg %p23
  $region31: #{decoder_forward.27} parent=0 // pred_check_branch
    %131 = sbr.rel (%p129) target = $region33
  $region32: #{decoder_forward.27} parent=0 // pred_region
    %v132 = vld [vmem:[#allocation2] sm:$0xff]
    %v133 = vld [vmem:[#allocation2 + $0x8] sm:$0xff]
    %v134 = vld [vmem:[%s2] sm:$0x1]
    %v136 = vlaneseq
    %v137 = vshrl.u32 %v136, 7
    %v138 = vsub.s32 0, %v137
    %v139 = vrot.slane %v134, %v138
    %v141 = vadd.f32 %v132, %v139
    %v142 = vadd.f32 %v133, %v139
    %v143 = vld [vmem:[%s3] sm:$0xff]
    %v144 = vld [vmem:[%s3 + $0x8] sm:$0xff]
    %v145 = vadd.f32 %v141, %v143
    %v146 = vadd.f32 %v142, %v144
    %v147 = vsel %vm126, %v145, 0.0
    %148 = vadd.xlane.f32.xlu0 %v147
    %v149 = vpop.xlane.xlu0 %148
    %v150 = vsel %vm126, %v146, 0.0
    %151 = vadd.xlane.f32.xlu0 %v150
    %v152 = vpop.xlane.xlu0 %151
    %v153 = vrcp.pop 32.0
    %v154 = vmul.f32 %v149, %v153
    %v155 = vmul.f32 %v152, %v153
    %v156 = vsub.f32 %v145, %v154
    %v157 = vsub.f32 %v146, %v155
    %v158 = vmul.f32 %v156, %v156
    %v159 = vmul.f32 %v157, %v157
    %v160 = vsel %vm126, %v158, 0.0
    %161 = vadd.xlane.f32.xlu0 %v160
    %v162 = vpop.xlane.xlu0 %161
    %v163 = vsel %vm126, %v159, 0.0
    %164 = vadd.xlane.f32.xlu0 %v163
    %v165 = vpop.xlane.xlu0 %164
    %v166 = vmul.f32 %v162, %v153
    %v167 = vmul.f32 %v165, %v153
    %v168 = vadd.f32 %v166, 1e-05
    %v169 = vadd.f32 %v167, 1e-05
    %v170 = vrsqrt.pop %v168
    %v171 = vrsqrt.pop %v169
    %v172 = vmul.f32 %v156, %v170
    %v173 = vmul.f32 %v157, %v171
    %v174 = vld [vmem:[%s4] sm:$0x1]
    %v176 = vlaneseq
    %v177 = vshrl.u32 %v176, 7
    %v178 = vsub.s32 0, %v177
    %v179 = vrot.slane %v174, %v178
    %v181 = vmul.f32 %v172, %v179
    %v182 = vmul.f32 %v173, %v179
    %v183 = vld [vmem:[%s5] sm:$0x1]
    %v185 = vlaneseq
    %v186 = vshrl.u32 %v185, 7
    %v187 = vsub.s32 0, %v186
    %v188 = vrot.slane %v183, %v187
    %v190 = vadd.f32 %v181, %v188
    %v191 = vadd.f32 %v182, %v188
    %192 = vst.msk [vmem:[%s6] sm:$0xff] %vm126, %v190
    %193 = vst.msk [vmem:[%s6 + $0x8] sm:$0xff] %vm126, %v191
  $region33: #{decoder_forward.27} parent=0 // pred_fallthru
    _
  // Predicated region
  $region34: #{decoder_forward.27} parent=0 // pred_check
    _
  $region35: #{decoder_forward.27} parent=0 // pred_check_branch
    %195 = sbr.rel (0) target = $region37
  $region36: #{decoder_forward.27} parent=0 // pred_region
    _
  $region37: #{decoder_forward.27} parent=0 // pred_fallthru
    _
  // Predicated region
  $region38: #{decoder_forward.27} parent=0 // pred_check
    _
  $region39: #{decoder_forward.27} parent=0 // pred_check_branch
    %197 = sbr.rel (0) target = $region41
  $region40: #{decoder_forward.27} parent=0 // pred_region
    _
  $region41: #{decoder_forward.27} parent=0 // pred_fallthru
    _

// kernel: decoder_forward.24
$region0: #{decoder_forward.24}
  #allocation0 [shape = 'u32[]', space=smem, size = 0x4, offset = 0x4, fixed_abs, tag = 'smem constant byte address 0x4 - core index']
  #allocation1 [shape = 'u32[144,128]{1,0:T(1,128)}', space=vmem, size = 0x12000, scoped, tag = 'internal scratch']
  %s0 = inlined_call_operand.vmem [shape: f32[2,8,32], index: 0, kind: input, shape index: {}]
  %s1 = inlined_call_operand.vmem [shape: f32[2,10,64], index: 1, kind: input, shape index: {}]
  %s2 = inlined_call_operand.vmem [shape: s32[2,1,10], index: 2, kind: input, shape index: {}]
  %s3 = inlined_call_operand.vmem [shape: f32[2,8,32], index: 3, kind: output, shape index: {}]
  %s4 = sld [smem:[#allocation0]]
  $region45: #{decoder_forward.24} parent=0
    _
  %s6 = ssub.s32 1, %s4
  %s7 = scalar_select 0, %s6, %s4
  loop: start=0, step=1, limit=4
  $region2: #{decoder_forward.24} parent=0 // loop_pre_header
    _
  $region3: #{decoder_forward.24} parent=0 // loop_header
    %s9 = sphi 0, %s13
    %p10 = scmp.ge.s32.totalorder %s9, 4
    %s19 = sphi 0, %s21
    %s22 = sphi 0, %s19
    %s23 = sphi 0, %s22
    %s39 = sphi 0, %s23
    %s45 = sphi 0, %s47
    %s48 = sphi 0, %s45
    %s49 = sphi 0, %s48
    %s65 = sphi 0, %s49
    %s71 = sphi 0, %s73
    %s74 = sphi 0, %s71
    %s75 = sphi 0, %s74
    %s91 = sphi 0, %s75
    %s97 = sphi 0, %s99
    %s100 = sphi 0, %s97
    %s101 = sphi 0, %s100
    %s117 = sphi 0, %s101
  $region4: #{decoder_forward.24} parent=0 // loop_header_branch
    %12 = sbr.rel (%p10) target = $region8
  $region5: #{decoder_forward.24} parent=0 // loop_body
    %s14 = ssub.s32 %s9, 1
    %s15 = ssub.s32 %s9, 2
    %s16 = sadd.s32 %s9, 1
    %s17 = ssub.s32 %s9, %s16
    %p18 = scmp.eq.s32.totalorder %s17, 0
    %s20 = sadd.s32 %s19, 1
    %s21 = scalar_select %p18, %s19, %s20
    %p24 = pneg %p18
    %p25 = scmp.eq.s32.totalorder %s9, 1
    %p26 = por %p24, %p25
    %p27 = scmp.ne.s32.totalorder %s19, %s22
    %p28 = scmp.eq.s32.totalorder %s9, 0
    %p29 = por %p27, %p28
    %p30 = scmp.ne.s32.totalorder %s19, %s22
    %p31 = scmp.eq.s32.totalorder %s14, 1
    %p32 = por %p30, %p31
    %p33 = scmp.ne.s32.totalorder %s22, %s23
    %p34 = scmp.eq.s32.totalorder %s14, 0
    %p35 = por %p33, %p34
    %p36 = scmp.ne.s32.totalorder %s22, %s23
    %p37 = scmp.eq.s32.totalorder %s15, 1
    %p38 = por %p36, %p37
    %p40 = scmp.ne.s32.totalorder %s23, %s39
    %p41 = scmp.eq.s32.totalorder %s15, 0
    %p42 = por %p40, %p41
    %s43 = ssub.s32 %s9, %s16
    %p44 = scmp.eq.s32.totalorder %s43, 0
    %s46 = sadd.s32 %s45, 1
    %s47 = scalar_select %p44, %s45, %s46
    %p50 = pneg %p44
    %p51 = scmp.eq.s32.totalorder %s9, 1
    %p52 = por %p50, %p51
    %p53 = scmp.ne.s32.totalorder %s45, %s48
    %p54 = scmp.eq.s32.totalorder %s9, 0
    %p55 = por %p53, %p54
    %p56 = scmp.ne.s32.totalorder %s45, %s48
    %p57 = scmp.eq.s32.totalorder %s14, 1
    %p58 = por %p56, %p57
    %p59 = scmp.ne.s32.totalorder %s48, %s49
    %p60 = scmp.eq.s32.totalorder %s14, 0
    %p61 = por %p59, %p60
    %p62 = scmp.ne.s32.totalorder %s48, %s49
    %p63 = scmp.eq.s32.totalorder %s15, 1
    %p64 = por %p62, %p63
    %p66 = scmp.ne.s32.totalorder %s49, %s65
    %p67 = scmp.eq.s32.totalorder %s15, 0
    %p68 = por %p66, %p67
    %s69 = ssub.s32 %s9, %s16
    %p70 = scmp.eq.s32.totalorder %s69, 0
    %s72 = sadd.s32 %s71, 1
    %s73 = scalar_select %p70, %s71, %s72
    %p76 = pneg %p70
    %p77 = scmp.eq.s32.totalorder %s9, 1
    %p78 = por %p76, %p77
    %p79 = scmp.ne.s32.totalorder %s71, %s74
    %p80 = scmp.eq.s32.totalorder %s9, 0
    %p81 = por %p79, %p80
    %p82 = scmp.ne.s32.totalorder %s71, %s74
    %p83 = scmp.eq.s32.totalorder %s14, 1
    %p84 = por %p82, %p83
    %p85 = scmp.ne.s32.totalorder %s74, %s75
    %p86 = scmp.eq.s32.totalorder %s14, 0
    %p87 = por %p85, %p86
    %p88 = scmp.ne.s32.totalorder %s74, %s75
    %p89 = scmp.eq.s32.totalorder %s15, 1
    %p90 = por %p88, %p89
    %p92 = scmp.ne.s32.totalorder %s75, %s91
    %p93 = scmp.eq.s32.totalorder %s15, 0
    %p94 = por %p92, %p93
    %s95 = ssub.s32 %s9, %s16
    %p96 = scmp.eq.s32.totalorder %s95, 0
    %s98 = sadd.s32 %s97, 1
    %s99 = scalar_select %p96, %s97, %s98
    %p102 = pneg %p96
    %p103 = scmp.eq.s32.totalorder %s9, 1
    %p104 = por %p102, %p103
    %p105 = scmp.ne.s32.totalorder %s97, %s100
    %p106 = scmp.eq.s32.totalorder %s9, 0
    %p107 = por %p105, %p106
    %p108 = scmp.ne.s32.totalorder %s97, %s100
    %p109 = scmp.eq.s32.totalorder %s14, 1
    %p110 = por %p108, %p109
    %p111 = scmp.ne.s32.totalorder %s100, %s101
    %p112 = scmp.eq.s32.totalorder %s14, 0
    %p113 = por %p111, %p112
    %p114 = scmp.ne.s32.totalorder %s100, %s101
    %p115 = scmp.eq.s32.totalorder %s15, 1
    %p116 = por %p114, %p115
    %p118 = scmp.ne.s32.totalorder %s101, %s117
    %p119 = scmp.eq.s32.totalorder %s15, 0
    %p120 = por %p118, %p119
    %p121 = scmp.le.s32.totalorder 1, %s9
    %p122 = scmp.lt.s32.totalorder %s9, 3
    %p123 = pnand %p121, %p122
    %p124 = pneg %p123
    // Predicated region
    $region9: #{decoder_forward.24} parent=5 // pred_check
      _
    $region10: #{decoder_forward.24} parent=5 // pred_check_branch
      %126 = sbr.rel (%p123) target = $region12
    $region11: #{decoder_forward.24} parent=5 // pred_region
      %s127 = ssub.s32 %s9, 1
    $region12: #{decoder_forward.24} parent=5 // pred_fallthru
      _
    %p128 = scmp.lt.s32.totalorder %s9, 2
    // Predicated region
    $region13: #{decoder_forward.24} parent=5 // pred_check
      %p129 = pneg %p128
    $region14: #{decoder_forward.24} parent=5 // pred_check_branch
      %131 = sbr.rel (%p129) target = $region16
    $region15: #{decoder_forward.24} parent=5 // pred_region
      // Predicated region
      $region17: #{decoder_forward.24} parent=15 // pred_check
        %p132 = pneg %p29
      $region18: #{decoder_forward.24} parent=15 // pred_check_branch
        %134 = sbr.rel (%p132) target = $region20
      $region19: #{decoder_forward.24} parent=15 // pred_region
        %p135 = scmp.lt.s32.totalorder %s9, 1
        %s136 = scalar_select %p135, %s9, 1
        %s137 = smul.addr %s136, 8
        %s138 = scalar_lea.vmem %s0, %s137
      $region20: #{decoder_forward.24} parent=15 // pred_fallthru
        _
      // Predicated region
      $region21: #{decoder_forward.24} parent=15 // pred_check
        %p139 = pneg %p55
      $region22: #{decoder_forward.24} parent=15 // pred_check_branch
        %141 = sbr.rel (%p139) target = $region24
      $region23: #{decoder_forward.24} parent=15 // pred_region
        %p142 = scmp.lt.s32.totalorder %s9, 1
        %s143 = scalar_select %p142, %s9, 1
        %s144 = smul.addr %s143, 2
        %s145 = smul.addr %s144, 8
        %s146 = scalar_lea.vmem %s1, %s145
      $region24: #{decoder_forward.24} parent=15 // pred_fallthru
        _
      // Predicated region
      $region25: #{decoder_forward.24} parent=15 // pred_check
        %p147 = pneg %p81
      $region26: #{decoder_forward.24} parent=15 // pred_check_branch
        %149 = sbr.rel (%p147) target = $region28
      $region27: #{decoder_forward.24} parent=15 // pred_region
        %p150 = scmp.lt.s32.totalorder %s9, 1
        %s151 = scalar_select %p150, %s9, 1
        %s152 = scalar_lea.vmem %s2, %s151
      $region28: #{decoder_forward.24} parent=15 // pred_fallthru
        _
    $region16: #{decoder_forward.24} parent=5 // pred_fallthru
      _
    %p153 = scmp.le.s32.totalorder 1, %s9
    %p154 = scmp.lt.s32.totalorder %s9, 3
    %p155 = pnand %p153, %p154
    %p156 = pneg %p155
    // Predicated region
    $region29: #{decoder_forward.24} parent=5 // pred_check
      _
    $region30: #{decoder_forward.24} parent=5 // pred_check_branch
      %158 = sbr.rel (%p155) target = $region32
    $region31: #{decoder_forward.24} parent=5 // pred_region
      %s159 = ssub.s32 %s9, 1
      %p160 = scmp.lt.s32.totalorder %s14, 1
      %s161 = scalar_select %p160, %s14, 1
      %s162 = smul.addr %s161, 8
      %s163 = scalar_lea.vmem %s0, %s162
      %p164 = pneg %p35
      %p165 = pneg %p32
      %p166 = scmp.lt.s32.totalorder %s14, 1
      %s167 = scalar_select %p166, %s14, 1
      %s168 = smul.addr %s167, 2
      %s169 = smul.addr %s168, 8
      %s170 = scalar_lea.vmem %s1, %s169
      %p171 = pneg %p61
      %p172 = pneg %p58
      %p173 = scmp.lt.s32.totalorder %s14, 1
      %s174 = scalar_select %p173, %s14, 1
      %s175 = scalar_lea.vmem %s2, %s174
      %p176 = pneg %p87
      %p177 = pneg %p84
      %p178 = pneg %p113
      %p179 = pneg %p110
      %p180 = scmp.lt.s32.totalorder %s14, 1
      %s181 = scalar_select %p180, %s14, 1
      %s182 = smul.addr %s181, 8
      %s183 = scalar_lea.vmem %s3, %s182
      %p184 = scmp.lt.s32.totalorder %s14, 1
      %s185 = scalar_select %p184, %s14, 1
      %s186 = smul.addr %s185, 8
      %s187 = scalar_lea.vmem %s0, %s186
      %p188 = scmp.lt.s32.totalorder %s14, 1
      %s189 = scalar_select %p188, %s14, 1
      %s190 = smul.addr %s189, 2
      %s191 = smul.addr %s190, 8
      %s192 = scalar_lea.vmem %s1, %s191
      %p193 = scmp.lt.s32.totalorder %s14, 1
      %s194 = scalar_select %p193, %s14, 1
      %s195 = scalar_lea.vmem %s2, %s194
      %p196 = scmp.lt.s32.totalorder %s14, 1
      %s197 = scalar_select %p196, %s14, 1
      %s198 = smul.addr %s197, 8
      %s199 = scalar_lea.vmem %s3, %s198
      %v200 = vld [vmem:[%s192] sm:$0xff]
      %v201 = vld [vmem:[%s192 + $0x8] sm:$0x3]
      %v202 = vld [vmem:[%s187] sm:$0xff]
      %v203 = vld [vmem:[%s195] sm:$0x1]
      %vm204 = vcmp.ne.s32.totalorder %v203, 0
      %vm205 = vcmask 64512
      %v207 = vsel %vm205, %v202, 0
      %v210 = vsel %vm205, %v200, 0
      %v213 = vsel %vm205, %v201, 0
      %215 = vmatprep.subr.mxu0 0.0
      %216 = vmatpush1.xpose.msra.mxu0 %v210
      %217 = vmatprep.subr.mxu0 0.0
      %218 = vmatpush1.xpose.msra.mxu0 %v213
      %219 = vmatprep.subr.mxu0 0.0
      %220 = vmatpush1.xpose.msra.mxu0 0.0
      %221 = vmatprep.subr.mxu0 0.0
      %222 = vmatpush1.xpose.msra.mxu0 0.0
      %223 = vmatprep.subr.mxu0 0.0
      %224 = vmatpush1.xpose.msra.mxu0 0.0
      %225 = vmatprep.subr.mxu0 0.0
      %226 = vmatpush1.xpose.msra.mxu0 0.0
      %227 = vmatprep.subr.mxu0 0.0
      %228 = vmatpush1.xpose.msra.mxu0 0.0
      %229 = vmatprep.subr.mxu0 0.0
      %230 = vmatpush1.xpose.msra.mxu0 0.0
      %231 = vmatprep.subr.mxu0 0.0
      %232 = vmatpush1.xpose.msra.mxu0 0.0
      %233 = vmatprep.subr.mxu0 0.0
      %234 = vmatpush1.xpose.msra.mxu0 0.0
      %235 = vmatprep.subr.mxu0 0.0
      %236 = vmatpush1.xpose.msra.mxu0 0.0
      %237 = vmatprep.subr.mxu0 0.0
      %238 = vmatpush1.xpose.msra.mxu0 0.0
      %239 = vmatprep.subr.mxu0 0.0
      %240 = vmatpush1.xpose.msra.mxu0 0.0
      %241 = vmatprep.subr.mxu0 0.0
      %242 = vmatpush1.xpose.msra.mxu0 0.0
      %243 = vmatprep.subr.mxu0 0.0
      %244 = vmatpush1.xpose.msra.mxu0 0.0
      %245 = vmatprep.subr.mxu0 0.0
      %246 = vmatpush1.xpose.msra.mxu0 0.0
      %247 = vmatprep.subr.mxu0 0.0
      %248 = vmatpush1.xpose.msra.mxu0 0.0
      %249 = vmatprep.subr.mxu0 0.0
      %250 = vmatpush1.xpose.msra.mxu0 0.0
      %251 = vmatprep.subr.mxu0 0.0
      %252 = vmatpush1.xpose.msra.mxu0 0.0
      %253 = vmatprep.subr.mxu0 0.0
      %254 = vmatpush1.xpose.msra.mxu0 0.0
      %255 = vmatprep.subr.mxu0 0.0
      %256 = vmatpush1.xpose.msra.mxu0 0.0
      %257 = vmatprep.subr.mxu0 0.0
      %258 = vmatpush1.xpose.msra.mxu0 0.0
      %259 = vmatprep.subr.mxu0 0.0
      %260 = vmatpush1.xpose.msra.mxu0 0.0
      %261 = vmatprep.subr.mxu0 0.0
      %262 = vmatpush1.xpose.msra.mxu0 0.0
      %263 = vmatprep.subr.mxu0 0.0
      %264 = vmatpush1.xpose.msra.mxu0 0.0
      %265 = vmatprep.subr.mxu0 0.0
      %266 = vmatpush1.xpose.msra.mxu0 0.0
      %267 = vmatprep.subr.mxu0 0.0
      %268 = vmatpush1.xpose.msra.mxu0 0.0
      %269 = vmatprep.subr.mxu0 0.0
      %270 = vmatpush1.xpose.msra.mxu0 0.0
      %271 = vmatprep.subr.mxu0 0.0
      %272 = vmatpush1.xpose.msra.mxu0 0.0
      %273 = vmatprep.subr.mxu0 0.0
      %274 = vmatpush1.xpose.msra.mxu0 0.0
      %275 = vmatprep.subr.mxu0 0.0
      %276 = vmatpush1.xpose.msra.mxu0 0.0
      %277 = vmatprep.subr.mxu0 0.0
      %278 = vmatpush1.xpose.msra.mxu0 0.0
      %279 = vmatprep.mubr.f32.mxu0 0.0
      %280 = vmatmul.mubr.f32.gmra.mrb[0].mxu0 %v207
      %v281 = vpop.f32.mrb[0].mxu0
      %v282 = vadd.f32 0.0, %v281
      %v283 = vpop.f32.mrb[0].mxu0
      %284 = vdwg.mxu0
      %v285 = vmul.f32 %v282, 0.35355338
      %v286 = vsel %vm204, 1, 0
      %v287 = vlaneseq
      %v288 = vshrl.u32 %v287, 7
      %v289 = vsub.s32 0, %v288
      %v290 = vrot.slane %v286, %v289
      %vm291 = vcmp.eq.s32.totalorder %v290, 1
      %v292 = vsel %vm291, %v285, -1e+30
      %vm293 = vcmask 80896
      %v294 = vsel %vm293, %v292, -inf
      %295 = vmax.xlane.f32.xlu0 %v294
      %v296 = vpop.xlane.xlu0 %295
      %v297 = vsub.f32 %v292, %v296
      %v298 = vmul.f32 %v297, 1.442695
      %v299 = vpow.pop %v298
      %v300 = vsel %vm293, %v299, 0.0
      %301 = vadd.xlane.f32.xlu0 %v300
      %v302 = vpop.xlane.xlu0 %301
      %303 = vrot.lane.b32.xlu0 %v200, 96
      %v304 = vpop.permute.xlu0 %303
      %305 = vrot.lane.b32.xlu0 %v201, 96
      %v306 = vpop.permute.xlu0 %305
      %v309 = vsel %vm293, %v299, 0
      %vm311 = vcmask 1041408
      %v312 = vsel %vm311, %v306, 0
      %314 = vmatprep.subr.mxu0 0.0
      %315 = vmatpush1.msra.mxu0 %v304
      %316 = vmatprep.subr.mxu0 0.0
      %317 = vmatpush1.msra.mxu0 %v312
      %318 = vmatprep.subr.mxu0 0.0
      %319 = vmatpush1.msra.mxu0 0.0
      %320 = vmatprep.subr.mxu0 0.0
      %321 = vmatpush1.msra.mxu0 0.0
      %322 = vmatprep.subr.mxu0 0.0
      %323 = vmatpush1.msra.mxu0 0.0
      %324 = vmatprep.subr.mxu0 0.0
      %325 = vmatpush1.msra.mxu0 0.0
      %326 = vmatprep.subr.mxu0 0.0
      %327 = vmatpush1.msra.mxu0 0.0
      %328 = vmatprep.subr.mxu0 0.0
      %329 = vmatpush1.msra.mxu0 0.0
      %330 = vmatprep.subr.mxu0 0.0
      %331 = vmatpush1.msra.mxu0 0.0
      %332 = vmatprep.subr.mxu0 0.0
      %333 = vmatpush1.msra.mxu0 0.0
      %334 = vmatprep.subr.mxu0 0.0
      %335 = vmatpush1.msra.mxu0 0.0
      %336 = vmatprep.subr.mxu0 0.0
      %337 = vmatpush1.msra.mxu0 0.0
      %338 = vmatprep.subr.mxu0 0.0
      %339 = vmatpush1.msra.mxu0 0.0
      %340 = vmatprep.subr.mxu0 0.0
      %341 = vmatpush1.msra.mxu0 0.0
      %342 = vmatprep.subr.mxu0 0.0
      %343 = vmatpush1.msra.mxu0 0.0
      %344 = vmatprep.subr.mxu0 0.0
      %345 = vmatpush1.msra.mxu0 0.0
      %346 = vmatprep.subr.mxu0 0.0
      %347 = vmatpush1.msra.mxu0 0.0
      %348 = vmatprep.subr.mxu0 0.0
      %349 = vmatpush1.msra.mxu0 0.0
      %350 = vmatprep.subr.mxu0 0.0
      %351 = vmatpush1.msra.mxu0 0.0
      %352 = vmatprep.subr.mxu0 0.0
      %353 = vmatpush1.msra.mxu0 0.0
      %354 = vmatprep.subr.mxu0 0.0
      %355 = vmatpush1.msra.mxu0 0.0
      %356 = vmatprep.subr.mxu0 0.0
      %357 = vmatpush1.msra.mxu0 0.0
      %358 = vmatprep.subr.mxu0 0.0
      %359 = vmatpush1.msra.mxu0 0.0
      %360 = vmatprep.subr.mxu0 0.0
      %361 = vmatpush1.msra.mxu0 0.0
      %362 = vmatprep.subr.mxu0 0.0
      %363 = vmatpush1.msra.mxu0 0.0
      %364 = vmatprep.subr.mxu0 0.0
      %365 = vmatpush1.msra.mxu0 0.0
      %366 = vmatprep.subr.mxu0 0.0
      %367 = vmatpush1.msra.mxu0 0.0
      %368 = vmatprep.subr.mxu0 0.0
      %369 = vmatpush1.msra.mxu0 0.0
      %370 = vmatprep.subr.mxu0 0.0
      %371 = vmatpush1.msra.mxu0 0.0
      %372 = vmatprep.subr.mxu0 0.0
      %373 = vmatpush1.msra.mxu0 0.0
      %374 = vmatprep.subr.mxu0 0.0
      %375 = vmatpush1.msra.mxu0 0.0
      %376 = vmatprep.subr.mxu0 0.0
      %377 = vmatpush1.msra.mxu0 0.0
      %378 = vmatprep.mubr.f32.mxu0 0.0
      %379 = vmatmul.mubr.f32.gmra.mrb[0].mxu0 %v309
      %v380 = vpop.f32.mrb[0].mxu0
      %v381 = vadd.f32 0.0, %v380
      %v382 = vpop.f32.mrb[0].mxu0
      %383 = vdwg.mxu0
      %v384 = vrcp.pop %v302
      %v385 = vmul.f32 %v381, %v384
      %386 = vrot.lane.b32.xlu0 %v202, 120
      %v387 = vpop.permute.xlu0 %386
      %388 = vrot.lane.b32.xlu0 %v200, 120
      %v389 = vpop.permute.xlu0 %388
      %390 = vrot.lane.b32.xlu0 %v201, 120
      %v391 = vpop.permute.xlu0 %390
      %v392 = vsel %vm205, %v387, 0
      %v394 = vsel %vm205, %v389, 0
      %v396 = vsel %vm205, %v391, 0
      %398 = vmatprep.subr.mxu0 0.0
      %399 = vmatpush1.xpose.msra.mxu0 %v394
      %400 = vmatprep.subr.mxu0 0.0
      %401 = vmatpush1.xpose.msra.mxu0 %v396
      %402 = vmatprep.subr.mxu0 0.0
      %403 = vmatpush1.xpose.msra.mxu0 0.0
      %404 = vmatprep.subr.mxu0 0.0
      %405 = vmatpush1.xpose.msra.mxu0 0.0
      %406 = vmatprep.subr.mxu0 0.0
      %407 = vmatpush1.xpose.msra.mxu0 0.0
      %408 = vmatprep.subr.mxu0 0.0
      %409 = vmatpush1.xpose.msra.mxu0 0.0
      %410 = vmatprep.subr.mxu0 0.0
      %411 = vmatpush1.xpose.msra.mxu0 0.0
      %412 = vmatprep.subr.mxu0 0.0
      %413 = vmatpush1.xpose.msra.mxu0 0.0
      %414 = vmatprep.subr.mxu0 0.0
      %415 = vmatpush1.xpose.msra.mxu0 0.0
      %416 = vmatprep.subr.mxu0 0.0
      %417 = vmatpush1.xpose.msra.mxu0 0.0
      %418 = vmatprep.subr.mxu0 0.0
      %419 = vmatpush1.xpose.msra.mxu0 0.0
      %420 = vmatprep.subr.mxu0 0.0
      %421 = vmatpush1.xpose.msra.mxu0 0.0
      %422 = vmatprep.subr.mxu0 0.0
      %423 = vmatpush1.xpose.msra.mxu0 0.0
      %424 = vmatprep.subr.mxu0 0.0
      %425 = vmatpush1.xpose.msra.mxu0 0.0
      %426 = vmatprep.subr.mxu0 0.0
      %427 = vmatpush1.xpose.msra.mxu0 0.0
      %428 = vmatprep.subr.mxu0 0.0
      %429 = vmatpush1.xpose.msra.mxu0 0.0
      %430 = vmatprep.subr.mxu0 0.0
      %431 = vmatpush1.xpose.msra.mxu0 0.0
      %432 = vmatprep.subr.mxu0 0.0
      %433 = vmatpush1.xpose.msra.mxu0 0.0
      %434 = vmatprep.subr.mxu0 0.0
      %435 = vmatpush1.xpose.msra.mxu0 0.0
      %436 = vmatprep.subr.mxu0 0.0
      %437 = vmatpush1.xpose.msra.mxu0 0.0
      %438 = vmatprep.subr.mxu0 0.0
      %439 = vmatpush1.xpose.msra.mxu0 0.0
      %440 = vmatprep.subr.mxu0 0.0
      %441 = vmatpush1.xpose.msra.mxu0 0.0
      %442 = vmatprep.subr.mxu0 0.0
      %443 = vmatpush1.xpose.msra.mxu0 0.0
      %444 = vmatprep.subr.mxu0 0.0
      %445 = vmatpush1.xpose.msra.mxu0 0.0
      %446 = vmatprep.subr.mxu0 0.0
      %447 = vmatpush1.xpose.msra.mxu0 0.0
      %448 = vmatprep.subr.mxu0 0.0
      %449 = vmatpush1.xpose.msra.mxu0 0.0
      %450 = vmatprep.subr.mxu0 0.0
      %451 = vmatpush1.xpose.msra.mxu0 0.0
      %452 = vmatprep.subr.mxu0 0.0
      %453 = vmatpush1.xpose.msra.mxu0 0.0
      %454 = vmatprep.subr.mxu0 0.0
      %455 = vmatpush1.xpose.msra.mxu0 0.0
      %456 = vmatprep.subr.mxu0 0.0
      %457 = vmatpush1.xpose.msra.mxu0 0.0
      %458 = vmatprep.subr.mxu0 0.0
      %459 = vmatpush1.xpose.msra.mxu0 0.0
      %460 = vmatprep.subr.mxu0 0.0
      %461 = vmatpush1.xpose.msra.mxu0 0.0
      %462 = vmatprep.mubr.f32.mxu0 0.0
      %463 = vmatmul.mubr.f32.gmra.mrb[0].mxu0 %v392
      %v464 = vpop.f32.mrb[0].mxu0
      %v465 = vadd.f32 0.0, %v464
      %v466 = vpop.f32.mrb[0].mxu0
      %467 = vdwg.mxu0
      %v468 = vmul.f32 %v465, 0.35355338
      %v469 = vsel %vm291, %v468, -1e+30
      %v470 = vsel %vm293, %v469, -inf
      %471 = vmax.xlane.f32.xlu0 %v470
      %v472 = vpop.xlane.xlu0 %471
      %v473 = vsub.f32 %v469, %v472
      %v474 = vmul.f32 %v473, 1.442695
      %v475 = vpow.pop %v474
      %v476 = vsel %vm293, %v475, 0.0
      %477 = vadd.xlane.f32.xlu0 %v476
      %v478 = vpop.xlane.xlu0 %477
      %479 = vrot.lane.b32.xlu0 %v200, 88
      %v480 = vpop.permute.xlu0 %479
      %481 = vrot.lane.b32.xlu0 %v201, 88
      %v482 = vpop.permute.xlu0 %481
      %v485 = vsel %vm293, %v475, 0
      %v487 = vsel %vm311, %v482, 0
      %489 = vmatprep.subr.mxu0 0.0
      %490 = vmatpush1.msra.mxu0 %v480
      %491 = vmatprep.subr.mxu0 0.0
      %492 = vmatpush1.msra.mxu0 %v487
      %493 = vmatprep.subr.mxu0 0.0
      %494 = vmatpush1.msra.mxu0 0.0
      %495 = vmatprep.subr.mxu0 0.0
      %496 = vmatpush1.msra.mxu0 0.0
      %497 = vmatprep.subr.mxu0 0.0
      %498 = vmatpush1.msra.mxu0 0.0
      %499 = vmatprep.subr.mxu0 0.0
      %500 = vmatpush1.msra.mxu0 0.0
      %501 = vmatprep.subr.mxu0 0.0
      %502 = vmatpush1.msra.mxu0 0.0
      %503 = vmatprep.subr.mxu0 0.0
      %504 = vmatpush1.msra.mxu0 0.0
      %505 = vmatprep.subr.mxu0 0.0
      %506 = vmatpush1.msra.mxu0 0.0
      %507 = vmatprep.subr.mxu0 0.0
      %508 = vmatpush1.msra.mxu0 0.0
      %509 = vmatprep.subr.mxu0 0.0
      %510 = vmatpush1.msra.mxu0 0.0
      %511 = vmatprep.subr.mxu0 0.0
      %512 = vmatpush1.msra.mxu0 0.0
      %513 = vmatprep.subr.mxu0 0.0
      %514 = vmatpush1.msra.mxu0 0.0
      %515 = vmatprep.subr.mxu0 0.0
      %516 = vmatpush1.msra.mxu0 0.0
      %517 = vmatprep.subr.mxu0 0.0
      %518 = vmatpush1.msra.mxu0 0.0
      %519 = vmatprep.subr.mxu0 0.0
      %520 = vmatpush1.msra.mxu0 0.0
      %521 = vmatprep.subr.mxu0 0.0
      %522 = vmatpush1.msra.mxu0 0.0
      %523 = vmatprep.subr.mxu0 0.0
      %524 = vmatpush1.msra.mxu0 0.0
      %525 = vmatprep.subr.mxu0 0.0
      %526 = vmatpush1.msra.mxu0 0.0
      %527 = vmatprep.subr.mxu0 0.0
      %528 = vmatpush1.msra.mxu0 0.0
      %529 = vmatprep.subr.mxu0 0.0
      %530 = vmatpush1.msra.mxu0 0.0
      %531 = vmatprep.subr.mxu0 0.0
      %532 = vmatpush1.msra.mxu0 0.0
      %533 = vmatprep.subr.mxu0 0.0
      %534 = vmatpush1.msra.mxu0 0.0
      %535 = vmatprep.subr.mxu0 0.0
      %536 = vmatpush1.msra.mxu0 0.0
      %537 = vmatprep.subr.mxu0 0.0
      %538 = vmatpush1.msra.mxu0 0.0
      %539 = vmatprep.subr.mxu0 0.0
      %540 = vmatpush1.msra.mxu0 0.0
      %541 = vmatprep.subr.mxu0 0.0
      %542 = vmatpush1.msra.mxu0 0.0
      %543 = vmatprep.subr.mxu0 0.0
      %544 = vmatpush1.msra.mxu0 0.0
      %545 = vmatprep.subr.mxu0 0.0
      %546 = vmatpush1.msra.mxu0 0.0
      %547 = vmatprep.subr.mxu0 0.0
      %548 = vmatpush1.msra.mxu0 0.0
      %549 = vmatprep.subr.mxu0 0.0
      %550 = vmatpush1.msra.mxu0 0.0
      %551 = vmatprep.subr.mxu0 0.0
      %552 = vmatpush1.msra.mxu0 0.0
      %553 = vmatprep.mubr.f32.mxu0 0.0
      %554 = vmatmul.mubr.f32.gmra.mrb[0].mxu0 %v485
      %v555 = vpop.f32.mrb[0].mxu0
      %v556 = vadd.f32 0.0, %v555
      %v557 = vpop.f32.mrb[0].mxu0
      %558 = vdwg.mxu0
      %v559 = vrcp.pop %v478
      %v560 = vmul.f32 %v556, %v559
      %561 = vrot.lane.b32.xlu0 %v202, 112
      %v562 = vpop.permute.xlu0 %561
      %563 = vrot.lane.b32.xlu0 %v200, 112
      %v564 = vpop.permute.xlu0 %563
      %565 = vrot.lane.b32.xlu0 %v201, 112
      %v566 = vpop.permute.xlu0 %565
      %v567 = vsel %vm205, %v562, 0
      %v569 = vsel %vm205, %v564, 0
      %v571 = vsel %vm205, %v566, 0
      %573 = vmatprep.subr.mxu0 0.0
      %574 = vmatpush1.xpose.msra.mxu0 %v569
      %575 = vmatprep.subr.mxu0 0.0
      %576 = vmatpush1.xpose.msra.mxu0 %v571
      %577 = vmatprep.subr.mxu0 0.0
      %578 = vmatpush1.xpose.msra.mxu0 0.0
      %579 = vmatprep.subr.mxu0 0.0
      %580 = vmatpush1.xpose.msra.mxu0 0.0
      %581 = vmatprep.subr.mxu0 0.0
      %582 = vmatpush1.xpose.msra.mxu0 0.0
      %583 = vmatprep.subr.mxu0 0.0
      %584 = vmatpush1.xpose.msra.mxu0 0.0
      %585 = vmatprep.subr.mxu0 0.0
      %586 = vmatpush1.xpose.msra.mxu0 0.0
      %587 = vmatprep.subr.mxu0 0.0
      %588 = vmatpush1.xpose.msra.mxu0 0.0
      %589 = vmatprep.subr.mxu0 0.0
      %590 = vmatpush1.xpose.msra.mxu0 0.0
      %591 = vmatprep.subr.mxu0 0.0
      %592 = vmatpush1.xpose.msra.mxu0 0.0
      %593 = vmatprep.subr.mxu0 0.0
      %594 = vmatpush1.xpose.msra.mxu0 0.0
      %595 = vmatprep.subr.mxu0 0.0
      %596 = vmatpush1.xpose.msra.mxu0 0.0
      %597 = vmatprep.subr.mxu0 0.0
      %598 = vmatpush1.xpose.msra.mxu0 0.0
      %599 = vmatprep.subr.mxu0 0.0
      %600 = vmatpush1.xpose.msra.mxu0 0.0
      %601 = vmatprep.subr.mxu0 0.0
      %602 = vmatpush1.xpose.msra.mxu0 0.0
      %603 = vmatprep.subr.mxu0 0.0
      %604 = vmatpush1.xpose.msra.mxu0 0.0
      %605 = vmatprep.subr.mxu0 0.0
      %606 = vmatpush1.xpose.msra.mxu0 0.0
      %607 = vmatprep.subr.mxu0 0.0
      %608 = vmatpush1.xpose.msra.mxu0 0.0
      %609 = vmatprep.subr.mxu0 0.0
      %610 = vmatpush1.xpose.msra.mxu0 0.0
      %611 = vmatprep.subr.mxu0 0.0
      %612 = vmatpush1.xpose.msra.mxu0 0.0
      %613 = vmatprep.subr.mxu0 0.0
      %614 = vmatpush1.xpose.msra.mxu0 0.0
      %615 = vmatprep.subr.mxu0 0.0
      %616 = vmatpush1.xpose.msra.mxu0 0.0
      %617 = vmatprep.subr.mxu0 0.0
      %618 = vmatpush1.xpose.msra.mxu0 0.0
      %619 = vmatprep.subr.mxu0 0.0
      %620 = vmatpush1.xpose.msra.mxu0 0.0
      %621 = vmatprep.subr.mxu0 0.0
      %622 = vmatpush1.xpose.msra.mxu0 0.0
      %623 = vmatprep.subr.mxu0 0.0
      %624 = vmatpush1.xpose.msra.mxu0 0.0
      %625 = vmatprep.subr.mxu0 0.0
      %626 = vmatpush1.xpose.msra.mxu0 0.0
      %627 = vmatprep.subr.mxu0 0.0
      %628 = vmatpush1.xpose.msra.mxu0 0.0
      %629 = vmatprep.subr.mxu0 0.0
      %630 = vmatpush1.xpose.msra.mxu0 0.0
      %631 = vmatprep.subr.mxu0 0.0
      %632 = vmatpush1.xpose.msra.mxu0 0.0
      %633 = vmatprep.subr.mxu0 0.0
      %634 = vmatpush1.xpose.msra.mxu0 0.0
      %635 = vmatprep.subr.mxu0 0.0
      %636 = vmatpush1.xpose.msra.mxu0 0.0
      %637 = vmatprep.mubr.f32.mxu0 0.0
      %638 = vmatmul.mubr.f32.gmra.mrb[0].mxu0 %v567
      %v639 = vpop.f32.mrb[0].mxu0
      %v640 = vadd.f32 0.0, %v639
      %v641 = vpop.f32.mrb[0].mxu0
      %642 = vdwg.mxu0
      %v643 = vmul.f32 %v640, 0.35355338
      %v644 = vsel %vm291, %v643, -1e+30
      %v645 = vsel %vm293, %v644, -inf
      %646 = vmax.xlane.f32.xlu0 %v645
      %v647 = vpop.xlane.xlu0 %646
      %v648 = vsub.f32 %v644, %v647
      %v649 = vmul.f32 %v648, 1.442695
      %v650 = vpow.pop %v649
      %v651 = vsel %vm293, %v650, 0.0
      %652 = vadd.xlane.f32.xlu0 %v651
      %v653 = vpop.xlane.xlu0 %652
      %654 = vrot.lane.b32.xlu0 %v200, 80
      %v655 = vpop.permute.xlu0 %654
      %656 = vrot.lane.b32.xlu0 %v201, 80
      %v657 = vpop.permute.xlu0 %656
      %v660 = vsel %vm293, %v650, 0
      %v662 = vsel %vm311, %v657, 0
      %664 = vmatprep.subr.mxu0 0.0
      %665 = vmatpush1.msra.mxu0 %v655
      %666 = vmatprep.subr.mxu0 0.0
      %667 = vmatpush1.msra.mxu0 %v662
      %668 = vmatprep.subr.mxu0 0.0
      %669 = vmatpush1.msra.mxu0 0.0
      %670 = vmatprep.subr.mxu0 0.0
      %671 = vmatpush1.msra.mxu0 0.0
      %672 = vmatprep.subr.mxu0 0.0
      %673 = vmatpush1.msra.mxu0 0.0
      %674 = vmatprep.subr.mxu0 0.0
      %675 = vmatpush1.msra.mxu0 0.0
      %676 = vmatprep.subr.mxu0 0.0
      %677 = vmatpush1.msra.mxu0 0.0
      %678 = vmatprep.subr.mxu0 0.0
      %679 = vmatpush1.msra.mxu0 0.0
      %680 = vmatprep.subr.mxu0 0.0
      %681 = vmatpush1.msra.mxu0 0.0
      %682 = vmatprep.subr.mxu0 0.0
      %683 = vmatpush1.msra.mxu0 0.0
      %684 = vmatprep.subr.mxu0 0.0
      %685 = vmatpush1.msra.mxu0 0.0
      %686 = vmatprep.subr.mxu0 0.0
      %687 = vmatpush1.msra.mxu0 0.0
      %688 = vmatprep.subr.mxu0 0.0
      %689 = vmatpush1.msra.mxu0 0.0
      %690 = vmatprep.subr.mxu0 0.0
      %691 = vmatpush1.msra.mxu0 0.0
      %692 = vmatprep.subr.mxu0 0.0
      %693 = vmatpush1.msra.mxu0 0.0
      %694 = vmatprep.subr.mxu0 0.0
      %695 = vmatpush1.msra.mxu0 0.0
      %696 = vmatprep.subr.mxu0 0.0
      %697 = vmatpush1.msra.mxu0 0.0
      %698 = vmatprep.subr.mxu0 0.0
      %699 = vmatpush1.msra.mxu0 0.0
      %700 = vmatprep.subr.mxu0 0.0
      %701 = vmatpush1.msra.mxu0 0.0
      %702 = vmatprep.subr.mxu0 0.0
      %703 = vmatpush1.msra.mxu0 0.0
      %704 = vmatprep.subr.mxu0 0.0
      %705 = vmatpush1.msra.mxu0 0.0
      %706 = vmatprep.subr.mxu0 0.0
      %707 = vmatpush1.msra.mxu0 0.0
      %708 = vmatprep.subr.mxu0 0.0
      %709 = vmatpush1.msra.mxu0 0.0
      %710 = vmatprep.subr.mxu0 0.0
      %711 = vmatpush1.msra.mxu0 0.0
      %712 = vmatprep.subr.mxu0 0.0
      %713 = vmatpush1.msra.mxu0 0.0
      %714 = vmatprep.subr.mxu0 0.0
      %715 = vmatpush1.msra.mxu0 0.0
      %716 = vmatprep.subr.mxu0 0.0
      %717 = vmatpush1.msra.mxu0 0.0
      %718 = vmatprep.subr.mxu0 0.0
      %719 = vmatpush1.msra.mxu0 0.0
      %720 = vmatprep.subr.mxu0 0.0
      %721 = vmatpush1.msra.mxu0 0.0
      %722 = vmatprep.subr.mxu0 0.0
      %723 = vmatpush1.msra.mxu0 0.0
      %724 = vmatprep.subr.mxu0 0.0
      %725 = vmatpush1.msra.mxu0 0.0
      %726 = vmatprep.subr.mxu0 0.0
      %727 = vmatpush1.msra.mxu0 0.0
      %728 = vmatprep.mubr.f32.mxu0 0.0
      %729 = vmatmul.mubr.f32.gmra.mrb[0].mxu0 %v660
      %v730 = vpop.f32.mrb[0].mxu0
      %v731 = vadd.f32 0.0, %v730
      %v732 = vpop.f32.mrb[0].mxu0
      %733 = vdwg.mxu0
      %v734 = vrcp.pop %v653
      %v735 = vmul.f32 %v731, %v734
      %736 = vrot.lane.b32.xlu0 %v202, 104
      %v737 = vpop.permute.xlu0 %736
      %738 = vrot.lane.b32.xlu0 %v200, 104
      %v739 = vpop.permute.xlu0 %738
      %740 = vrot.lane.b32.xlu0 %v201, 104
      %v741 = vpop.permute.xlu0 %740
      %v742 = vsel %vm205, %v737, 0
      %v744 = vsel %vm205, %v739, 0
      %v746 = vsel %vm205, %v741, 0
      %748 = vmatprep.subr.mxu0 0.0
      %749 = vmatpush1.xpose.msra.mxu0 %v744
      %750 = vmatprep.subr.mxu0 0.0
      %751 = vmatpush1.xpose.msra.mxu0 %v746
      %752 = vmatprep.subr.mxu0 0.0
      %753 = vmatpush1.xpose.msra.mxu0 0.0
      %754 = vmatprep.subr.mxu0 0.0
      %755 = vmatpush1.xpose.msra.mxu0 0.0
      %756 = vmatprep.subr.mxu0 0.0
      %757 = vmatpush1.xpose.msra.mxu0 0.0
      %758 = vmatprep.subr.mxu0 0.0
      %759 = vmatpush1.xpose.msra.mxu0 0.0
      %760 = vmatprep.subr.mxu0 0.0
      %761 = vmatpush1.xpose.msra.mxu0 0.0
      %762 = vmatprep.subr.mxu0 0.0
      %763 = vmatpush1.xpose.msra.mxu0 0.0
      %764 = vmatprep.subr.mxu0 0.0
      %765 = vmatpush1.xpose.msra.mxu0 0.0
      %766 = vmatprep.subr.mxu0 0.0
      %767 = vmatpush1.xpose.msra.mxu0 0.0
      %768 = vmatprep.subr.mxu0 0.0
      %769 = vmatpush1.xpose.msra.mxu0 0.0
      %770 = vmatprep.subr.mxu0 0.0
      %771 = vmatpush1.xpose.msra.mxu0 0.0
      %772 = vmatprep.subr.mxu0 0.0
      %773 = vmatpush1.xpose.msra.mxu0 0.0
      %774 = vmatprep.subr.mxu0 0.0
      %775 = vmatpush1.xpose.msra.mxu0 0.0
      %776 = vmatprep.subr.mxu0 0.0
      %777 = vmatpush1.xpose.msra.mxu0 0.0
      %778 = vmatprep.subr.mxu0 0.0
      %779 = vmatpush1.xpose.msra.mxu0 0.0
      %780 = vmatprep.subr.mxu0 0.0
      %781 = vmatpush1.xpose.msra.mxu0 0.0
      %782 = vmatprep.subr.mxu0 0.0
      %783 = vmatpush1.xpose.msra.mxu0 0.0
      %784 = vmatprep.subr.mxu0 0.0
      %785 = vmatpush1.xpose.msra.mxu0 0.0
      %786 = vmatprep.subr.mxu0 0.0
      %787 = vmatpush1.xpose.msra.mxu0 0.0
      %788 = vmatprep.subr.mxu0 0.0
      %789 = vmatpush1.xpose.msra.mxu0 0.0
      %790 = vmatprep.subr.mxu0 0.0
      %791 = vmatpush1.xpose.msra.mxu0 0.0
      %792 = vmatprep.subr.mxu0 0.0
      %793 = vmatpush1.xpose.msra.mxu0 0.0
      %794 = vmatprep.subr.mxu0 0.0
      %795 = vmatpush1.xpose.msra.mxu0 0.0
      %796 = vmatprep.subr.mxu0 0.0
      %797 = vmatpush1.xpose.msra.mxu0 0.0
      %798 = vmatprep.subr.mxu0 0.0
      %799 = vmatpush1.xpose.msra.mxu0 0.0
      %800 = vmatprep.subr.mxu0 0.0
      %801 = vmatpush1.xpose.msra.mxu0 0.0
      %802 = vmatprep.subr.mxu0 0.0
      %803 = vmatpush1.xpose.msra.mxu0 0.0
      %804 = vmatprep.subr.mxu0 0.0
      %805 = vmatpush1.xpose.msra.mxu0 0.0
      %806 = vmatprep.subr.mxu0 0.0
      %807 = vmatpush1.xpose.msra.mxu0 0.0
      %808 = vmatprep.subr.mxu0 0.0
      %809 = vmatpush1.xpose.msra.mxu0 0.0
      %810 = vmatprep.subr.mxu0 0.0
      %811 = vmatpush1.xpose.msra.mxu0 0.0
      %812 = vmatprep.mubr.f32.mxu0 0.0
      %813 = vmatmul.mubr.f32.gmra.mrb[0].mxu0 %v742
      %v814 = vpop.f32.mrb[0].mxu0
      %v815 = vadd.f32 0.0, %v814
      %v816 = vpop.f32.mrb[0].mxu0
      %817 = vdwg.mxu0
      %v818 = vmul.f32 %v815, 0.35355338
      %v819 = vsel %vm291, %v818, -1e+30
      %v820 = vsel %vm293, %v819, -inf
      %821 = vmax.xlane.f32.xlu0 %v820
      %v822 = vpop.xlane.xlu0 %821
      %v823 = vsub.f32 %v819, %v822
      %v824 = vmul.f32 %v823, 1.442695
      %v825 = vpow.pop %v824
      %v826 = vsel %vm293, %v825, 0.0
      %827 = vadd.xlane.f32.xlu0 %v826
      %v828 = vpop.xlane.xlu0 %827
      %829 = vrot.lane.b32.xlu0 %v200, 72
      %v830 = vpop.permute.xlu0 %829
      %831 = vrot.lane.b32.xlu0 %v201, 72
      %v832 = vpop.permute.xlu0 %831
      %v835 = vsel %vm293, %v825, 0
      %v837 = vsel %vm311, %v832, 0
      %839 = vmatprep.subr.mxu0 0.0
      %840 = vmatpush1.msra.mxu0 %v830
      %841 = vmatprep.subr.mxu0 0.0
      %842 = vmatpush1.msra.mxu0 %v837
      %843 = vmatprep.subr.mxu0 0.0
      %844 = vmatpush1.msra.mxu0 0.0
      %845 = vmatprep.subr.mxu0 0.0
      %846 = vmatpush1.msra.mxu0 0.0
      %847 = vmatprep.subr.mxu0 0.0
      %848 = vmatpush1.msra.mxu0 0.0
      %849 = vmatprep.subr.mxu0 0.0
      %850 = vmatpush1.msra.mxu0 0.0
      %851 = vmatprep.subr.mxu0 0.0
      %852 = vmatpush1.msra.mxu0 0.0
      %853 = vmatprep.subr.mxu0 0.0
      %854 = vmatpush1.msra.mxu0 0.0
      %855 = vmatprep.subr.mxu0 0.0
      %856 = vmatpush1.msra.mxu0 0.0
      %857 = vmatprep.subr.mxu0 0.0
      %858 = vmatpush1.msra.mxu0 0.0
      %859 = vmatprep.subr.mxu0 0.0
      %860 = vmatpush1.msra.mxu0 0.0
      %861 = vmatprep.subr.mxu0 0.0
      %862 = vmatpush1.msra.mxu0 0.0
      %863 = vmatprep.subr.mxu0 0.0
      %864 = vmatpush1.msra.mxu0 0.0
      %865 = vmatprep.subr.mxu0 0.0
      %866 = vmatpush1.msra.mxu0 0.0
      %867 = vmatprep.subr.mxu0 0.0
      %868 = vmatpush1.msra.mxu0 0.0
      %869 = vmatprep.subr.mxu0 0.0
      %870 = vmatpush1.msra.mxu0 0.0
      %871 = vmatprep.subr.mxu0 0.0
      %872 = vmatpush1.msra.mxu0 0.0
      %873 = vmatprep.subr.mxu0 0.0
      %874 = vmatpush1.msra.mxu0 0.0
      %875 = vmatprep.subr.mxu0 0.0
      %876 = vmatpush1.msra.mxu0 0.0
      %877 = vmatprep.subr.mxu0 0.0
      %878 = vmatpush1.msra.mxu0 0.0
      %879 = vmatprep.subr.mxu0 0.0
      %880 = vmatpush1.msra.mxu0 0.0
      %881 = vmatprep.subr.mxu0 0.0
      %882 = vmatpush1.msra.mxu0 0.0
      %883 = vmatprep.subr.mxu0 0.0
      %884 = vmatpush1.msra.mxu0 0.0
      %885 = vmatprep.subr.mxu0 0.0
      %886 = vmatpush1.msra.mxu0 0.0
      %887 = vmatprep.subr.mxu0 0.0
      %888 = vmatpush1.msra.mxu0 0.0
      %889 = vmatprep.subr.mxu0 0.0
      %890 = vmatpush1.msra.mxu0 0.0
      %891 = vmatprep.subr.mxu0 0.0
      %892 = vmatpush1.msra.mxu0 0.0
      %893 = vmatprep.subr.mxu0 0.0
      %894 = vmatpush1.msra.mxu0 0.0
      %895 = vmatprep.subr.mxu0 0.0
      %896 = vmatpush1.msra.mxu0 0.0
      %897 = vmatprep.subr.mxu0 0.0
      %898 = vmatpush1.msra.mxu0 0.0
      %899 = vmatprep.subr.mxu0 0.0
      %900 = vmatpush1.msra.mxu0 0.0
      %901 = vmatprep.subr.mxu0 0.0
      %902 = vmatpush1.msra.mxu0 0.0
      %903 = vmatprep.mubr.f32.mxu0 0.0
      %904 = vmatmul.mubr.f32.gmra.mrb[0].mxu0 %v835
      %v905 = vpop.f32.mrb[0].mxu0
      %v906 = vadd.f32 0.0, %v905
      %v907 = vpop.f32.mrb[0].mxu0
      %908 = vdwg.mxu0
      %v909 = vrcp.pop %v828
      %v910 = vmul.f32 %v906, %v909
      %912 = vrot.lane.b32.xlu0 %v560, 8
      %v913 = vpop.permute.xlu0 %912
      %916 = vrot.lane.b32.xlu0 %v735, 16
      %v917 = vpop.permute.xlu0 %916
      %920 = vrot.lane.b32.xlu0 %v910, 24
      %v921 = vpop.permute.xlu0 %920
      %v923 = vsel %vm205, %v385, %v913
      %vm924 = vcmask 130048
      %v925 = vsel %vm924, %v923, %v917
      %vm926 = vcmask 195584
      %v927 = vsel %vm926, %v925, %v921
      %vm928 = vcmask 261120
      %929 = vst.msk [vmem:[%s199] sm:$0xff] %vm928, %v927
      %p930 = scmp.lt.s32.totalorder %s14, 1
      %s931 = scalar_select %p930, %s14, 1
      %s932 = smul.addr %s931, 8
      %s933 = scalar_lea.vmem %s3, %s932
      // Predicated region
      $region33: #{decoder_forward.24} parent=31 // pred_check
        %p934 = pneg %p110
      $region34: #{decoder_forward.24} parent=31 // pred_check_branch
        %936 = sbr.rel (%p934) target = $region36
      $region35: #{decoder_forward.24} parent=31 // pred_region
        _
      $region36: #{decoder_forward.24} parent=31 // pred_fallthru
        _
    $region32: #{decoder_forward.24} parent=5 // pred_fallthru
      _
    %p937 = scmp.le.s32.totalorder 2, %s9
    // Predicated region
    $region37: #{decoder_forward.24} parent=5 // pred_check
      %p938 = pneg %p937
    $region38: #{decoder_forward.24} parent=5 // pred_check_branch
      %940 = sbr.rel (%p938) target = $region40
    $region39: #{decoder_forward.24} parent=5 // pred_region
      %s941 = ssub.s32 %s9, 2
      // Predicated region
      $region41: #{decoder_forward.24} parent=39 // pred_check
        %p942 = pneg %p116
      $region42: #{decoder_forward.24} parent=39 // pred_check_branch
        %944 = sbr.rel (%p942) target = $region44
      $region43: #{decoder_forward.24} parent=39 // pred_region
        %p945 = scmp.lt.s32.totalorder %s15, 1
        %s946 = scalar_select %p945, %s15, 1
        %s947 = smul.addr %s946, 8
        %s948 = scalar_lea.vmem %s3, %s947
      $region44: #{decoder_forward.24} parent=39 // pred_fallthru
        _
    $region40: #{decoder_forward.24} parent=5 // pred_fallthru
      _
  $region6: #{decoder_forward.24} parent=0 // loop_footer
    %s13 = sadd.s32 1, %s9
  $region7: #{decoder_forward.24} parent=0 // loop_footer_branch
    %8 = sbr.rel target = $region3
  $region8: #{decoder_forward.24} parent=0 // loop_exit
    _

// kernel: decoder_forward.37
$region0: #{decoder_forward.37}
  #allocation0 [shape = 'u32[]', space=smem, size = 0x4, offset = 0x4, fixed_abs, tag = 'smem constant byte address 0x4 - core index']
  #allocation1 [shape = 'u32[144,128]{1,0:T(1,128)}', space=vmem, size = 0x12000, scoped, tag = 'internal scratch']
  #allocation2 [shape = 'f32[16,50]{1,0:T(8,128)}', space=vmem, size = 0x2000, scoped, tag = 'scratch operand']
  %s0 = inlined_call_operand.vmem [shape: f32[16,32], index: 0, kind: input, shape index: {}]
  %s1 = inlined_call_operand.vmem [shape: f32[32,50], index: 1, kind: input, shape index: {}]
  %s2 = inlined_call_operand.vmem [shape: f32[1,50], index: 2, kind: input, shape index: {}]
  %s3 = inlined_call_operand.vmem [shape: f32[16,32], index: 3, kind: input, shape index: {}]
  %s4 = inlined_call_operand.hbm [shape: f32[16,50], index: 4, kind: output, shape index: {}]
  %s5 = sld [smem:[#allocation0]]
  $region34: #{decoder_forward.37} parent=0
    _
  %s7 = ssub.s32 1, %s5
  %s8 = scalar_select 0, %s7, %s5
  $region1: #{decoder_forward.37} parent=0
    #allocation3 [shape = 'u8[8192]{0}', space=vmem, size = 0x2000, scoped, tag = 'output window, operand 0, single buffered']
    #allocation4 [shape = 's32[1]{0}', space=sflag, size = 0x4, scoped, tag = 'scoped memory for decoder_forward.37']
    %9 = vsyncpa [#allocation4], 0
    // Predicated region
    $region2: #{decoder_forward.37} parent=1 // pred_check
      _
    $region3: #{decoder_forward.37} parent=1 // pred_check_branch
      %11 = sbr.rel (0) target = $region5
    $region4: #{decoder_forward.37} parent=1 // pred_region
      _
    $region5: #{decoder_forward.37} parent=1 // pred_fallthru
      _
    // Predicated region
    $region6: #{decoder_forward.37} parent=1 // pred_check
      _
    $region7: #{decoder_forward.37} parent=1 // pred_check_branch
      %13 = sbr.rel (0) target = $region9
    $region8: #{decoder_forward.37} parent=1 // pred_region
      _
    $region9: #{decoder_forward.37} parent=1 // pred_fallthru
      _
    // Predicated region
    $region10: #{decoder_forward.37} parent=1 // pred_check
      _
    $region11: #{decoder_forward.37} parent=1 // pred_check_branch
      %15 = sbr.rel (0) target = $region13
    $region12: #{decoder_forward.37} parent=1 // pred_region
      _
    $region13: #{decoder_forward.37} parent=1 // pred_fallthru
      _
    // Predicated region
    $region14: #{decoder_forward.37} parent=1 // pred_check
      _
    $region15: #{decoder_forward.37} parent=1 // pred_check_branch
      %17 = sbr.rel (0) target = $region17
    $region16: #{decoder_forward.37} parent=1 // pred_region
      _
    $region17: #{decoder_forward.37} parent=1 // pred_fallthru
      _
    %p18 = scmp.eq.s32.totalorder 0, 0
    // Predicated region
    $region18: #{decoder_forward.37} parent=1 // pred_check
      %p19 = pneg %p18
    $region19: #{decoder_forward.37} parent=1 // pred_check_branch
      %21 = sbr.rel (%p19) target = $region21
    $region20: #{decoder_forward.37} parent=1 // pred_region
      %vm22 = vcmask 408576
      %23 = vst.msk [vmem:[#allocation2] sm:$0xff] %vm22, 0.0
      %24 = vst.msk [vmem:[#allocation2 + $0x8] sm:$0xff] %vm22, 0.0
    $region21: #{decoder_forward.37} parent=1 // pred_fallthru
      _
    %v25 = vld [vmem:[%s0] sm:$0xff]
    %v26 = vld [vmem:[%s0 + $0x8] sm:$0xff]
    %v27 = vld [vmem:[%s3] sm:$0xff]
    %v28 = vld [vmem:[%s3 + $0x8] sm:$0xff]
    %v29 = vmul.f32 %v27, 0.001
    %v30 = vmul.f32 %v28, 0.001
    %v31 = vadd.f32 %v25, %v29
    %v32 = vadd.f32 %v26, %v30
    %v33 = vld [vmem:[#allocation2] sm:$0xff]
    %v34 = vld [vmem:[#allocation2 + $0x8] sm:$0xff]
    %v35 = vld [vmem:[%s1] sm:$0xff]
    %v36 = vld [vmem:[%s1 + $0x8] sm:$0xff]
    %v37 = vld [vmem:[%s1 + $0x10] sm:$0xff]
    %v38 = vld [vmem:[%s1 + $0x18] sm:$0xff]
    %vm39 = vcmask 261120
    %v41 = vsel %vm39, %v31, 0
    %v44 = vsel %vm39, %v32, 0
    %46 = vmatprep.subr.mxu0 0.0
    %47 = vmatpush1.msra.mxu0 %v35
    %48 = vmatprep.subr.mxu0 0.0
    %49 = vmatpush1.msra.mxu0 %v36
    %50 = vmatprep.subr.mxu0 0.0
    %51 = vmatpush1.msra.mxu0 %v37
    %52 = vmatprep.subr.mxu0 0.0
    %53 = vmatpush1.msra.mxu0 %v38
    %54 = vmatprep.subr.mxu0 0.0
    %55 = vmatpush1.msra.mxu0 0.0
    %56 = vmatprep.subr.mxu0 0.0
    %57 = vmatpush1.msra.mxu0 0.0
    %58 = vmatprep.subr.mxu0 0.0
    %59 = vmatpush1.msra.mxu0 0.0
    %60 = vmatprep.subr.mxu0 0.0
    %61 = vmatpush1.msra.mxu0 0.0
    %62 = vmatprep.subr.mxu0 0.0
    %63 = vmatpush1.msra.mxu0 0.0
    %64 = vmatprep.subr.mxu0 0.0
    %65 = vmatpush1.msra.mxu0 0.0
    %66 = vmatprep.subr.mxu0 0.0
    %67 = vmatpush1.msra.mxu0 0.0
    %68 = vmatprep.subr.mxu0 0.0
    %69 = vmatpush1.msra.mxu0 0.0
    %70 = vmatprep.subr.mxu0 0.0
    %71 = vmatpush1.msra.mxu0 0.0
    %72 = vmatprep.subr.mxu0 0.0
    %73 = vmatpush1.msra.mxu0 0.0
    %74 = vmatprep.subr.mxu0 0.0
    %75 = vmatpush1.msra.mxu0 0.0
    %76 = vmatprep.subr.mxu0 0.0
    %77 = vmatpush1.msra.mxu0 0.0
    %78 = vmatprep.subr.mxu0 0.0
    %79 = vmatpush1.msra.mxu0 0.0
    %80 = vmatprep.subr.mxu0 0.0
    %81 = vmatpush1.msra.mxu0 0.0
    %82 = vmatprep.subr.mxu0 0.0
    %83 = vmatpush1.msra.mxu0 0.0
    %84 = vmatprep.subr.mxu0 0.0
    %85 = vmatpush1.msra.mxu0 0.0
    %86 = vmatprep.subr.mxu0 0.0
    %87 = vmatpush1.msra.mxu0 0.0
    %88 = vmatprep.subr.mxu0 0.0
    %89 = vmatpush1.msra.mxu0 0.0
    %90 = vmatprep.subr.mxu0 0.0
    %91 = vmatpush1.msra.mxu0 0.0
    %92 = vmatprep.subr.mxu0 0.0
    %93 = vmatpush1.msra.mxu0 0.0
    %94 = vmatprep.subr.mxu0 0.0
    %95 = vmatpush1.msra.mxu0 0.0
    %96 = vmatprep.subr.mxu0 0.0
    %97 = vmatpush1.msra.mxu0 0.0
    %98 = vmatprep.subr.mxu0 0.0
    %99 = vmatpush1.msra.mxu0 0.0
    %100 = vmatprep.subr.mxu0 0.0
    %101 = vmatpush1.msra.mxu0 0.0
    %102 = vmatprep.subr.mxu0 0.0
    %103 = vmatpush1.msra.mxu0 0.0
    %104 = vmatprep.subr.mxu0 0.0
    %105 = vmatpush1.msra.mxu0 0.0
    %106 = vmatprep.subr.mxu0 0.0
    %107 = vmatpush1.msra.mxu0 0.0
    %108 = vmatprep.subr.mxu0 0.0
    %109 = vmatpush1.msra.mxu0 0.0
    %110 = vmatprep.mubr.f32.mxu0 0.0
    %111 = vmatmul.mubr.f32.gmra.mrb[0].mxu0 %v41
    %v112 = vpop.f32.mrb[0].mxu0
    %v113 = vadd.f32 0.0, %v112
    %v114 = vpop.f32.mrb[0].mxu0
    %115 = vmatprep.mubr.f32.mxu0 0.0
    %116 = vmatmul.mubr.f32.gmra.mrb[0].mxu0 %v44
    %v117 = vpop.f32.mrb[0].mxu0
    %v118 = vadd.f32 0.0, %v117
    %v119 = vpop.f32.mrb[0].mxu0
    %120 = vdwg.mxu0
    %v121 = vadd.f32 %v33, %v113
    %v122 = vadd.f32 %v34, %v118
    %vm123 = vcmask 408576
    %124 = vst.msk [vmem:[#allocation2] sm:$0xff] %vm123, %v121
    %125 = vst.msk [vmem:[#allocation2 + $0x8] sm:$0xff] %vm123, %v122
    // Predicated region
    $region22: #{decoder_forward.37} parent=1 // pred_check
      %p126 = pneg %p18
    $region23: #{decoder_forward.37} parent=1 // pred_check_branch
      %128 = sbr.rel (%p126) target = $region25
    $region24: #{decoder_forward.37} parent=1 // pred_region
      %v129 = vld [vmem:[#allocation2] sm:$0xff]
      %v130 = vld [vmem:[#allocation2 + $0x8] sm:$0xff]
      %v131 = vld [vmem:[%s2] sm:$0x1]
      %v133 = vlaneseq
      %v134 = vshrl.u32 %v133, 7
      %v135 = vsub.s32 0, %v134
      %v136 = vrot.slane %v131, %v135
      %v138 = vadd.f32 %v129, %v136
      %v139 = vadd.f32 %v130, %v136
      %140 = vst.msk [vmem:[#allocation3] sm:$0xff] %vm123, %v138
      %141 = vst.msk [vmem:[#allocation3 + $0x8] sm:$0xff] %vm123, %v139
    $region25: #{decoder_forward.37} parent=1 // pred_fallthru
      _
    // Predicated region
    $region26: #{decoder_forward.37} parent=1 // pred_check
      _
    $region27: #{decoder_forward.37} parent=1 // pred_check_branch
      %143 = sbr.rel (0) target = $region29
    $region28: #{decoder_forward.37} parent=1 // pred_region
      %s145 = ssub.s32 256, 256
      %146 = vsyncadd [#allocation4], %s145
      %s147 = sshll.u32 [#allocation3], 4
      %s148 = int_to_ptr.vmem [resolvable:$true] %s147
      %153 = dma.vmem_to_hbm [thread:$0]  %s148, 256, %s4, [#allocation4], 128, 128, 8
    $region29: #{decoder_forward.37} parent=1 // pred_fallthru
      _
    // Predicated region
    $region30: #{decoder_forward.37} parent=1 // pred_check
      _
    $region31: #{decoder_forward.37} parent=1 // pred_check_branch
      %155 = sbr.rel (0) target = $region33
    $region32: #{decoder_forward.37} parent=1 // pred_region
      %156 = dma.done [#allocation4], 256
    $region33: #{decoder_forward.37} parent=1 // pred_fallthru
      _
    %157 = vsyncpa [#allocation4], 1

</llo_original>
